<compile_context>
chip_gen: v7x
topology: tpu7x:2x2x1
jax: 0.10.0
libtpu: 0.0.40
codegen_flags: <defaults>
</compile_context>

<pallas_src>
import jax
import jax.numpy as jnp
from jax.experimental import pallas as pl
from jax.experimental.pallas import tpu as pltpu


NEG_SLOPE = 0.01  # nn.LeakyReLU default
H1, H2 = 1200, 600


def _round_up(n, m):
    return (n + m - 1) // m * m


def _leaky_relu(x):
    return jnp.where(x > 0, x, NEG_SLOPE * x)


def critic_kernel(s_ref, a_ref, w1_ref, b1_ref, w2_ref, b2_ref, w3_ref, b3_ref,
                  o_ref):
    # Build the layer-1 LHS in-kernel (no HBM concat), activations in bf16
    # (MXU-native), accumulation in f32.
    x = jnp.concatenate([s_ref[...], a_ref[...]], axis=-1).astype(jnp.bfloat16)

    # Layer 1: single MXU sweep over the merged [S+A, h1p] weight.
    h1 = jnp.dot(x, w1_ref[...], preferred_element_type=jnp.float32) + b1_ref[...]
    h1 = _leaky_relu(h1).astype(jnp.bfloat16)

    # Layer 2.
    h2 = jnp.dot(h1, w2_ref[...], preferred_element_type=jnp.float32) + b2_ref[...]
    h2 = _leaky_relu(h2)

    # Layer 3: out_features == 1 -> VPU multiply + lane reduction (skip MXU).
    out = jnp.sum(h2 * w3_ref[...], axis=-1, keepdims=True) + b3_ref[...]
    o_ref[...] = out.astype(o_ref.dtype)


def init_params(key, state_dim, action_dim):
    """f32 params mimicking nn.Linear default init; weights stored as [in, out]."""
    dims = [(state_dim + action_dim, H1), (H1, H2), (H2, 1)]
    params = []
    for fan_in, fan_out in dims:
        key, kw, kb = jax.random.split(key, 3)
        bound = 1.0 / jnp.sqrt(fan_in)
        w = jax.random.uniform(kw, (fan_in, fan_out), jnp.float32, -bound, bound)
        b = jax.random.uniform(kb, (1, fan_out), jnp.float32, -bound, bound)
        params += [w, b]
    return tuple(params)


def pack_params(params):
    """Zero-pad hidden dims to multiples of 128, cast weights to bf16."""
    w1, b1, w2, b2, w3, b3 = params
    h1p, h2p = _round_up(H1, 128), _round_up(H2, 128)

    w1p = jnp.pad(w1, ((0, 0), (0, h1p - H1))).astype(jnp.bfloat16)        # [S+A, h1p]
    b1p = jnp.pad(b1, ((0, 0), (0, h1p - H1)))                             # [1, h1p] f32
    w2p = jnp.pad(w2, ((0, h1p - H1), (0, h2p - H2))).astype(jnp.bfloat16) # [h1p, h2p]
    b2p = jnp.pad(b2, ((0, 0), (0, h2p - H2)))                             # [1, h2p] f32
    w3p = jnp.pad(w3.reshape(1, H2), ((0, 0), (0, h2p - H2))).astype(jnp.bfloat16)  # [1, h2p]
    return (w1p, b1p, w2p, b2p, w3p, b3.reshape(1, 1))


def _choose_batch_tile(B, batch_tile=None):
    """Per-generation default tile; >=2 tiles on v7x so both TCs get work."""
    try:
        kind = jax.devices()[0].device_kind.lower()
    except Exception:
        kind = ""
    if batch_tile is None:
        # v5e: 16 MiB default scoped VMEM + 197 TF/s MXU -> 512 is plenty.
        # v6e/v7x: 1024 amortizes the ~0.35 us/step grid overhead.
        batch_tile = 512 if "v5" in kind else 1024
    # v7x megacore: cap the tile so the "parallel" batch axis has >= 2 tiles.
    if ("v7" in kind or "tpu7" in kind) and B >= 16:
        batch_tile = min(batch_tile, _round_up((B + 1) // 2, 8))
    if batch_tile >= B:
        return B                      # single full-extent block (always legal)
    return max(8, (batch_tile // 8) * 8)  # multiple of 8 for the f32 sublane


def critic_forward(state, action, packed, *, batch_tile=None):
    """Fused Critic forward. state: [B, S], action: [B, A] -> [B, 1] f32."""
    w1, b1, w2, b2, w3, b3 = packed
    B, S = state.shape
    A = action.shape[1]
    h1p, h2p = w2.shape

    tb = _choose_batch_tile(B, batch_tile)
    grid = (pl.cdiv(B, tb),)
    vmem = pltpu.MemorySpace.VMEM
    const = lambda i: (0, 0)  # weights/biases: same block every step -> VMEM-resident

    return pl.pallas_call(
        critic_kernel,
        out_shape=jax.ShapeDtypeStruct((B, 1), jnp.float32),
        grid=grid,
        in_specs=[
            pl.BlockSpec((tb, S), lambda i: (i, 0), memory_space=vmem),    # state tile
            pl.BlockSpec((tb, A), lambda i: (i, 0), memory_space=vmem),    # action tile
            pl.BlockSpec((S + A, h1p), const, memory_space=vmem),          # w1 (merged)
            pl.BlockSpec((1, h1p), const, memory_space=vmem),              # b1
            pl.BlockSpec((h1p, h2p), const, memory_space=vmem),            # w2
            pl.BlockSpec((1, h2p), const, memory_space=vmem),              # b2
            pl.BlockSpec((1, h2p), const, memory_space=vmem),              # w3 row
            pl.BlockSpec((1, 1), const, memory_space=vmem),                # b3
        ],
        out_specs=pl.BlockSpec((tb, 1), lambda i: (i, 0), memory_space=vmem),
        compiler_params=pltpu.CompilerParams(
            dimension_semantics=("parallel",),   # shard batch tiles across TCs (v7x)
        ),
    )(state, action, w1, b1, w2, b2, w3, b3)


def critic_reference_matched(state, action, packed):
    """Pure-JAX reference with identical bf16-weight/activation numerics."""
    w1, b1, w2, b2, w3, b3 = packed
    x = jnp.concatenate([state, action], axis=-1).astype(jnp.bfloat16)
    h1 = jnp.dot(x, w1, preferred_element_type=jnp.float32) + b1
    h1 = _leaky_relu(h1).astype(jnp.bfloat16)
    h2 = _leaky_relu(jnp.dot(h1, w2, preferred_element_type=jnp.float32) + b2)
    return jnp.sum(h2 * w3, axis=-1, keepdims=True) + b3


def critic_reference_f32(state, action, params):
    """Full-f32 reference matching the PyTorch module."""
    w1, b1, w2, b2, w3, b3 = params
    x = jnp.concatenate([state, action], axis=-1)
    h1 = _leaky_relu(jnp.dot(x, w1, precision="highest") + b1)
    h2 = _leaky_relu(jnp.dot(h1, w2, precision="highest") + b2)
    return jnp.dot(h2, w3, precision="highest") + b3


if __name__ == "__main__":
    key = jax.random.PRNGKey(0)
    B, STATE_DIM, ACTION_DIM = 8, 24, 8

    k_params, k_state, k_action = jax.random.split(key, 3)
    params = init_params(k_params, STATE_DIM, ACTION_DIM)
    packed = pack_params(params)
    state = jax.random.normal(k_state, (B, STATE_DIM), jnp.float32)
    action = jax.random.normal(k_action, (B, ACTION_DIM), jnp.float32)

    out = critic_forward(state, action, packed)
    out = jax.block_until_ready(out)
    assert out.shape == (B, 1)

    # Tight check against a reference with identical bf16 numerics.
    ref_m = critic_reference_matched(state, action, packed)
    assert jnp.allclose(out, ref_m, atol=1e-3, rtol=1e-3), (out, ref_m)

    # Sanity check against the full-f32 PyTorch-equivalent forward
    # (difference is only bf16 weight/activation quantization noise).
    ref_f = critic_reference_f32(state, action, params)
    assert jnp.allclose(out, ref_f, atol=3e-2, rtol=3e-2), (out, ref_f)

    print("KERNEL_OK")
</pallas_src>

<mosaic_0001>
module attributes {stable_mosaic.version = 11 : i64} {
  func.func @critic_kernel(%arg0: i32, %arg1: memref<8x24xf32, #tpu.memory_space<vmem>>, %arg2: memref<8x8xf32, #tpu.memory_space<vmem>>, %arg3: memref<32x1280xbf16, #tpu.memory_space<vmem>>, %arg4: memref<1x1280xf32, #tpu.memory_space<vmem>>, %arg5: memref<1280x640xbf16, #tpu.memory_space<vmem>>, %arg6: memref<1x640xf32, #tpu.memory_space<vmem>>, %arg7: memref<1x640xbf16, #tpu.memory_space<vmem>>, %arg8: memref<1x1xf32, #tpu.memory_space<vmem>>, %arg9: memref<8x1xf32, #tpu.memory_space<vmem>>) attributes {dimension_semantics = [#tpu.dimension_semantics<parallel>], iteration_bounds = array<i64: 1>, scalar_prefetch = 0 : i64, scratch_operands = 0 : i64, tpu.core_type = #tpu.core_type<tc>, window_params = [{transform_indices = @transform_0, window_bounds = array<i64: 8, 24>}, {transform_indices = @transform_1, window_bounds = array<i64: 8, 8>}, {pipeline_mode = #tpu.pipeline_mode<synchronous>, transform_indices = @transform_2, window_bounds = array<i64: 32, 1280>}, {pipeline_mode = #tpu.pipeline_mode<synchronous>, transform_indices = @transform_3, window_bounds = array<i64: 1, 1280>}, {pipeline_mode = #tpu.pipeline_mode<synchronous>, transform_indices = @transform_4, window_bounds = array<i64: 1280, 640>}, {pipeline_mode = #tpu.pipeline_mode<synchronous>, transform_indices = @transform_5, window_bounds = array<i64: 1, 640>}, {pipeline_mode = #tpu.pipeline_mode<synchronous>, transform_indices = @transform_6, window_bounds = array<i64: 1, 640>}, {pipeline_mode = #tpu.pipeline_mode<synchronous>, transform_indices = @transform_7, window_bounds = array<i64: 1, 1>}, {transform_indices = @transform_8, window_bounds = array<i64: 8, 1>}]} {
    %c0 = arith.constant 0 : index
    %c0_0 = arith.constant 0 : index
    %0 = vector.load %arg1[%c0, %c0_0] : memref<8x24xf32, #tpu.memory_space<vmem>>, vector<8x24xf32>
    %c0_1 = arith.constant 0 : index
    %c0_2 = arith.constant 0 : index
    %1 = vector.load %arg2[%c0_1, %c0_2] : memref<8x8xf32, #tpu.memory_space<vmem>>, vector<8x8xf32>
    %2 = tpu.concatenate %0, %1 in 1 : vector<8x24xf32>, vector<8x8xf32> -> vector<8x32xf32>
    %3 = arith.truncf %2 : vector<8x32xf32> to vector<8x32xbf16>
    %c0_3 = arith.constant 0 : index
    %c0_4 = arith.constant 0 : index
    %4 = vector.load %arg3[%c0_3, %c0_4] : memref<32x1280xbf16, #tpu.memory_space<vmem>>, vector<32x1280xbf16>
    %cst = arith.constant dense<0.000000e+00> : vector<8x1280xf32>
    %5 = tpu.matmul %3, %4, %cst {dimension_numbers = #tpu.dot_dimension_numbers<[1], [0], [0], [1], [0, 0, 1, 1], [], []>} : vector<8x32xbf16>, vector<32x1280xbf16>, vector<8x1280xf32> -> vector<8x1280xf32>
    %c0_5 = arith.constant 0 : index
    %c0_6 = arith.constant 0 : index
    %6 = vector.load %arg4[%c0_5, %c0_6] : memref<1x1280xf32, #tpu.memory_space<vmem>>, vector<1x1280xf32>
    %7 = vector.broadcast %6 : vector<1x1280xf32> to vector<8x1280xf32>
    %8 = arith.addf %5, %7 : vector<8x1280xf32>
    %cst_7 = arith.constant 0.000000e+00 : f32
    %9 = vector.broadcast %cst_7 : f32 to vector<8x1280xf32>
    %10 = arith.cmpf ogt, %8, %9 : vector<8x1280xf32>
    %cst_8 = arith.constant 0.00999999977 : f32
    %11 = vector.broadcast %cst_8 : f32 to vector<8x1280xf32>
    %12 = arith.mulf %11, %8 : vector<8x1280xf32>
    %13 = arith.select %10, %8, %12 : vector<8x1280xi1>, vector<8x1280xf32>
    %14 = arith.truncf %13 : vector<8x1280xf32> to vector<8x1280xbf16>
    %c0_9 = arith.constant 0 : index
    %c0_10 = arith.constant 0 : index
    %15 = vector.load %arg5[%c0_9, %c0_10] : memref<1280x640xbf16, #tpu.memory_space<vmem>>, vector<1280x640xbf16>
    %cst_11 = arith.constant dense<0.000000e+00> : vector<8x640xf32>
    %16 = tpu.matmul %14, %15, %cst_11 {dimension_numbers = #tpu.dot_dimension_numbers<[1], [0], [0], [1], [0, 0, 1, 1], [], []>} : vector<8x1280xbf16>, vector<1280x640xbf16>, vector<8x640xf32> -> vector<8x640xf32>
    %c0_12 = arith.constant 0 : index
    %c0_13 = arith.constant 0 : index
    %17 = vector.load %arg6[%c0_12, %c0_13] : memref<1x640xf32, #tpu.memory_space<vmem>>, vector<1x640xf32>
    %18 = vector.broadcast %17 : vector<1x640xf32> to vector<8x640xf32>
    %19 = arith.addf %16, %18 : vector<8x640xf32>
    %cst_14 = arith.constant 0.000000e+00 : f32
    %20 = vector.broadcast %cst_14 : f32 to vector<8x640xf32>
    %21 = arith.cmpf ogt, %19, %20 : vector<8x640xf32>
    %cst_15 = arith.constant 0.00999999977 : f32
    %22 = vector.broadcast %cst_15 : f32 to vector<8x640xf32>
    %23 = arith.mulf %22, %19 : vector<8x640xf32>
    %24 = arith.select %21, %19, %23 : vector<8x640xi1>, vector<8x640xf32>
    %c0_16 = arith.constant 0 : index
    %c0_17 = arith.constant 0 : index
    %25 = vector.load %arg7[%c0_16, %c0_17] : memref<1x640xbf16, #tpu.memory_space<vmem>>, vector<1x640xbf16>
    %26 = arith.extf %25 : vector<1x640xbf16> to vector<1x640xf32>
    %27 = vector.broadcast %26 : vector<1x640xf32> to vector<8x640xf32>
    %28 = arith.mulf %24, %27 : vector<8x640xf32>
    %cst_18 = arith.constant dense<0.000000e+00> : vector<8xf32>
    %29 = vector.multi_reduction <add>, %28, %cst_18 [1] : vector<8x640xf32> to vector<8xf32>
    %30 = vector.shape_cast %29 : vector<8xf32> to vector<8x1xf32>
    %c0_19 = arith.constant 0 : index
    %c0_20 = arith.constant 0 : index
    %31 = vector.load %arg8[%c0_19, %c0_20] : memref<1x1xf32, #tpu.memory_space<vmem>>, vector<1x1xf32>
    %32 = vector.broadcast %31 : vector<1x1xf32> to vector<8x1xf32>
    %33 = arith.addf %30, %32 : vector<8x1xf32>
    %c0_21 = arith.constant 0 : index
    %c0_22 = arith.constant 0 : index
    %34 = vector.load %arg9[%c0_21, %c0_22] : memref<8x1xf32, #tpu.memory_space<vmem>>, vector<8x1xf32>
    tpu.vector_store %arg9[%c0_21, %c0_22], %33 {strides = array<i32>} : memref<8x1xf32, #tpu.memory_space<vmem>>, vector<8x1xf32>,
    return
  }
  func.func @transform_0(%arg0: i32) -> (i32, i32) {
    %c0_i32 = arith.constant 0 : i32
    %c0_i32_0 = arith.constant 0 : i32
    return %arg0, %c0_i32 : i32, i32
  }
  func.func @transform_1(%arg0: i32) -> (i32, i32) {
    %c0_i32 = arith.constant 0 : i32
    %c0_i32_0 = arith.constant 0 : i32
    return %arg0, %c0_i32 : i32, i32
  }
  func.func @transform_2(%arg0: i32) -> (i32, i32) {
    %c0_i32 = arith.constant 0 : i32
    %c0_i32_0 = arith.constant 0 : i32
    %c0_i32_1 = arith.constant 0 : i32
    return %c0_i32, %c0_i32_0 : i32, i32
  }
  func.func @transform_3(%arg0: i32) -> (i32, i32) {
    %c0_i32 = arith.constant 0 : i32
    %c0_i32_0 = arith.constant 0 : i32
    %c0_i32_1 = arith.constant 0 : i32
    return %c0_i32, %c0_i32_0 : i32, i32
  }
  func.func @transform_4(%arg0: i32) -> (i32, i32) {
    %c0_i32 = arith.constant 0 : i32
    %c0_i32_0 = arith.constant 0 : i32
    %c0_i32_1 = arith.constant 0 : i32
    return %c0_i32, %c0_i32_0 : i32, i32
  }
  func.func @transform_5(%arg0: i32) -> (i32, i32) {
    %c0_i32 = arith.constant 0 : i32
    %c0_i32_0 = arith.constant 0 : i32
    %c0_i32_1 = arith.constant 0 : i32
    return %c0_i32, %c0_i32_0 : i32, i32
  }
  func.func @transform_6(%arg0: i32) -> (i32, i32) {
    %c0_i32 = arith.constant 0 : i32
    %c0_i32_0 = arith.constant 0 : i32
    %c0_i32_1 = arith.constant 0 : i32
    return %c0_i32, %c0_i32_0 : i32, i32
  }
  func.func @transform_7(%arg0: i32) -> (i32, i32) {
    %c0_i32 = arith.constant 0 : i32
    %c0_i32_0 = arith.constant 0 : i32
    %c0_i32_1 = arith.constant 0 : i32
    return %c0_i32, %c0_i32_0 : i32, i32
  }
  func.func @transform_8(%arg0: i32) -> (i32, i32) {
    %c0_i32 = arith.constant 0 : i32
    %c0_i32_0 = arith.constant 0 : i32
    return %arg0, %c0_i32 : i32, i32
  }
}

</mosaic_0001>

<llo_original>
// kernel: tpu_custom_call.1
$region0: #{tpu_custom_call.1}
  #allocation0 [shape = 'u32[]', space=smem, size = 0x4, offset = 0x4, fixed_abs, tag = 'smem constant byte address 0x4 - core index']
  #allocation1 [shape = 'u32[144,128]{1,0:T(1,128)}', space=vmem, size = 0x12000, scoped, tag = 'internal scratch']
  #allocation2 [shape = 'f32[1,1]{1,0:T(1,128)S(1)}', space=vmem, size = 0x200, scoped, tag = 'scoped memory for tpu_custom_call.1']
  %s0 = inlined_call_operand.hbm [shape: f32[8,24], index: 0, kind: input, shape index: {}]
  %s1 = inlined_call_operand.hbm [shape: f32[8,8], index: 1, kind: input, shape index: {}]
  %s2 = inlined_call_operand.hbm [shape: bf16[32,1280], index: 2, kind: input, shape index: {}]
  %s3 = inlined_call_operand.hbm [shape: f32[1,1280], index: 3, kind: input, shape index: {}]
  %s4 = inlined_call_operand.hbm [shape: bf16[1280,640], index: 4, kind: input, shape index: {}]
  %s5 = inlined_call_operand.hbm [shape: f32[1,640], index: 5, kind: input, shape index: {}]
  %s6 = inlined_call_operand.hbm [shape: bf16[1,640], index: 6, kind: input, shape index: {}]
  %s7 = inlined_call_operand.<no memory space> [shape: f32[1,1], index: 7, kind: input, shape index: {}]
  %s8 = inlined_call_operand.vmem [shape: f32[8,1], index: 8, kind: output, shape index: {}]
  %s9 = sld [smem:[#allocation0]]
  $region70: #{tpu_custom_call.1} parent=0
    _
  %s11 = ssub.s32 1, %s9
  %s12 = scalar_select 0, %s11, %s9
  %v13 = vstv %s7
  %14 = vst [vmem:[#allocation2] sm:$0x1] %v13
  $region1: #{tpu_custom_call.1} parent=0
    #allocation3 [shape = 'u8[4096]{0}', space=vmem, size = 0x1000, scoped, tag = 'input window, operand 0, single buffered']
    #allocation4 [shape = 's32[1]{0}', space=sflag, size = 0x4, scoped, tag = 'scoped memory for tpu_custom_call.1']
    #allocation5 [shape = 'u8[4096]{0}', space=vmem, size = 0x1000, scoped, tag = 'input window, operand 1, single buffered']
    #allocation6 [shape = 's32[1]{0}', space=sflag, size = 0x4, scoped, tag = 'scoped memory for tpu_custom_call.1']
    #allocation7 [shape = 'u8[81920]{0}', space=vmem, size = 0x14000, scoped, tag = 'input window, operand 2, single buffered']
    #allocation8 [shape = 'u8[5120]{0}', space=vmem, size = 0x1400, scoped, tag = 'input window, operand 3, single buffered']
    #allocation9 [shape = 's32[1]{0}', space=sflag, size = 0x4, scoped, tag = 'scoped memory for tpu_custom_call.1']
    #allocation10 [shape = 'u8[1638400]{0}', space=vmem, size = 0x190000, scoped, tag = 'input window, operand 4, single buffered']
    #allocation11 [shape = 'u8[2560]{0}', space=vmem, size = 0xc00, scoped, tag = 'input window, operand 5, single buffered']
    #allocation12 [shape = 's32[1]{0}', space=sflag, size = 0x4, scoped, tag = 'scoped memory for tpu_custom_call.1']
    #allocation13 [shape = 'u8[2560]{0}', space=vmem, size = 0xc00, scoped, tag = 'input window, operand 6, single buffered']
    %15 = vsyncpa [#allocation4], 0
    %16 = vsyncpa [#allocation6], 0
    %17 = vsyncpa [#allocation9], 0
    %18 = vsyncpa [#allocation12], 0
    // Predicated region
    $region2: #{tpu_custom_call.1} parent=1 // pred_check
      _
    $region3: #{tpu_custom_call.1} parent=1 // pred_check_branch
      %20 = sbr.rel (0) target = $region5
    $region4: #{tpu_custom_call.1} parent=1 // pred_region
      %s22 = ssub.s32 128, 128
      %23 = vsyncadd [#allocation4], %s22
      %s25 = sshll.u32 [#allocation3], 4
      %s26 = int_to_ptr.vmem [resolvable:$true] %s25
      %28 = dma.hbm_to_vmem [thread:$0]  %s0, 128, %s26, [#allocation4]
    $region5: #{tpu_custom_call.1} parent=1 // pred_fallthru
      _
    // Predicated region
    $region6: #{tpu_custom_call.1} parent=1 // pred_check
      _
    $region7: #{tpu_custom_call.1} parent=1 // pred_check_branch
      %30 = sbr.rel (0) target = $region9
    $region8: #{tpu_custom_call.1} parent=1 // pred_region
      %s32 = ssub.s32 128, 128
      %33 = vsyncadd [#allocation6], %s32
      %s35 = sshll.u32 [#allocation5], 4
      %s36 = int_to_ptr.vmem [resolvable:$true] %s35
      %38 = dma.hbm_to_vmem [thread:$0]  %s1, 128, %s36, [#allocation6]
    $region9: #{tpu_custom_call.1} parent=1 // pred_fallthru
      _
    // Predicated region
    $region10: #{tpu_custom_call.1} parent=1 // pred_check
      _
    $region11: #{tpu_custom_call.1} parent=1 // pred_check_branch
      %40 = sbr.rel (0) target = $region13
    $region12: #{tpu_custom_call.1} parent=1 // pred_region
      %s42 = ssub.s32 2560, 2560
      %43 = vsyncadd [#allocation6], %s42
      %s44 = sshll.u32 [#allocation7], 4
      %s45 = int_to_ptr.vmem [resolvable:$true] %s44
      %50 = dma.hbm_to_vmem [thread:$0]  %s2, 2560, %s45, [#allocation6], 640, 640, 40
    $region13: #{tpu_custom_call.1} parent=1 // pred_fallthru
      _
    // Predicated region
    $region14: #{tpu_custom_call.1} parent=1 // pred_check
      _
    $region15: #{tpu_custom_call.1} parent=1 // pred_check_branch
      %52 = sbr.rel (0) target = $region17
    $region16: #{tpu_custom_call.1} parent=1 // pred_region
      %s54 = ssub.s32 160, 160
      %55 = vsyncadd [#allocation9], %s54
      %s57 = sshll.u32 [#allocation8], 4
      %s58 = int_to_ptr.vmem [resolvable:$true] %s57
      %60 = dma.hbm_to_vmem [thread:$0]  %s3, 160, %s58, [#allocation9]
    $region17: #{tpu_custom_call.1} parent=1 // pred_fallthru
      _
    // Predicated region
    $region18: #{tpu_custom_call.1} parent=1 // pred_check
      _
    $region19: #{tpu_custom_call.1} parent=1 // pred_check_branch
      %62 = sbr.rel (0) target = $region21
    $region20: #{tpu_custom_call.1} parent=1 // pred_region
      %s64 = ssub.s32 51200, 51200
      %65 = vsyncadd [#allocation9], %s64
      %s66 = sshll.u32 [#allocation10], 4
      %s67 = int_to_ptr.vmem [resolvable:$true] %s66
      %72 = dma.hbm_to_vmem [thread:$0]  %s4, 51200, %s67, [#allocation9], 320, 320, 20
    $region21: #{tpu_custom_call.1} parent=1 // pred_fallthru
      _
    // Predicated region
    $region22: #{tpu_custom_call.1} parent=1 // pred_check
      _
    $region23: #{tpu_custom_call.1} parent=1 // pred_check_branch
      %74 = sbr.rel (0) target = $region25
    $region24: #{tpu_custom_call.1} parent=1 // pred_region
      %s76 = ssub.s32 80, 80
      %77 = vsyncadd [#allocation12], %s76
      %s79 = sshll.u32 [#allocation11], 4
      %s80 = int_to_ptr.vmem [resolvable:$true] %s79
      %82 = dma.hbm_to_vmem [thread:$0]  %s5, 80, %s80, [#allocation12]
    $region25: #{tpu_custom_call.1} parent=1 // pred_fallthru
      _
    // Predicated region
    $region26: #{tpu_custom_call.1} parent=1 // pred_check
      _
    $region27: #{tpu_custom_call.1} parent=1 // pred_check_branch
      %84 = sbr.rel (0) target = $region29
    $region28: #{tpu_custom_call.1} parent=1 // pred_region
      %s86 = ssub.s32 80, 80
      %87 = vsyncadd [#allocation12], %s86
      %s89 = sshll.u32 [#allocation13], 4
      %s90 = int_to_ptr.vmem [resolvable:$true] %s89
      %92 = dma.hbm_to_vmem [thread:$0]  %s6, 80, %s90, [#allocation12]
    $region29: #{tpu_custom_call.1} parent=1 // pred_fallthru
      _
    // Predicated region
    $region30: #{tpu_custom_call.1} parent=1 // pred_check
      _
    $region31: #{tpu_custom_call.1} parent=1 // pred_check_branch
      %94 = sbr.rel (0) target = $region33
    $region32: #{tpu_custom_call.1} parent=1 // pred_region
      _
    $region33: #{tpu_custom_call.1} parent=1 // pred_fallthru
      _
    // Predicated region
    $region34: #{tpu_custom_call.1} parent=1 // pred_check
      _
    $region35: #{tpu_custom_call.1} parent=1 // pred_check_branch
      %96 = sbr.rel (0) target = $region37
    $region36: #{tpu_custom_call.1} parent=1 // pred_region
      %97 = dma.done [#allocation4], 128
    $region37: #{tpu_custom_call.1} parent=1 // pred_fallthru
      _
    // Predicated region
    $region38: #{tpu_custom_call.1} parent=1 // pred_check
      _
    $region39: #{tpu_custom_call.1} parent=1 // pred_check_branch
      %99 = sbr.rel (0) target = $region41
    $region40: #{tpu_custom_call.1} parent=1 // pred_region
      %100 = dma.done [#allocation6], 128
    $region41: #{tpu_custom_call.1} parent=1 // pred_fallthru
      _
    // Predicated region
    $region42: #{tpu_custom_call.1} parent=1 // pred_check
      _
    $region43: #{tpu_custom_call.1} parent=1 // pred_check_branch
      %102 = sbr.rel (0) target = $region45
    $region44: #{tpu_custom_call.1} parent=1 // pred_region
      %103 = dma.done [#allocation6], 2560
    $region45: #{tpu_custom_call.1} parent=1 // pred_fallthru
      _
    // Predicated region
    $region46: #{tpu_custom_call.1} parent=1 // pred_check
      _
    $region47: #{tpu_custom_call.1} parent=1 // pred_check_branch
      %105 = sbr.rel (0) target = $region49
    $region48: #{tpu_custom_call.1} parent=1 // pred_region
      %106 = dma.done [#allocation9], 160
    $region49: #{tpu_custom_call.1} parent=1 // pred_fallthru
      _
    // Predicated region
    $region50: #{tpu_custom_call.1} parent=1 // pred_check
      _
    $region51: #{tpu_custom_call.1} parent=1 // pred_check_branch
      %108 = sbr.rel (0) target = $region53
    $region52: #{tpu_custom_call.1} parent=1 // pred_region
      %109 = dma.done [#allocation9], 51200
    $region53: #{tpu_custom_call.1} parent=1 // pred_fallthru
      _
    // Predicated region
    $region54: #{tpu_custom_call.1} parent=1 // pred_check
      _
    $region55: #{tpu_custom_call.1} parent=1 // pred_check_branch
      %111 = sbr.rel (0) target = $region57
    $region56: #{tpu_custom_call.1} parent=1 // pred_region
      %112 = dma.done [#allocation12], 80
    $region57: #{tpu_custom_call.1} parent=1 // pred_fallthru
      _
    // Predicated region
    $region58: #{tpu_custom_call.1} parent=1 // pred_check
      _
    $region59: #{tpu_custom_call.1} parent=1 // pred_check_branch
      %114 = sbr.rel (0) target = $region61
    $region60: #{tpu_custom_call.1} parent=1 // pred_region
      %115 = dma.done [#allocation12], 80
    $region61: #{tpu_custom_call.1} parent=1 // pred_fallthru
      _
    %v117 = vld [vmem:[#allocation3] sm:$0xff]
    %v118 = vld [vmem:[#allocation5] sm:$0xff]
    %120 = vrot.lane.b32.xlu0 %v118, 24
    %v121 = vpop.permute.xlu0 %120
    %vm123 = vcmask 195584
    %v124 = vsel %vm123, %v117, %v121
    %v125 = vpack.c.bf16 %v124, %v124
    %v126 = vld [vmem:[#allocation7] sm:$0xff]
    %v127 = vld [vmem:[#allocation7 + $0x8] sm:$0xff]
    %v128 = vld [vmem:[#allocation7 + $0x10] sm:$0xff]
    %v129 = vld [vmem:[#allocation7 + $0x18] sm:$0xff]
    %v130 = vld [vmem:[#allocation7 + $0x20] sm:$0xff]
    %v131 = vld [vmem:[#allocation7 + $0x28] sm:$0xff]
    %v132 = vld [vmem:[#allocation7 + $0x30] sm:$0xff]
    %v133 = vld [vmem:[#allocation7 + $0x38] sm:$0xff]
    %v134 = vld [vmem:[#allocation7 + $0x40] sm:$0xff]
    %v135 = vld [vmem:[#allocation7 + $0x48] sm:$0xff]
    %v136 = vld [vmem:[#allocation7 + $0x50] sm:$0xff]
    %v137 = vld [vmem:[#allocation7 + $0x58] sm:$0xff]
    %v138 = vld [vmem:[#allocation7 + $0x60] sm:$0xff]
    %v139 = vld [vmem:[#allocation7 + $0x68] sm:$0xff]
    %v140 = vld [vmem:[#allocation7 + $0x70] sm:$0xff]
    %v141 = vld [vmem:[#allocation7 + $0x78] sm:$0xff]
    %v142 = vld [vmem:[#allocation7 + $0x80] sm:$0xff]
    %v143 = vld [vmem:[#allocation7 + $0x88] sm:$0xff]
    %v144 = vld [vmem:[#allocation7 + $0x90] sm:$0xff]
    %v145 = vld [vmem:[#allocation7 + $0x98] sm:$0xff]
    %v146 = vld [vmem:[#allocation8] sm:$0xff]
    %v147 = vld [vmem:[#allocation8 + $0x8] sm:$0x3]
    %v150 = vlaneseq
    %v151 = vshrl.u32 %v150, 7
    %v152 = vsub.s32 0, %v151
    %v153 = vrot.slane %v146, %v152
    %v154 = vlaneseq
    %v155 = vshrl.u32 %v154, 7
    %v156 = vsub.s32 1, %v155
    %v157 = vrot.slane %v146, %v156
    %v158 = vlaneseq
    %v159 = vshrl.u32 %v158, 7
    %v160 = vsub.s32 2, %v159
    %v161 = vrot.slane %v146, %v160
    %v162 = vlaneseq
    %v163 = vshrl.u32 %v162, 7
    %v164 = vsub.s32 3, %v163
    %v165 = vrot.slane %v146, %v164
    %v166 = vlaneseq
    %v167 = vshrl.u32 %v166, 7
    %v168 = vsub.s32 4, %v167
    %v169 = vrot.slane %v146, %v168
    %v170 = vlaneseq
    %v171 = vshrl.u32 %v170, 7
    %v172 = vsub.s32 5, %v171
    %v173 = vrot.slane %v146, %v172
    %v174 = vlaneseq
    %v175 = vshrl.u32 %v174, 7
    %v176 = vsub.s32 6, %v175
    %v177 = vrot.slane %v146, %v176
    %v178 = vlaneseq
    %v179 = vshrl.u32 %v178, 7
    %v180 = vsub.s32 7, %v179
    %v181 = vrot.slane %v146, %v180
    %v182 = vlaneseq
    %v183 = vshrl.u32 %v182, 7
    %v184 = vsub.s32 0, %v183
    %v185 = vrot.slane %v147, %v184
    %v186 = vlaneseq
    %v187 = vshrl.u32 %v186, 7
    %v188 = vsub.s32 1, %v187
    %v189 = vrot.slane %v147, %v188
    %v220 = vunpack.c.l.b16 %v126
    %v221 = vunpack.c.h.b16 %v126
    %v222 = vunpack.c.l.b16 %v127
    %v223 = vunpack.c.h.b16 %v127
    %v224 = vunpack.c.l.b16 %v128
    %v225 = vunpack.c.h.b16 %v128
    %v226 = vunpack.c.l.b16 %v129
    %v227 = vunpack.c.h.b16 %v129
    %v228 = vunpack.c.l.b16 %v130
    %v229 = vunpack.c.h.b16 %v130
    %v230 = vunpack.c.l.b16 %v131
    %v231 = vunpack.c.h.b16 %v131
    %v232 = vunpack.c.l.b16 %v132
    %v233 = vunpack.c.h.b16 %v132
    %v234 = vunpack.c.l.b16 %v133
    %v235 = vunpack.c.h.b16 %v133
    %v236 = vunpack.c.l.b16 %v134
    %v237 = vunpack.c.h.b16 %v134
    %v238 = vunpack.c.l.b16 %v135
    %v239 = vunpack.c.h.b16 %v135
    %v240 = vunpack.c.l.b16 %v136
    %v241 = vunpack.c.h.b16 %v136
    %v242 = vunpack.c.l.b16 %v137
    %v243 = vunpack.c.h.b16 %v137
    %v244 = vunpack.c.l.b16 %v138
    %v245 = vunpack.c.h.b16 %v138
    %v246 = vunpack.c.l.b16 %v139
    %v247 = vunpack.c.h.b16 %v139
    %v248 = vunpack.c.l.b16 %v140
    %v249 = vunpack.c.h.b16 %v140
    %v250 = vunpack.c.l.b16 %v141
    %v251 = vunpack.c.h.b16 %v141
    %v252 = vunpack.c.l.b16 %v142
    %v253 = vunpack.c.h.b16 %v142
    %v254 = vunpack.c.l.b16 %v143
    %v255 = vunpack.c.h.b16 %v143
    %v256 = vunpack.c.l.b16 %v144
    %v257 = vunpack.c.h.b16 %v144
    %v258 = vunpack.c.l.b16 %v145
    %v259 = vunpack.c.h.b16 %v145
    %v260 = vpack.c.b16 %v230, %v220
    %v261 = vpack.c.b16 %v231, %v221
    %v262 = vpack.c.b16 %v232, %v222
    %v263 = vpack.c.b16 %v233, %v223
    %v264 = vpack.c.b16 %v234, %v224
    %v265 = vpack.c.b16 %v235, %v225
    %v266 = vpack.c.b16 %v236, %v226
    %v267 = vpack.c.b16 %v237, %v227
    %v268 = vpack.c.b16 %v238, %v228
    %v269 = vpack.c.b16 %v239, %v229
    %v270 = vpack.c.b16 %v250, %v240
    %v271 = vpack.c.b16 %v251, %v241
    %v272 = vpack.c.b16 %v252, %v242
    %v273 = vpack.c.b16 %v253, %v243
    %v274 = vpack.c.b16 %v254, %v244
    %v275 = vpack.c.b16 %v255, %v245
    %v276 = vpack.c.b16 %v256, %v246
    %v277 = vpack.c.b16 %v257, %v247
    %v278 = vpack.c.b16 %v258, %v248
    %v279 = vpack.c.b16 %v259, %v249
    %vm300 = vcmask 261120
    %v302 = vsel %vm300, %v125, 0
    %304 = vmatprep.subr.bf16.mxu0 %v261
    %305 = vmatpush1.bf16.msra.mxu0 %v260
    %306 = vmatprep.subr.bf16.mxu0 %v271
    %307 = vmatpush1.bf16.msra.mxu0 %v270
    %308 = vmatprep.subr.bf16.mxu0 0
    %309 = vmatpush1.bf16.msra.mxu0 0
    %310 = vmatprep.subr.bf16.mxu0 0
    %311 = vmatpush1.bf16.msra.mxu0 0
    %312 = vmatprep.subr.bf16.mxu0 0
    %313 = vmatpush1.bf16.msra.mxu0 0
    %314 = vmatprep.subr.bf16.mxu0 0
    %315 = vmatpush1.bf16.msra.mxu0 0
    %316 = vmatprep.subr.bf16.mxu0 0
    %317 = vmatpush1.bf16.msra.mxu0 0
    %318 = vmatprep.subr.bf16.mxu0 0
    %319 = vmatpush1.bf16.msra.mxu0 0
    %320 = vmatprep.subr.bf16.mxu0 0
    %321 = vmatpush1.bf16.msra.mxu0 0
    %322 = vmatprep.subr.bf16.mxu0 0
    %323 = vmatpush1.bf16.msra.mxu0 0
    %324 = vmatprep.subr.bf16.mxu0 0
    %325 = vmatpush1.bf16.msra.mxu0 0
    %326 = vmatprep.subr.bf16.mxu0 0
    %327 = vmatpush1.bf16.msra.mxu0 0
    %328 = vmatprep.subr.bf16.mxu0 0
    %329 = vmatpush1.bf16.msra.mxu0 0
    %330 = vmatprep.subr.bf16.mxu0 0
    %331 = vmatpush1.bf16.msra.mxu0 0
    %332 = vmatprep.subr.bf16.mxu0 0
    %333 = vmatpush1.bf16.msra.mxu0 0
    %334 = vmatprep.subr.bf16.mxu0 0
    %335 = vmatpush1.bf16.msra.mxu0 0
    %336 = vmatprep.mubr.bf16.mxu0 0
    %337 = vmatmul.mubr.bf16.gmra.mrb[0].mxu0 %v302
    %v338 = vpop.f32.mrb[0].mxu0
    %v339 = vadd.f32 %v153, %v338
    %v340 = vpop.f32.mrb[0].mxu0
    %v341 = vadd.f32 %v157, %v340
    %v342 = vpop.f32.mrb[0].mxu0
    %v343 = vpop.f32.mrb[0].mxu0
    %344 = vdwg.mxu0
    %345 = vmatprep.subr.bf16.mxu0 %v263
    %346 = vmatpush1.bf16.msra.mxu0 %v262
    %347 = vmatprep.subr.bf16.mxu0 %v273
    %348 = vmatpush1.bf16.msra.mxu0 %v272
    %349 = vmatprep.subr.bf16.mxu0 0
    %350 = vmatpush1.bf16.msra.mxu0 0
    %351 = vmatprep.subr.bf16.mxu0 0
    %352 = vmatpush1.bf16.msra.mxu0 0
    %353 = vmatprep.subr.bf16.mxu0 0
    %354 = vmatpush1.bf16.msra.mxu0 0
    %355 = vmatprep.subr.bf16.mxu0 0
    %356 = vmatpush1.bf16.msra.mxu0 0
    %357 = vmatprep.subr.bf16.mxu0 0
    %358 = vmatpush1.bf16.msra.mxu0 0
    %359 = vmatprep.subr.bf16.mxu0 0
    %360 = vmatpush1.bf16.msra.mxu0 0
    %361 = vmatprep.subr.bf16.mxu0 0
    %362 = vmatpush1.bf16.msra.mxu0 0
    %363 = vmatprep.subr.bf16.mxu0 0
    %364 = vmatpush1.bf16.msra.mxu0 0
    %365 = vmatprep.subr.bf16.mxu0 0
    %366 = vmatpush1.bf16.msra.mxu0 0
    %367 = vmatprep.subr.bf16.mxu0 0
    %368 = vmatpush1.bf16.msra.mxu0 0
    %369 = vmatprep.subr.bf16.mxu0 0
    %370 = vmatpush1.bf16.msra.mxu0 0
    %371 = vmatprep.subr.bf16.mxu0 0
    %372 = vmatpush1.bf16.msra.mxu0 0
    %373 = vmatprep.subr.bf16.mxu0 0
    %374 = vmatpush1.bf16.msra.mxu0 0
    %375 = vmatprep.subr.bf16.mxu0 0
    %376 = vmatpush1.bf16.msra.mxu0 0
    %377 = vmatprep.mubr.bf16.mxu0 0
    %378 = vmatmul.mubr.bf16.gmra.mrb[0].mxu0 %v302
    %v379 = vpop.f32.mrb[0].mxu0
    %v380 = vadd.f32 %v161, %v379
    %v381 = vpop.f32.mrb[0].mxu0
    %v382 = vadd.f32 %v165, %v381
    %v383 = vpop.f32.mrb[0].mxu0
    %v384 = vpop.f32.mrb[0].mxu0
    %385 = vdwg.mxu0
    %386 = vmatprep.subr.bf16.mxu0 %v265
    %387 = vmatpush1.bf16.msra.mxu0 %v264
    %388 = vmatprep.subr.bf16.mxu0 %v275
    %389 = vmatpush1.bf16.msra.mxu0 %v274
    %390 = vmatprep.subr.bf16.mxu0 0
    %391 = vmatpush1.bf16.msra.mxu0 0
    %392 = vmatprep.subr.bf16.mxu0 0
    %393 = vmatpush1.bf16.msra.mxu0 0
    %394 = vmatprep.subr.bf16.mxu0 0
    %395 = vmatpush1.bf16.msra.mxu0 0
    %396 = vmatprep.subr.bf16.mxu0 0
    %397 = vmatpush1.bf16.msra.mxu0 0
    %398 = vmatprep.subr.bf16.mxu0 0
    %399 = vmatpush1.bf16.msra.mxu0 0
    %400 = vmatprep.subr.bf16.mxu0 0
    %401 = vmatpush1.bf16.msra.mxu0 0
    %402 = vmatprep.subr.bf16.mxu0 0
    %403 = vmatpush1.bf16.msra.mxu0 0
    %404 = vmatprep.subr.bf16.mxu0 0
    %405 = vmatpush1.bf16.msra.mxu0 0
    %406 = vmatprep.subr.bf16.mxu0 0
    %407 = vmatpush1.bf16.msra.mxu0 0
    %408 = vmatprep.subr.bf16.mxu0 0
    %409 = vmatpush1.bf16.msra.mxu0 0
    %410 = vmatprep.subr.bf16.mxu0 0
    %411 = vmatpush1.bf16.msra.mxu0 0
    %412 = vmatprep.subr.bf16.mxu0 0
    %413 = vmatpush1.bf16.msra.mxu0 0
    %414 = vmatprep.subr.bf16.mxu0 0
    %415 = vmatpush1.bf16.msra.mxu0 0
    %416 = vmatprep.subr.bf16.mxu0 0
    %417 = vmatpush1.bf16.msra.mxu0 0
    %418 = vmatprep.mubr.bf16.mxu0 0
    %419 = vmatmul.mubr.bf16.gmra.mrb[0].mxu0 %v302
    %v420 = vpop.f32.mrb[0].mxu0
    %v421 = vadd.f32 %v169, %v420
    %v422 = vpop.f32.mrb[0].mxu0
    %v423 = vadd.f32 %v173, %v422
    %v424 = vpop.f32.mrb[0].mxu0
    %v425 = vpop.f32.mrb[0].mxu0
    %426 = vdwg.mxu0
    %427 = vmatprep.subr.bf16.mxu0 %v267
    %428 = vmatpush1.bf16.msra.mxu0 %v266
    %429 = vmatprep.subr.bf16.mxu0 %v277
    %430 = vmatpush1.bf16.msra.mxu0 %v276
    %431 = vmatprep.subr.bf16.mxu0 0
    %432 = vmatpush1.bf16.msra.mxu0 0
    %433 = vmatprep.subr.bf16.mxu0 0
    %434 = vmatpush1.bf16.msra.mxu0 0
    %435 = vmatprep.subr.bf16.mxu0 0
    %436 = vmatpush1.bf16.msra.mxu0 0
    %437 = vmatprep.subr.bf16.mxu0 0
    %438 = vmatpush1.bf16.msra.mxu0 0
    %439 = vmatprep.subr.bf16.mxu0 0
    %440 = vmatpush1.bf16.msra.mxu0 0
    %441 = vmatprep.subr.bf16.mxu0 0
    %442 = vmatpush1.bf16.msra.mxu0 0
    %443 = vmatprep.subr.bf16.mxu0 0
    %444 = vmatpush1.bf16.msra.mxu0 0
    %445 = vmatprep.subr.bf16.mxu0 0
    %446 = vmatpush1.bf16.msra.mxu0 0
    %447 = vmatprep.subr.bf16.mxu0 0
    %448 = vmatpush1.bf16.msra.mxu0 0
    %449 = vmatprep.subr.bf16.mxu0 0
    %450 = vmatpush1.bf16.msra.mxu0 0
    %451 = vmatprep.subr.bf16.mxu0 0
    %452 = vmatpush1.bf16.msra.mxu0 0
    %453 = vmatprep.subr.bf16.mxu0 0
    %454 = vmatpush1.bf16.msra.mxu0 0
    %455 = vmatprep.subr.bf16.mxu0 0
    %456 = vmatpush1.bf16.msra.mxu0 0
    %457 = vmatprep.subr.bf16.mxu0 0
    %458 = vmatpush1.bf16.msra.mxu0 0
    %459 = vmatprep.mubr.bf16.mxu0 0
    %460 = vmatmul.mubr.bf16.gmra.mrb[0].mxu0 %v302
    %v461 = vpop.f32.mrb[0].mxu0
    %v462 = vadd.f32 %v177, %v461
    %v463 = vpop.f32.mrb[0].mxu0
    %v464 = vadd.f32 %v181, %v463
    %v465 = vpop.f32.mrb[0].mxu0
    %v466 = vpop.f32.mrb[0].mxu0
    %467 = vdwg.mxu0
    %468 = vmatprep.subr.bf16.mxu0 %v269
    %469 = vmatpush1.bf16.msra.mxu0 %v268
    %470 = vmatprep.subr.bf16.mxu0 %v279
    %471 = vmatpush1.bf16.msra.mxu0 %v278
    %472 = vmatprep.subr.bf16.mxu0 0
    %473 = vmatpush1.bf16.msra.mxu0 0
    %474 = vmatprep.subr.bf16.mxu0 0
    %475 = vmatpush1.bf16.msra.mxu0 0
    %476 = vmatprep.subr.bf16.mxu0 0
    %477 = vmatpush1.bf16.msra.mxu0 0
    %478 = vmatprep.subr.bf16.mxu0 0
    %479 = vmatpush1.bf16.msra.mxu0 0
    %480 = vmatprep.subr.bf16.mxu0 0
    %481 = vmatpush1.bf16.msra.mxu0 0
    %482 = vmatprep.subr.bf16.mxu0 0
    %483 = vmatpush1.bf16.msra.mxu0 0
    %484 = vmatprep.subr.bf16.mxu0 0
    %485 = vmatpush1.bf16.msra.mxu0 0
    %486 = vmatprep.subr.bf16.mxu0 0
    %487 = vmatpush1.bf16.msra.mxu0 0
    %488 = vmatprep.subr.bf16.mxu0 0
    %489 = vmatpush1.bf16.msra.mxu0 0
    %490 = vmatprep.subr.bf16.mxu0 0
    %491 = vmatpush1.bf16.msra.mxu0 0
    %492 = vmatprep.subr.bf16.mxu0 0
    %493 = vmatpush1.bf16.msra.mxu0 0
    %494 = vmatprep.subr.bf16.mxu0 0
    %495 = vmatpush1.bf16.msra.mxu0 0
    %496 = vmatprep.subr.bf16.mxu0 0
    %497 = vmatpush1.bf16.msra.mxu0 0
    %498 = vmatprep.subr.bf16.mxu0 0
    %499 = vmatpush1.bf16.msra.mxu0 0
    %500 = vmatprep.mubr.bf16.mxu0 0
    %501 = vmatmul.mubr.bf16.gmra.mrb[0].mxu0 %v302
    %v502 = vpop.f32.mrb[0].mxu0
    %v503 = vadd.f32 %v185, %v502
    %v504 = vpop.f32.mrb[0].mxu0
    %v505 = vadd.f32 %v189, %v504
    %v506 = vpop.f32.mrb[0].mxu0
    %v507 = vpop.f32.mrb[0].mxu0
    %508 = vdwg.mxu0
    %vm509 = vcmp.gt.f32.partialorder %v339, 0.0
    %vm510 = vcmp.gt.f32.partialorder %v341, 0.0
    %vm511 = vcmp.gt.f32.partialorder %v380, 0.0
    %vm512 = vcmp.gt.f32.partialorder %v382, 0.0
    %vm513 = vcmp.gt.f32.partialorder %v421, 0.0
    %vm514 = vcmp.gt.f32.partialorder %v423, 0.0
    %vm515 = vcmp.gt.f32.partialorder %v462, 0.0
    %vm516 = vcmp.gt.f32.partialorder %v464, 0.0
    %vm517 = vcmp.gt.f32.partialorder %v503, 0.0
    %vm518 = vcmp.gt.f32.partialorder %v505, 0.0
    %v519 = vmul.f32 %v339, 0.01
    %v520 = vmul.f32 %v341, 0.01
    %v521 = vmul.f32 %v380, 0.01
    %v522 = vmul.f32 %v382, 0.01
    %v523 = vmul.f32 %v421, 0.01
    %v524 = vmul.f32 %v423, 0.01
    %v525 = vmul.f32 %v462, 0.01
    %v526 = vmul.f32 %v464, 0.01
    %v527 = vmul.f32 %v503, 0.01
    %v528 = vmul.f32 %v505, 0.01
    %v529 = vsel %vm509, %v339, %v519
    %v530 = vsel %vm510, %v341, %v520
    %v531 = vsel %vm511, %v380, %v521
    %v532 = vsel %vm512, %v382, %v522
    %v533 = vsel %vm513, %v421, %v523
    %v534 = vsel %vm514, %v423, %v524
    %v535 = vsel %vm515, %v462, %v525
    %v536 = vsel %vm516, %v464, %v526
    %v537 = vsel %vm517, %v503, %v527
    %v538 = vsel %vm518, %v505, %v528
    %v539 = vpack.c.bf16 %v529, %v529
    %v540 = vpack.c.bf16 %v530, %v530
    %v541 = vpack.c.bf16 %v531, %v531
    %v542 = vpack.c.bf16 %v532, %v532
    %v543 = vpack.c.bf16 %v533, %v533
    %v544 = vpack.c.bf16 %v534, %v534
    %v545 = vpack.c.bf16 %v535, %v535
    %v546 = vpack.c.bf16 %v536, %v536
    %v547 = vpack.c.bf16 %v537, %v537
    %v548 = vpack.c.bf16 %v538, %v538
    %v549 = vld [vmem:[#allocation10] sm:$0xff]
    %v550 = vld [vmem:[#allocation10 + $0x8] sm:$0xff]
    %v551 = vld [vmem:[#allocation10 + $0x10] sm:$0xf]
    %v552 = vld [vmem:[#allocation10 + $0x14] sm:$0xff]
    %v553 = vld [vmem:[#allocation10 + $0x1c] sm:$0xff]
    %v554 = vld [vmem:[#allocation10 + $0x24] sm:$0xf]
    %v555 = vld [vmem:[#allocation10 + $0x28] sm:$0xff]
    %v556 = vld [vmem:[#allocation10 + $0x30] sm:$0xff]
    %v557 = vld [vmem:[#allocation10 + $0x38] sm:$0xf]
    %v558 = vld [vmem:[#allocation10 + $0x3c] sm:$0xff]
    %v559 = vld [vmem:[#allocation10 + $0x44] sm:$0xff]
    %v560 = vld [vmem:[#allocation10 + $0x4c] sm:$0xf]
    %v561 = vld [vmem:[#allocation10 + $0x50] sm:$0xff]
    %v562 = vld [vmem:[#allocation10 + $0x58] sm:$0xff]
    %v563 = vld [vmem:[#allocation10 + $0x60] sm:$0xf]
    %v564 = vld [vmem:[#allocation10 + $0x64] sm:$0xff]
    %v565 = vld [vmem:[#allocation10 + $0x6c] sm:$0xff]
    %v566 = vld [vmem:[#allocation10 + $0x74] sm:$0xf]
    %v567 = vld [vmem:[#allocation10 + $0x78] sm:$0xff]
    %v568 = vld [vmem:[#allocation10 + $0x80] sm:$0xff]
    %v569 = vld [vmem:[#allocation10 + $0x88] sm:$0xf]
    %v570 = vld [vmem:[#allocation10 + $0x8c] sm:$0xff]
    %v571 = vld [vmem:[#allocation10 + $0x94] sm:$0xff]
    %v572 = vld [vmem:[#allocation10 + $0x9c] sm:$0xf]
    %v573 = vld [vmem:[#allocation10 + $0xa0] sm:$0xff]
    %v574 = vld [vmem:[#allocation10 + $0xa8] sm:$0xff]
    %v575 = vld [vmem:[#allocation10 + $0xb0] sm:$0xf]
    %v576 = vld [vmem:[#allocation10 + $0xb4] sm:$0xff]
    %v577 = vld [vmem:[#allocation10 + $0xbc] sm:$0xff]
    %v578 = vld [vmem:[#allocation10 + $0xc4] sm:$0xf]
    %v579 = vld [vmem:[#allocation10 + $0xc8] sm:$0xff]
    %v580 = vld [vmem:[#allocation10 + $0xd0] sm:$0xff]
    %v581 = vld [vmem:[#allocation10 + $0xd8] sm:$0xf]
    %v582 = vld [vmem:[#allocation10 + $0xdc] sm:$0xff]
    %v583 = vld [vmem:[#allocation10 + $0xe4] sm:$0xff]
    %v584 = vld [vmem:[#allocation10 + $0xec] sm:$0xf]
    %v585 = vld [vmem:[#allocation10 + $0xf0] sm:$0xff]
    %v586 = vld [vmem:[#allocation10 + $0xf8] sm:$0xff]
    %v587 = vld [vmem:[#allocation10 + $0x100] sm:$0xf]
    %v588 = vld [vmem:[#allocation10 + $0x104] sm:$0xff]
    %v589 = vld [vmem:[#allocation10 + $0x10c] sm:$0xff]
    %v590 = vld [vmem:[#allocation10 + $0x114] sm:$0xf]
    %v591 = vld [vmem:[#allocation10 + $0x118] sm:$0xff]
    %v592 = vld [vmem:[#allocation10 + $0x120] sm:$0xff]
    %v593 = vld [vmem:[#allocation10 + $0x128] sm:$0xf]
    %v594 = vld [vmem:[#allocation10 + $0x12c] sm:$0xff]
    %v595 = vld [vmem:[#allocation10 + $0x134] sm:$0xff]
    %v596 = vld [vmem:[#allocation10 + $0x13c] sm:$0xf]
    %v597 = vld [vmem:[#allocation10 + $0x140] sm:$0xff]
    %v598 = vld [vmem:[#allocation10 + $0x148] sm:$0xff]
    %v599 = vld [vmem:[#allocation10 + $0x150] sm:$0xf]
    %v600 = vld [vmem:[#allocation10 + $0x154] sm:$0xff]
    %v601 = vld [vmem:[#allocation10 + $0x15c] sm:$0xff]
    %v602 = vld [vmem:[#allocation10 + $0x164] sm:$0xf]
    %v603 = vld [vmem:[#allocation10 + $0x168] sm:$0xff]
    %v604 = vld [vmem:[#allocation10 + $0x170] sm:$0xff]
    %v605 = vld [vmem:[#allocation10 + $0x178] sm:$0xf]
    %v606 = vld [vmem:[#allocation10 + $0x17c] sm:$0xff]
    %v607 = vld [vmem:[#allocation10 + $0x184] sm:$0xff]
    %v608 = vld [vmem:[#allocation10 + $0x18c] sm:$0xf]
    %v609 = vld [vmem:[#allocation10 + $0x190] sm:$0xff]
    %v610 = vld [vmem:[#allocation10 + $0x198] sm:$0xff]
    %v611 = vld [vmem:[#allocation10 + $0x1a0] sm:$0xf]
    %v612 = vld [vmem:[#allocation10 + $0x1a4] sm:$0xff]
    %v613 = vld [vmem:[#allocation10 + $0x1ac] sm:$0xff]
    %v614 = vld [vmem:[#allocation10 + $0x1b4] sm:$0xf]
    %v615 = vld [vmem:[#allocation10 + $0x1b8] sm:$0xff]
    %v616 = vld [vmem:[#allocation10 + $0x1c0] sm:$0xff]
    %v617 = vld [vmem:[#allocation10 + $0x1c8] sm:$0xf]
    %v618 = vld [vmem:[#allocation10 + $0x1cc] sm:$0xff]
    %v619 = vld [vmem:[#allocation10 + $0x1d4] sm:$0xff]
    %v620 = vld [vmem:[#allocation10 + $0x1dc] sm:$0xf]
    %v621 = vld [vmem:[#allocation10 + $0x1e0] sm:$0xff]
    %v622 = vld [vmem:[#allocation10 + $0x1e8] sm:$0xff]
    %v623 = vld [vmem:[#allocation10 + $0x1f0] sm:$0xf]
    %v624 = vld [vmem:[#allocation10 + $0x1f4] sm:$0xff]
    %v625 = vld [vmem:[#allocation10 + $0x1fc] sm:$0xff]
    %v626 = vld [vmem:[#allocation10 + $0x204] sm:$0xf]
    %v627 = vld [vmem:[#allocation10 + $0x208] sm:$0xff]
    %v628 = vld [vmem:[#allocation10 + $0x210] sm:$0xff]
    %v629 = vld [vmem:[#allocation10 + $0x218] sm:$0xf]
    %v630 = vld [vmem:[#allocation10 + $0x21c] sm:$0xff]
    %v631 = vld [vmem:[#allocation10 + $0x224] sm:$0xff]
    %v632 = vld [vmem:[#allocation10 + $0x22c] sm:$0xf]
    %v633 = vld [vmem:[#allocation10 + $0x230] sm:$0xff]
    %v634 = vld [vmem:[#allocation10 + $0x238] sm:$0xff]
    %v635 = vld [vmem:[#allocation10 + $0x240] sm:$0xf]
    %v636 = vld [vmem:[#allocation10 + $0x244] sm:$0xff]
    %v637 = vld [vmem:[#allocation10 + $0x24c] sm:$0xff]
    %v638 = vld [vmem:[#allocation10 + $0x254] sm:$0xf]
    %v639 = vld [vmem:[#allocation10 + $0x258] sm:$0xff]
    %v640 = vld [vmem:[#allocation10 + $0x260] sm:$0xff]
    %v641 = vld [vmem:[#allocation10 + $0x268] sm:$0xf]
    %v642 = vld [vmem:[#allocation10 + $0x26c] sm:$0xff]
    %v643 = vld [vmem:[#allocation10 + $0x274] sm:$0xff]
    %v644 = vld [vmem:[#allocation10 + $0x27c] sm:$0xf]
    %v645 = vld [vmem:[#allocation10 + $0x280] sm:$0xff]
    %v646 = vld [vmem:[#allocation10 + $0x288] sm:$0xff]
    %v647 = vld [vmem:[#allocation10 + $0x290] sm:$0xf]
    %v648 = vld [vmem:[#allocation10 + $0x294] sm:$0xff]
    %v649 = vld [vmem:[#allocation10 + $0x29c] sm:$0xff]
    %v650 = vld [vmem:[#allocation10 + $0x2a4] sm:$0xf]
    %v651 = vld [vmem:[#allocation10 + $0x2a8] sm:$0xff]
    %v652 = vld [vmem:[#allocation10 + $0x2b0] sm:$0xff]
    %v653 = vld [vmem:[#allocation10 + $0x2b8] sm:$0xf]
    %v654 = vld [vmem:[#allocation10 + $0x2bc] sm:$0xff]
    %v655 = vld [vmem:[#allocation10 + $0x2c4] sm:$0xff]
    %v656 = vld [vmem:[#allocation10 + $0x2cc] sm:$0xf]
    %v657 = vld [vmem:[#allocation10 + $0x2d0] sm:$0xff]
    %v658 = vld [vmem:[#allocation10 + $0x2d8] sm:$0xff]
    %v659 = vld [vmem:[#allocation10 + $0x2e0] sm:$0xf]
    %v660 = vld [vmem:[#allocation10 + $0x2e4] sm:$0xff]
    %v661 = vld [vmem:[#allocation10 + $0x2ec] sm:$0xff]
    %v662 = vld [vmem:[#allocation10 + $0x2f4] sm:$0xf]
    %v663 = vld [vmem:[#allocation10 + $0x2f8] sm:$0xff]
    %v664 = vld [vmem:[#allocation10 + $0x300] sm:$0xff]
    %v665 = vld [vmem:[#allocation10 + $0x308] sm:$0xf]
    %v666 = vld [vmem:[#allocation10 + $0x30c] sm:$0xff]
    %v667 = vld [vmem:[#allocation10 + $0x314] sm:$0xff]
    %v668 = vld [vmem:[#allocation10 + $0x31c] sm:$0xf]
    %v669 = vld [vmem:[#allocation10 + $0x320] sm:$0xff]
    %v670 = vld [vmem:[#allocation10 + $0x328] sm:$0xff]
    %v671 = vld [vmem:[#allocation10 + $0x330] sm:$0xf]
    %v672 = vld [vmem:[#allocation10 + $0x334] sm:$0xff]
    %v673 = vld [vmem:[#allocation10 + $0x33c] sm:$0xff]
    %v674 = vld [vmem:[#allocation10 + $0x344] sm:$0xf]
    %v675 = vld [vmem:[#allocation10 + $0x348] sm:$0xff]
    %v676 = vld [vmem:[#allocation10 + $0x350] sm:$0xff]
    %v677 = vld [vmem:[#allocation10 + $0x358] sm:$0xf]
    %v678 = vld [vmem:[#allocation10 + $0x35c] sm:$0xff]
    %v679 = vld [vmem:[#allocation10 + $0x364] sm:$0xff]
    %v680 = vld [vmem:[#allocation10 + $0x36c] sm:$0xf]
    %v681 = vld [vmem:[#allocation10 + $0x370] sm:$0xff]
    %v682 = vld [vmem:[#allocation10 + $0x378] sm:$0xff]
    %v683 = vld [vmem:[#allocation10 + $0x380] sm:$0xf]
    %v684 = vld [vmem:[#allocation10 + $0x384] sm:$0xff]
    %v685 = vld [vmem:[#allocation10 + $0x38c] sm:$0xff]
    %v686 = vld [vmem:[#allocation10 + $0x394] sm:$0xf]
    %v687 = vld [vmem:[#allocation10 + $0x398] sm:$0xff]
    %v688 = vld [vmem:[#allocation10 + $0x3a0] sm:$0xff]
    %v689 = vld [vmem:[#allocation10 + $0x3a8] sm:$0xf]
    %v690 = vld [vmem:[#allocation10 + $0x3ac] sm:$0xff]
    %v691 = vld [vmem:[#allocation10 + $0x3b4] sm:$0xff]
    %v692 = vld [vmem:[#allocation10 + $0x3bc] sm:$0xf]
    %v693 = vld [vmem:[#allocation10 + $0x3c0] sm:$0xff]
    %v694 = vld [vmem:[#allocation10 + $0x3c8] sm:$0xff]
    %v695 = vld [vmem:[#allocation10 + $0x3d0] sm:$0xf]
    %v696 = vld [vmem:[#allocation10 + $0x3d4] sm:$0xff]
    %v697 = vld [vmem:[#allocation10 + $0x3dc] sm:$0xff]
    %v698 = vld [vmem:[#allocation10 + $0x3e4] sm:$0xf]
    %v699 = vld [vmem:[#allocation10 + $0x3e8] sm:$0xff]
    %v700 = vld [vmem:[#allocation10 + $0x3f0] sm:$0xff]
    %v701 = vld [vmem:[#allocation10 + $0x3f8] sm:$0xf]
    %v702 = vld [vmem:[#allocation10 + $0x3fc] sm:$0xff]
    %v703 = vld [vmem:[#allocation10 + $0x404] sm:$0xff]
    %v704 = vld [vmem:[#allocation10 + $0x40c] sm:$0xf]
    %v705 = vld [vmem:[#allocation10 + $0x410] sm:$0xff]
    %v706 = vld [vmem:[#allocation10 + $0x418] sm:$0xff]
    %v707 = vld [vmem:[#allocation10 + $0x420] sm:$0xf]
    %v708 = vld [vmem:[#allocation10 + $0x424] sm:$0xff]
    %v709 = vld [vmem:[#allocation10 + $0x42c] sm:$0xff]
    %v710 = vld [vmem:[#allocation10 + $0x434] sm:$0xf]
    %v711 = vld [vmem:[#allocation10 + $0x438] sm:$0xff]
    %v712 = vld [vmem:[#allocation10 + $0x440] sm:$0xff]
    %v713 = vld [vmem:[#allocation10 + $0x448] sm:$0xf]
    %v714 = vld [vmem:[#allocation10 + $0x44c] sm:$0xff]
    %v715 = vld [vmem:[#allocation10 + $0x454] sm:$0xff]
    %v716 = vld [vmem:[#allocation10 + $0x45c] sm:$0xf]
    %v717 = vld [vmem:[#allocation10 + $0x460] sm:$0xff]
    %v718 = vld [vmem:[#allocation10 + $0x468] sm:$0xff]
    %v719 = vld [vmem:[#allocation10 + $0x470] sm:$0xf]
    %v720 = vld [vmem:[#allocation10 + $0x474] sm:$0xff]
    %v721 = vld [vmem:[#allocation10 + $0x47c] sm:$0xff]
    %v722 = vld [vmem:[#allocation10 + $0x484] sm:$0xf]
    %v723 = vld [vmem:[#allocation10 + $0x488] sm:$0xff]
    %v724 = vld [vmem:[#allocation10 + $0x490] sm:$0xff]
    %v725 = vld [vmem:[#allocation10 + $0x498] sm:$0xf]
    %v726 = vld [vmem:[#allocation10 + $0x49c] sm:$0xff]
    %v727 = vld [vmem:[#allocation10 + $0x4a4] sm:$0xff]
    %v728 = vld [vmem:[#allocation10 + $0x4ac] sm:$0xf]
    %v729 = vld [vmem:[#allocation10 + $0x4b0] sm:$0xff]
    %v730 = vld [vmem:[#allocation10 + $0x4b8] sm:$0xff]
    %v731 = vld [vmem:[#allocation10 + $0x4c0] sm:$0xf]
    %v732 = vld [vmem:[#allocation10 + $0x4c4] sm:$0xff]
    %v733 = vld [vmem:[#allocation10 + $0x4cc] sm:$0xff]
    %v734 = vld [vmem:[#allocation10 + $0x4d4] sm:$0xf]
    %v735 = vld [vmem:[#allocation10 + $0x4d8] sm:$0xff]
    %v736 = vld [vmem:[#allocation10 + $0x4e0] sm:$0xff]
    %v737 = vld [vmem:[#allocation10 + $0x4e8] sm:$0xf]
    %v738 = vld [vmem:[#allocation10 + $0x4ec] sm:$0xff]
    %v739 = vld [vmem:[#allocation10 + $0x4f4] sm:$0xff]
    %v740 = vld [vmem:[#allocation10 + $0x4fc] sm:$0xf]
    %v741 = vld [vmem:[#allocation10 + $0x500] sm:$0xff]
    %v742 = vld [vmem:[#allocation10 + $0x508] sm:$0xff]
    %v743 = vld [vmem:[#allocation10 + $0x510] sm:$0xf]
    %v744 = vld [vmem:[#allocation10 + $0x514] sm:$0xff]
    %v745 = vld [vmem:[#allocation10 + $0x51c] sm:$0xff]
    %v746 = vld [vmem:[#allocation10 + $0x524] sm:$0xf]
    %v747 = vld [vmem:[#allocation10 + $0x528] sm:$0xff]
    %v748 = vld [vmem:[#allocation10 + $0x530] sm:$0xff]
    %v749 = vld [vmem:[#allocation10 + $0x538] sm:$0xf]
    %v750 = vld [vmem:[#allocation10 + $0x53c] sm:$0xff]
    %v751 = vld [vmem:[#allocation10 + $0x544] sm:$0xff]
    %v752 = vld [vmem:[#allocation10 + $0x54c] sm:$0xf]
    %v753 = vld [vmem:[#allocation10 + $0x550] sm:$0xff]
    %v754 = vld [vmem:[#allocation10 + $0x558] sm:$0xff]
    %v755 = vld [vmem:[#allocation10 + $0x560] sm:$0xf]
    %v756 = vld [vmem:[#allocation10 + $0x564] sm:$0xff]
    %v757 = vld [vmem:[#allocation10 + $0x56c] sm:$0xff]
    %v758 = vld [vmem:[#allocation10 + $0x574] sm:$0xf]
    %v759 = vld [vmem:[#allocation10 + $0x578] sm:$0xff]
    %v760 = vld [vmem:[#allocation10 + $0x580] sm:$0xff]
    %v761 = vld [vmem:[#allocation10 + $0x588] sm:$0xf]
    %v762 = vld [vmem:[#allocation10 + $0x58c] sm:$0xff]
    %v763 = vld [vmem:[#allocation10 + $0x594] sm:$0xff]
    %v764 = vld [vmem:[#allocation10 + $0x59c] sm:$0xf]
    %v765 = vld [vmem:[#allocation10 + $0x5a0] sm:$0xff]
    %v766 = vld [vmem:[#allocation10 + $0x5a8] sm:$0xff]
    %v767 = vld [vmem:[#allocation10 + $0x5b0] sm:$0xf]
    %v768 = vld [vmem:[#allocation10 + $0x5b4] sm:$0xff]
    %v769 = vld [vmem:[#allocation10 + $0x5bc] sm:$0xff]
    %v770 = vld [vmem:[#allocation10 + $0x5c4] sm:$0xf]
    %v771 = vld [vmem:[#allocation10 + $0x5c8] sm:$0xff]
    %v772 = vld [vmem:[#allocation10 + $0x5d0] sm:$0xff]
    %v773 = vld [vmem:[#allocation10 + $0x5d8] sm:$0xf]
    %v774 = vld [vmem:[#allocation10 + $0x5dc] sm:$0xff]
    %v775 = vld [vmem:[#allocation10 + $0x5e4] sm:$0xff]
    %v776 = vld [vmem:[#allocation10 + $0x5ec] sm:$0xf]
    %v777 = vld [vmem:[#allocation10 + $0x5f0] sm:$0xff]
    %v778 = vld [vmem:[#allocation10 + $0x5f8] sm:$0xff]
    %v779 = vld [vmem:[#allocation10 + $0x600] sm:$0xf]
    %v780 = vld [vmem:[#allocation10 + $0x604] sm:$0xff]
    %v781 = vld [vmem:[#allocation10 + $0x60c] sm:$0xff]
    %v782 = vld [vmem:[#allocation10 + $0x614] sm:$0xf]
    %v783 = vld [vmem:[#allocation10 + $0x618] sm:$0xff]
    %v784 = vld [vmem:[#allocation10 + $0x620] sm:$0xff]
    %v785 = vld [vmem:[#allocation10 + $0x628] sm:$0xf]
    %v786 = vld [vmem:[#allocation10 + $0x62c] sm:$0xff]
    %v787 = vld [vmem:[#allocation10 + $0x634] sm:$0xff]
    %v788 = vld [vmem:[#allocation10 + $0x63c] sm:$0xf]
    %v789 = vld [vmem:[#allocation10 + $0x640] sm:$0xff]
    %v790 = vld [vmem:[#allocation10 + $0x648] sm:$0xff]
    %v791 = vld [vmem:[#allocation10 + $0x650] sm:$0xf]
    %v792 = vld [vmem:[#allocation10 + $0x654] sm:$0xff]
    %v793 = vld [vmem:[#allocation10 + $0x65c] sm:$0xff]
    %v794 = vld [vmem:[#allocation10 + $0x664] sm:$0xf]
    %v795 = vld [vmem:[#allocation10 + $0x668] sm:$0xff]
    %v796 = vld [vmem:[#allocation10 + $0x670] sm:$0xff]
    %v797 = vld [vmem:[#allocation10 + $0x678] sm:$0xf]
    %v798 = vld [vmem:[#allocation10 + $0x67c] sm:$0xff]
    %v799 = vld [vmem:[#allocation10 + $0x684] sm:$0xff]
    %v800 = vld [vmem:[#allocation10 + $0x68c] sm:$0xf]
    %v801 = vld [vmem:[#allocation10 + $0x690] sm:$0xff]
    %v802 = vld [vmem:[#allocation10 + $0x698] sm:$0xff]
    %v803 = vld [vmem:[#allocation10 + $0x6a0] sm:$0xf]
    %v804 = vld [vmem:[#allocation10 + $0x6a4] sm:$0xff]
    %v805 = vld [vmem:[#allocation10 + $0x6ac] sm:$0xff]
    %v806 = vld [vmem:[#allocation10 + $0x6b4] sm:$0xf]
    %v807 = vld [vmem:[#allocation10 + $0x6b8] sm:$0xff]
    %v808 = vld [vmem:[#allocation10 + $0x6c0] sm:$0xff]
    %v809 = vld [vmem:[#allocation10 + $0x6c8] sm:$0xf]
    %v810 = vld [vmem:[#allocation10 + $0x6cc] sm:$0xff]
    %v811 = vld [vmem:[#allocation10 + $0x6d4] sm:$0xff]
    %v812 = vld [vmem:[#allocation10 + $0x6dc] sm:$0xf]
    %v813 = vld [vmem:[#allocation10 + $0x6e0] sm:$0xff]
    %v814 = vld [vmem:[#allocation10 + $0x6e8] sm:$0xff]
    %v815 = vld [vmem:[#allocation10 + $0x6f0] sm:$0xf]
    %v816 = vld [vmem:[#allocation10 + $0x6f4] sm:$0xff]
    %v817 = vld [vmem:[#allocation10 + $0x6fc] sm:$0xff]
    %v818 = vld [vmem:[#allocation10 + $0x704] sm:$0xf]
    %v819 = vld [vmem:[#allocation10 + $0x708] sm:$0xff]
    %v820 = vld [vmem:[#allocation10 + $0x710] sm:$0xff]
    %v821 = vld [vmem:[#allocation10 + $0x718] sm:$0xf]
    %v822 = vld [vmem:[#allocation10 + $0x71c] sm:$0xff]
    %v823 = vld [vmem:[#allocation10 + $0x724] sm:$0xff]
    %v824 = vld [vmem:[#allocation10 + $0x72c] sm:$0xf]
    %v825 = vld [vmem:[#allocation10 + $0x730] sm:$0xff]
    %v826 = vld [vmem:[#allocation10 + $0x738] sm:$0xff]
    %v827 = vld [vmem:[#allocation10 + $0x740] sm:$0xf]
    %v828 = vld [vmem:[#allocation10 + $0x744] sm:$0xff]
    %v829 = vld [vmem:[#allocation10 + $0x74c] sm:$0xff]
    %v830 = vld [vmem:[#allocation10 + $0x754] sm:$0xf]
    %v831 = vld [vmem:[#allocation10 + $0x758] sm:$0xff]
    %v832 = vld [vmem:[#allocation10 + $0x760] sm:$0xff]
    %v833 = vld [vmem:[#allocation10 + $0x768] sm:$0xf]
    %v834 = vld [vmem:[#allocation10 + $0x76c] sm:$0xff]
    %v835 = vld [vmem:[#allocation10 + $0x774] sm:$0xff]
    %v836 = vld [vmem:[#allocation10 + $0x77c] sm:$0xf]
    %v837 = vld [vmem:[#allocation10 + $0x780] sm:$0xff]
    %v838 = vld [vmem:[#allocation10 + $0x788] sm:$0xff]
    %v839 = vld [vmem:[#allocation10 + $0x790] sm:$0xf]
    %v840 = vld [vmem:[#allocation10 + $0x794] sm:$0xff]
    %v841 = vld [vmem:[#allocation10 + $0x79c] sm:$0xff]
    %v842 = vld [vmem:[#allocation10 + $0x7a4] sm:$0xf]
    %v843 = vld [vmem:[#allocation10 + $0x7a8] sm:$0xff]
    %v844 = vld [vmem:[#allocation10 + $0x7b0] sm:$0xff]
    %v845 = vld [vmem:[#allocation10 + $0x7b8] sm:$0xf]
    %v846 = vld [vmem:[#allocation10 + $0x7bc] sm:$0xff]
    %v847 = vld [vmem:[#allocation10 + $0x7c4] sm:$0xff]
    %v848 = vld [vmem:[#allocation10 + $0x7cc] sm:$0xf]
    %v849 = vld [vmem:[#allocation10 + $0x7d0] sm:$0xff]
    %v850 = vld [vmem:[#allocation10 + $0x7d8] sm:$0xff]
    %v851 = vld [vmem:[#allocation10 + $0x7e0] sm:$0xf]
    %v852 = vld [vmem:[#allocation10 + $0x7e4] sm:$0xff]
    %v853 = vld [vmem:[#allocation10 + $0x7ec] sm:$0xff]
    %v854 = vld [vmem:[#allocation10 + $0x7f4] sm:$0xf]
    %v855 = vld [vmem:[#allocation10 + $0x7f8] sm:$0xff]
    %v856 = vld [vmem:[#allocation10 + $0x800] sm:$0xff]
    %v857 = vld [vmem:[#allocation10 + $0x808] sm:$0xf]
    %v858 = vld [vmem:[#allocation10 + $0x80c] sm:$0xff]
    %v859 = vld [vmem:[#allocation10 + $0x814] sm:$0xff]
    %v860 = vld [vmem:[#allocation10 + $0x81c] sm:$0xf]
    %v861 = vld [vmem:[#allocation10 + $0x820] sm:$0xff]
    %v862 = vld [vmem:[#allocation10 + $0x828] sm:$0xff]
    %v863 = vld [vmem:[#allocation10 + $0x830] sm:$0xf]
    %v864 = vld [vmem:[#allocation10 + $0x834] sm:$0xff]
    %v865 = vld [vmem:[#allocation10 + $0x83c] sm:$0xff]
    %v866 = vld [vmem:[#allocation10 + $0x844] sm:$0xf]
    %v867 = vld [vmem:[#allocation10 + $0x848] sm:$0xff]
    %v868 = vld [vmem:[#allocation10 + $0x850] sm:$0xff]
    %v869 = vld [vmem:[#allocation10 + $0x858] sm:$0xf]
    %v870 = vld [vmem:[#allocation10 + $0x85c] sm:$0xff]
    %v871 = vld [vmem:[#allocation10 + $0x864] sm:$0xff]
    %v872 = vld [vmem:[#allocation10 + $0x86c] sm:$0xf]
    %v873 = vld [vmem:[#allocation10 + $0x870] sm:$0xff]
    %v874 = vld [vmem:[#allocation10 + $0x878] sm:$0xff]
    %v875 = vld [vmem:[#allocation10 + $0x880] sm:$0xf]
    %v876 = vld [vmem:[#allocation10 + $0x884] sm:$0xff]
    %v877 = vld [vmem:[#allocation10 + $0x88c] sm:$0xff]
    %v878 = vld [vmem:[#allocation10 + $0x894] sm:$0xf]
    %v879 = vld [vmem:[#allocation10 + $0x898] sm:$0xff]
    %v880 = vld [vmem:[#allocation10 + $0x8a0] sm:$0xff]
    %v881 = vld [vmem:[#allocation10 + $0x8a8] sm:$0xf]
    %v882 = vld [vmem:[#allocation10 + $0x8ac] sm:$0xff]
    %v883 = vld [vmem:[#allocation10 + $0x8b4] sm:$0xff]
    %v884 = vld [vmem:[#allocation10 + $0x8bc] sm:$0xf]
    %v885 = vld [vmem:[#allocation10 + $0x8c0] sm:$0xff]
    %v886 = vld [vmem:[#allocation10 + $0x8c8] sm:$0xff]
    %v887 = vld [vmem:[#allocation10 + $0x8d0] sm:$0xf]
    %v888 = vld [vmem:[#allocation10 + $0x8d4] sm:$0xff]
    %v889 = vld [vmem:[#allocation10 + $0x8dc] sm:$0xff]
    %v890 = vld [vmem:[#allocation10 + $0x8e4] sm:$0xf]
    %v891 = vld [vmem:[#allocation10 + $0x8e8] sm:$0xff]
    %v892 = vld [vmem:[#allocation10 + $0x8f0] sm:$0xff]
    %v893 = vld [vmem:[#allocation10 + $0x8f8] sm:$0xf]
    %v894 = vld [vmem:[#allocation10 + $0x8fc] sm:$0xff]
    %v895 = vld [vmem:[#allocation10 + $0x904] sm:$0xff]
    %v896 = vld [vmem:[#allocation10 + $0x90c] sm:$0xf]
    %v897 = vld [vmem:[#allocation10 + $0x910] sm:$0xff]
    %v898 = vld [vmem:[#allocation10 + $0x918] sm:$0xff]
    %v899 = vld [vmem:[#allocation10 + $0x920] sm:$0xf]
    %v900 = vld [vmem:[#allocation10 + $0x924] sm:$0xff]
    %v901 = vld [vmem:[#allocation10 + $0x92c] sm:$0xff]
    %v902 = vld [vmem:[#allocation10 + $0x934] sm:$0xf]
    %v903 = vld [vmem:[#allocation10 + $0x938] sm:$0xff]
    %v904 = vld [vmem:[#allocation10 + $0x940] sm:$0xff]
    %v905 = vld [vmem:[#allocation10 + $0x948] sm:$0xf]
    %v906 = vld [vmem:[#allocation10 + $0x94c] sm:$0xff]
    %v907 = vld [vmem:[#allocation10 + $0x954] sm:$0xff]
    %v908 = vld [vmem:[#allocation10 + $0x95c] sm:$0xf]
    %v909 = vld [vmem:[#allocation10 + $0x960] sm:$0xff]
    %v910 = vld [vmem:[#allocation10 + $0x968] sm:$0xff]
    %v911 = vld [vmem:[#allocation10 + $0x970] sm:$0xf]
    %v912 = vld [vmem:[#allocation10 + $0x974] sm:$0xff]
    %v913 = vld [vmem:[#allocation10 + $0x97c] sm:$0xff]
    %v914 = vld [vmem:[#allocation10 + $0x984] sm:$0xf]
    %v915 = vld [vmem:[#allocation10 + $0x988] sm:$0xff]
    %v916 = vld [vmem:[#allocation10 + $0x990] sm:$0xff]
    %v917 = vld [vmem:[#allocation10 + $0x998] sm:$0xf]
    %v918 = vld [vmem:[#allocation10 + $0x99c] sm:$0xff]
    %v919 = vld [vmem:[#allocation10 + $0x9a4] sm:$0xff]
    %v920 = vld [vmem:[#allocation10 + $0x9ac] sm:$0xf]
    %v921 = vld [vmem:[#allocation10 + $0x9b0] sm:$0xff]
    %v922 = vld [vmem:[#allocation10 + $0x9b8] sm:$0xff]
    %v923 = vld [vmem:[#allocation10 + $0x9c0] sm:$0xf]
    %v924 = vld [vmem:[#allocation10 + $0x9c4] sm:$0xff]
    %v925 = vld [vmem:[#allocation10 + $0x9cc] sm:$0xff]
    %v926 = vld [vmem:[#allocation10 + $0x9d4] sm:$0xf]
    %v927 = vld [vmem:[#allocation10 + $0x9d8] sm:$0xff]
    %v928 = vld [vmem:[#allocation10 + $0x9e0] sm:$0xff]
    %v929 = vld [vmem:[#allocation10 + $0x9e8] sm:$0xf]
    %v930 = vld [vmem:[#allocation10 + $0x9ec] sm:$0xff]
    %v931 = vld [vmem:[#allocation10 + $0x9f4] sm:$0xff]
    %v932 = vld [vmem:[#allocation10 + $0x9fc] sm:$0xf]
    %v933 = vld [vmem:[#allocation10 + $0xa00] sm:$0xff]
    %v934 = vld [vmem:[#allocation10 + $0xa08] sm:$0xff]
    %v935 = vld [vmem:[#allocation10 + $0xa10] sm:$0xf]
    %v936 = vld [vmem:[#allocation10 + $0xa14] sm:$0xff]
    %v937 = vld [vmem:[#allocation10 + $0xa1c] sm:$0xff]
    %v938 = vld [vmem:[#allocation10 + $0xa24] sm:$0xf]
    %v939 = vld [vmem:[#allocation10 + $0xa28] sm:$0xff]
    %v940 = vld [vmem:[#allocation10 + $0xa30] sm:$0xff]
    %v941 = vld [vmem:[#allocation10 + $0xa38] sm:$0xf]
    %v942 = vld [vmem:[#allocation10 + $0xa3c] sm:$0xff]
    %v943 = vld [vmem:[#allocation10 + $0xa44] sm:$0xff]
    %v944 = vld [vmem:[#allocation10 + $0xa4c] sm:$0xf]
    %v945 = vld [vmem:[#allocation10 + $0xa50] sm:$0xff]
    %v946 = vld [vmem:[#allocation10 + $0xa58] sm:$0xff]
    %v947 = vld [vmem:[#allocation10 + $0xa60] sm:$0xf]
    %v948 = vld [vmem:[#allocation10 + $0xa64] sm:$0xff]
    %v949 = vld [vmem:[#allocation10 + $0xa6c] sm:$0xff]
    %v950 = vld [vmem:[#allocation10 + $0xa74] sm:$0xf]
    %v951 = vld [vmem:[#allocation10 + $0xa78] sm:$0xff]
    %v952 = vld [vmem:[#allocation10 + $0xa80] sm:$0xff]
    %v953 = vld [vmem:[#allocation10 + $0xa88] sm:$0xf]
    %v954 = vld [vmem:[#allocation10 + $0xa8c] sm:$0xff]
    %v955 = vld [vmem:[#allocation10 + $0xa94] sm:$0xff]
    %v956 = vld [vmem:[#allocation10 + $0xa9c] sm:$0xf]
    %v957 = vld [vmem:[#allocation10 + $0xaa0] sm:$0xff]
    %v958 = vld [vmem:[#allocation10 + $0xaa8] sm:$0xff]
    %v959 = vld [vmem:[#allocation10 + $0xab0] sm:$0xf]
    %v960 = vld [vmem:[#allocation10 + $0xab4] sm:$0xff]
    %v961 = vld [vmem:[#allocation10 + $0xabc] sm:$0xff]
    %v962 = vld [vmem:[#allocation10 + $0xac4] sm:$0xf]
    %v963 = vld [vmem:[#allocation10 + $0xac8] sm:$0xff]
    %v964 = vld [vmem:[#allocation10 + $0xad0] sm:$0xff]
    %v965 = vld [vmem:[#allocation10 + $0xad8] sm:$0xf]
    %v966 = vld [vmem:[#allocation10 + $0xadc] sm:$0xff]
    %v967 = vld [vmem:[#allocation10 + $0xae4] sm:$0xff]
    %v968 = vld [vmem:[#allocation10 + $0xaec] sm:$0xf]
    %v969 = vld [vmem:[#allocation10 + $0xaf0] sm:$0xff]
    %v970 = vld [vmem:[#allocation10 + $0xaf8] sm:$0xff]
    %v971 = vld [vmem:[#allocation10 + $0xb00] sm:$0xf]
    %v972 = vld [vmem:[#allocation10 + $0xb04] sm:$0xff]
    %v973 = vld [vmem:[#allocation10 + $0xb0c] sm:$0xff]
    %v974 = vld [vmem:[#allocation10 + $0xb14] sm:$0xf]
    %v975 = vld [vmem:[#allocation10 + $0xb18] sm:$0xff]
    %v976 = vld [vmem:[#allocation10 + $0xb20] sm:$0xff]
    %v977 = vld [vmem:[#allocation10 + $0xb28] sm:$0xf]
    %v978 = vld [vmem:[#allocation10 + $0xb2c] sm:$0xff]
    %v979 = vld [vmem:[#allocation10 + $0xb34] sm:$0xff]
    %v980 = vld [vmem:[#allocation10 + $0xb3c] sm:$0xf]
    %v981 = vld [vmem:[#allocation10 + $0xb40] sm:$0xff]
    %v982 = vld [vmem:[#allocation10 + $0xb48] sm:$0xff]
    %v983 = vld [vmem:[#allocation10 + $0xb50] sm:$0xf]
    %v984 = vld [vmem:[#allocation10 + $0xb54] sm:$0xff]
    %v985 = vld [vmem:[#allocation10 + $0xb5c] sm:$0xff]
    %v986 = vld [vmem:[#allocation10 + $0xb64] sm:$0xf]
    %v987 = vld [vmem:[#allocation10 + $0xb68] sm:$0xff]
    %v988 = vld [vmem:[#allocation10 + $0xb70] sm:$0xff]
    %v989 = vld [vmem:[#allocation10 + $0xb78] sm:$0xf]
    %v990 = vld [vmem:[#allocation10 + $0xb7c] sm:$0xff]
    %v991 = vld [vmem:[#allocation10 + $0xb84] sm:$0xff]
    %v992 = vld [vmem:[#allocation10 + $0xb8c] sm:$0xf]
    %v993 = vld [vmem:[#allocation10 + $0xb90] sm:$0xff]
    %v994 = vld [vmem:[#allocation10 + $0xb98] sm:$0xff]
    %v995 = vld [vmem:[#allocation10 + $0xba0] sm:$0xf]
    %v996 = vld [vmem:[#allocation10 + $0xba4] sm:$0xff]
    %v997 = vld [vmem:[#allocation10 + $0xbac] sm:$0xff]
    %v998 = vld [vmem:[#allocation10 + $0xbb4] sm:$0xf]
    %v999 = vld [vmem:[#allocation10 + $0xbb8] sm:$0xff]
    %v1000 = vld [vmem:[#allocation10 + $0xbc0] sm:$0xff]
    %v1001 = vld [vmem:[#allocation10 + $0xbc8] sm:$0xf]
    %v1002 = vld [vmem:[#allocation10 + $0xbcc] sm:$0xff]
    %v1003 = vld [vmem:[#allocation10 + $0xbd4] sm:$0xff]
    %v1004 = vld [vmem:[#allocation10 + $0xbdc] sm:$0xf]
    %v1005 = vld [vmem:[#allocation10 + $0xbe0] sm:$0xff]
    %v1006 = vld [vmem:[#allocation10 + $0xbe8] sm:$0xff]
    %v1007 = vld [vmem:[#allocation10 + $0xbf0] sm:$0xf]
    %v1008 = vld [vmem:[#allocation10 + $0xbf4] sm:$0xff]
    %v1009 = vld [vmem:[#allocation10 + $0xbfc] sm:$0xff]
    %v1010 = vld [vmem:[#allocation10 + $0xc04] sm:$0xf]
    %v1011 = vld [vmem:[#allocation10 + $0xc08] sm:$0xff]
    %v1012 = vld [vmem:[#allocation10 + $0xc10] sm:$0xff]
    %v1013 = vld [vmem:[#allocation10 + $0xc18] sm:$0xf]
    %v1014 = vld [vmem:[#allocation10 + $0xc1c] sm:$0xff]
    %v1015 = vld [vmem:[#allocation10 + $0xc24] sm:$0xff]
    %v1016 = vld [vmem:[#allocation10 + $0xc2c] sm:$0xf]
    %v1017 = vld [vmem:[#allocation10 + $0xc30] sm:$0xff]
    %v1018 = vld [vmem:[#allocation10 + $0xc38] sm:$0xff]
    %v1019 = vld [vmem:[#allocation10 + $0xc40] sm:$0xf]
    %v1020 = vld [vmem:[#allocation10 + $0xc44] sm:$0xff]
    %v1021 = vld [vmem:[#allocation10 + $0xc4c] sm:$0xff]
    %v1022 = vld [vmem:[#allocation10 + $0xc54] sm:$0xf]
    %v1023 = vld [vmem:[#allocation10 + $0xc58] sm:$0xff]
    %v1024 = vld [vmem:[#allocation10 + $0xc60] sm:$0xff]
    %v1025 = vld [vmem:[#allocation10 + $0xc68] sm:$0xf]
    %v1026 = vld [vmem:[#allocation10 + $0xc6c] sm:$0xff]
    %v1027 = vld [vmem:[#allocation10 + $0xc74] sm:$0xff]
    %v1028 = vld [vmem:[#allocation10 + $0xc7c] sm:$0xf]
    %v1029 = vld [vmem:[#allocation11] sm:$0x1f]
    %v1031 = vlaneseq
    %v1032 = vshrl.u32 %v1031, 7
    %v1033 = vsub.s32 0, %v1032
    %v1034 = vrot.slane %v1029, %v1033
    %v1035 = vlaneseq
    %v1036 = vshrl.u32 %v1035, 7
    %v1037 = vsub.s32 1, %v1036
    %v1038 = vrot.slane %v1029, %v1037
    %v1039 = vlaneseq
    %v1040 = vshrl.u32 %v1039, 7
    %v1041 = vsub.s32 2, %v1040
    %v1042 = vrot.slane %v1029, %v1041
    %v1043 = vlaneseq
    %v1044 = vshrl.u32 %v1043, 7
    %v1045 = vsub.s32 3, %v1044
    %v1046 = vrot.slane %v1029, %v1045
    %v1047 = vlaneseq
    %v1048 = vshrl.u32 %v1047, 7
    %v1049 = vsub.s32 4, %v1048
    %v1050 = vrot.slane %v1029, %v1049
    %v1536 = vunpack.c.l.b16 %v549
    %v1537 = vunpack.c.h.b16 %v549
    %v1538 = vunpack.c.l.b16 %v550
    %v1539 = vunpack.c.h.b16 %v550
    %v1540 = vunpack.c.l.b16 %v551
    %v1541 = vunpack.c.l.b16 %v552
    %v1542 = vunpack.c.h.b16 %v552
    %v1543 = vunpack.c.l.b16 %v553
    %v1544 = vunpack.c.h.b16 %v553
    %v1545 = vunpack.c.l.b16 %v554
    %v1546 = vunpack.c.l.b16 %v555
    %v1547 = vunpack.c.h.b16 %v555
    %v1548 = vunpack.c.l.b16 %v556
    %v1549 = vunpack.c.h.b16 %v556
    %v1550 = vunpack.c.l.b16 %v557
    %v1551 = vunpack.c.l.b16 %v558
    %v1552 = vunpack.c.h.b16 %v558
    %v1553 = vunpack.c.l.b16 %v559
    %v1554 = vunpack.c.h.b16 %v559
    %v1555 = vunpack.c.l.b16 %v560
    %v1556 = vunpack.c.l.b16 %v561
    %v1557 = vunpack.c.h.b16 %v561
    %v1558 = vunpack.c.l.b16 %v562
    %v1559 = vunpack.c.h.b16 %v562
    %v1560 = vunpack.c.l.b16 %v563
    %v1561 = vunpack.c.l.b16 %v564
    %v1562 = vunpack.c.h.b16 %v564
    %v1563 = vunpack.c.l.b16 %v565
    %v1564 = vunpack.c.h.b16 %v565
    %v1565 = vunpack.c.l.b16 %v566
    %v1566 = vunpack.c.l.b16 %v567
    %v1567 = vunpack.c.h.b16 %v567
    %v1568 = vunpack.c.l.b16 %v568
    %v1569 = vunpack.c.h.b16 %v568
    %v1570 = vunpack.c.l.b16 %v569
    %v1571 = vunpack.c.l.b16 %v570
    %v1572 = vunpack.c.h.b16 %v570
    %v1573 = vunpack.c.l.b16 %v571
    %v1574 = vunpack.c.h.b16 %v571
    %v1575 = vunpack.c.l.b16 %v572
    %v1576 = vunpack.c.l.b16 %v573
    %v1577 = vunpack.c.h.b16 %v573
    %v1578 = vunpack.c.l.b16 %v574
    %v1579 = vunpack.c.h.b16 %v574
    %v1580 = vunpack.c.l.b16 %v575
    %v1581 = vunpack.c.l.b16 %v576
    %v1582 = vunpack.c.h.b16 %v576
    %v1583 = vunpack.c.l.b16 %v577
    %v1584 = vunpack.c.h.b16 %v577
    %v1585 = vunpack.c.l.b16 %v578
    %v1586 = vunpack.c.l.b16 %v579
    %v1587 = vunpack.c.h.b16 %v579
    %v1588 = vunpack.c.l.b16 %v580
    %v1589 = vunpack.c.h.b16 %v580
    %v1590 = vunpack.c.l.b16 %v581
    %v1591 = vunpack.c.l.b16 %v582
    %v1592 = vunpack.c.h.b16 %v582
    %v1593 = vunpack.c.l.b16 %v583
    %v1594 = vunpack.c.h.b16 %v583
    %v1595 = vunpack.c.l.b16 %v584
    %v1596 = vunpack.c.l.b16 %v585
    %v1597 = vunpack.c.h.b16 %v585
    %v1598 = vunpack.c.l.b16 %v586
    %v1599 = vunpack.c.h.b16 %v586
    %v1600 = vunpack.c.l.b16 %v587
    %v1601 = vunpack.c.l.b16 %v588
    %v1602 = vunpack.c.h.b16 %v588
    %v1603 = vunpack.c.l.b16 %v589
    %v1604 = vunpack.c.h.b16 %v589
    %v1605 = vunpack.c.l.b16 %v590
    %v1606 = vunpack.c.l.b16 %v591
    %v1607 = vunpack.c.h.b16 %v591
    %v1608 = vunpack.c.l.b16 %v592
    %v1609 = vunpack.c.h.b16 %v592
    %v1610 = vunpack.c.l.b16 %v593
    %v1611 = vunpack.c.l.b16 %v594
    %v1612 = vunpack.c.h.b16 %v594
    %v1613 = vunpack.c.l.b16 %v595
    %v1614 = vunpack.c.h.b16 %v595
    %v1615 = vunpack.c.l.b16 %v596
    %v1616 = vunpack.c.l.b16 %v597
    %v1617 = vunpack.c.h.b16 %v597
    %v1618 = vunpack.c.l.b16 %v598
    %v1619 = vunpack.c.h.b16 %v598
    %v1620 = vunpack.c.l.b16 %v599
    %v1621 = vunpack.c.l.b16 %v600
    %v1622 = vunpack.c.h.b16 %v600
    %v1623 = vunpack.c.l.b16 %v601
    %v1624 = vunpack.c.h.b16 %v601
    %v1625 = vunpack.c.l.b16 %v602
    %v1626 = vunpack.c.l.b16 %v603
    %v1627 = vunpack.c.h.b16 %v603
    %v1628 = vunpack.c.l.b16 %v604
    %v1629 = vunpack.c.h.b16 %v604
    %v1630 = vunpack.c.l.b16 %v605
    %v1631 = vunpack.c.l.b16 %v606
    %v1632 = vunpack.c.h.b16 %v606
    %v1633 = vunpack.c.l.b16 %v607
    %v1634 = vunpack.c.h.b16 %v607
    %v1635 = vunpack.c.l.b16 %v608
    %v1636 = vunpack.c.l.b16 %v609
    %v1637 = vunpack.c.h.b16 %v609
    %v1638 = vunpack.c.l.b16 %v610
    %v1639 = vunpack.c.h.b16 %v610
    %v1640 = vunpack.c.l.b16 %v611
    %v1641 = vunpack.c.l.b16 %v612
    %v1642 = vunpack.c.h.b16 %v612
    %v1643 = vunpack.c.l.b16 %v613
    %v1644 = vunpack.c.h.b16 %v613
    %v1645 = vunpack.c.l.b16 %v614
    %v1646 = vunpack.c.l.b16 %v615
    %v1647 = vunpack.c.h.b16 %v615
    %v1648 = vunpack.c.l.b16 %v616
    %v1649 = vunpack.c.h.b16 %v616
    %v1650 = vunpack.c.l.b16 %v617
    %v1651 = vunpack.c.l.b16 %v618
    %v1652 = vunpack.c.h.b16 %v618
    %v1653 = vunpack.c.l.b16 %v619
    %v1654 = vunpack.c.h.b16 %v619
    %v1655 = vunpack.c.l.b16 %v620
    %v1656 = vunpack.c.l.b16 %v621
    %v1657 = vunpack.c.h.b16 %v621
    %v1658 = vunpack.c.l.b16 %v622
    %v1659 = vunpack.c.h.b16 %v622
    %v1660 = vunpack.c.l.b16 %v623
    %v1661 = vunpack.c.l.b16 %v624
    %v1662 = vunpack.c.h.b16 %v624
    %v1663 = vunpack.c.l.b16 %v625
    %v1664 = vunpack.c.h.b16 %v625
    %v1665 = vunpack.c.l.b16 %v626
    %v1666 = vunpack.c.l.b16 %v627
    %v1667 = vunpack.c.h.b16 %v627
    %v1668 = vunpack.c.l.b16 %v628
    %v1669 = vunpack.c.h.b16 %v628
    %v1670 = vunpack.c.l.b16 %v629
    %v1671 = vunpack.c.l.b16 %v630
    %v1672 = vunpack.c.h.b16 %v630
    %v1673 = vunpack.c.l.b16 %v631
    %v1674 = vunpack.c.h.b16 %v631
    %v1675 = vunpack.c.l.b16 %v632
    %v1676 = vunpack.c.l.b16 %v633
    %v1677 = vunpack.c.h.b16 %v633
    %v1678 = vunpack.c.l.b16 %v634
    %v1679 = vunpack.c.h.b16 %v634
    %v1680 = vunpack.c.l.b16 %v635
    %v1681 = vunpack.c.l.b16 %v636
    %v1682 = vunpack.c.h.b16 %v636
    %v1683 = vunpack.c.l.b16 %v637
    %v1684 = vunpack.c.h.b16 %v637
    %v1685 = vunpack.c.l.b16 %v638
    %v1686 = vunpack.c.l.b16 %v639
    %v1687 = vunpack.c.h.b16 %v639
    %v1688 = vunpack.c.l.b16 %v640
    %v1689 = vunpack.c.h.b16 %v640
    %v1690 = vunpack.c.l.b16 %v641
    %v1691 = vunpack.c.l.b16 %v642
    %v1692 = vunpack.c.h.b16 %v642
    %v1693 = vunpack.c.l.b16 %v643
    %v1694 = vunpack.c.h.b16 %v643
    %v1695 = vunpack.c.l.b16 %v644
    %v1696 = vunpack.c.l.b16 %v645
    %v1697 = vunpack.c.h.b16 %v645
    %v1698 = vunpack.c.l.b16 %v646
    %v1699 = vunpack.c.h.b16 %v646
    %v1700 = vunpack.c.l.b16 %v647
    %v1701 = vunpack.c.l.b16 %v648
    %v1702 = vunpack.c.h.b16 %v648
    %v1703 = vunpack.c.l.b16 %v649
    %v1704 = vunpack.c.h.b16 %v649
    %v1705 = vunpack.c.l.b16 %v650
    %v1706 = vunpack.c.l.b16 %v651
    %v1707 = vunpack.c.h.b16 %v651
    %v1708 = vunpack.c.l.b16 %v652
    %v1709 = vunpack.c.h.b16 %v652
    %v1710 = vunpack.c.l.b16 %v653
    %v1711 = vunpack.c.l.b16 %v654
    %v1712 = vunpack.c.h.b16 %v654
    %v1713 = vunpack.c.l.b16 %v655
    %v1714 = vunpack.c.h.b16 %v655
    %v1715 = vunpack.c.l.b16 %v656
    %v1716 = vunpack.c.l.b16 %v657
    %v1717 = vunpack.c.h.b16 %v657
    %v1718 = vunpack.c.l.b16 %v658
    %v1719 = vunpack.c.h.b16 %v658
    %v1720 = vunpack.c.l.b16 %v659
    %v1721 = vunpack.c.l.b16 %v660
    %v1722 = vunpack.c.h.b16 %v660
    %v1723 = vunpack.c.l.b16 %v661
    %v1724 = vunpack.c.h.b16 %v661
    %v1725 = vunpack.c.l.b16 %v662
    %v1726 = vunpack.c.l.b16 %v663
    %v1727 = vunpack.c.h.b16 %v663
    %v1728 = vunpack.c.l.b16 %v664
    %v1729 = vunpack.c.h.b16 %v664
    %v1730 = vunpack.c.l.b16 %v665
    %v1731 = vunpack.c.l.b16 %v666
    %v1732 = vunpack.c.h.b16 %v666
    %v1733 = vunpack.c.l.b16 %v667
    %v1734 = vunpack.c.h.b16 %v667
    %v1735 = vunpack.c.l.b16 %v668
    %v1736 = vunpack.c.l.b16 %v669
    %v1737 = vunpack.c.h.b16 %v669
    %v1738 = vunpack.c.l.b16 %v670
    %v1739 = vunpack.c.h.b16 %v670
    %v1740 = vunpack.c.l.b16 %v671
    %v1741 = vunpack.c.l.b16 %v672
    %v1742 = vunpack.c.h.b16 %v672
    %v1743 = vunpack.c.l.b16 %v673
    %v1744 = vunpack.c.h.b16 %v673
    %v1745 = vunpack.c.l.b16 %v674
    %v1746 = vunpack.c.l.b16 %v675
    %v1747 = vunpack.c.h.b16 %v675
    %v1748 = vunpack.c.l.b16 %v676
    %v1749 = vunpack.c.h.b16 %v676
    %v1750 = vunpack.c.l.b16 %v677
    %v1751 = vunpack.c.l.b16 %v678
    %v1752 = vunpack.c.h.b16 %v678
    %v1753 = vunpack.c.l.b16 %v679
    %v1754 = vunpack.c.h.b16 %v679
    %v1755 = vunpack.c.l.b16 %v680
    %v1756 = vunpack.c.l.b16 %v681
    %v1757 = vunpack.c.h.b16 %v681
    %v1758 = vunpack.c.l.b16 %v682
    %v1759 = vunpack.c.h.b16 %v682
    %v1760 = vunpack.c.l.b16 %v683
    %v1761 = vunpack.c.l.b16 %v684
    %v1762 = vunpack.c.h.b16 %v684
    %v1763 = vunpack.c.l.b16 %v685
    %v1764 = vunpack.c.h.b16 %v685
    %v1765 = vunpack.c.l.b16 %v686
    %v1766 = vunpack.c.l.b16 %v687
    %v1767 = vunpack.c.h.b16 %v687
    %v1768 = vunpack.c.l.b16 %v688
    %v1769 = vunpack.c.h.b16 %v688
    %v1770 = vunpack.c.l.b16 %v689
    %v1771 = vunpack.c.l.b16 %v690
    %v1772 = vunpack.c.h.b16 %v690
    %v1773 = vunpack.c.l.b16 %v691
    %v1774 = vunpack.c.h.b16 %v691
    %v1775 = vunpack.c.l.b16 %v692
    %v1776 = vunpack.c.l.b16 %v693
    %v1777 = vunpack.c.h.b16 %v693
    %v1778 = vunpack.c.l.b16 %v694
    %v1779 = vunpack.c.h.b16 %v694
    %v1780 = vunpack.c.l.b16 %v695
    %v1781 = vunpack.c.l.b16 %v696
    %v1782 = vunpack.c.h.b16 %v696
    %v1783 = vunpack.c.l.b16 %v697
    %v1784 = vunpack.c.h.b16 %v697
    %v1785 = vunpack.c.l.b16 %v698
    %v1786 = vunpack.c.l.b16 %v699
    %v1787 = vunpack.c.h.b16 %v699
    %v1788 = vunpack.c.l.b16 %v700
    %v1789 = vunpack.c.h.b16 %v700
    %v1790 = vunpack.c.l.b16 %v701
    %v1791 = vunpack.c.l.b16 %v702
    %v1792 = vunpack.c.h.b16 %v702
    %v1793 = vunpack.c.l.b16 %v703
    %v1794 = vunpack.c.h.b16 %v703
    %v1795 = vunpack.c.l.b16 %v704
    %v1796 = vunpack.c.l.b16 %v705
    %v1797 = vunpack.c.h.b16 %v705
    %v1798 = vunpack.c.l.b16 %v706
    %v1799 = vunpack.c.h.b16 %v706
    %v1800 = vunpack.c.l.b16 %v707
    %v1801 = vunpack.c.l.b16 %v708
    %v1802 = vunpack.c.h.b16 %v708
    %v1803 = vunpack.c.l.b16 %v709
    %v1804 = vunpack.c.h.b16 %v709
    %v1805 = vunpack.c.l.b16 %v710
    %v1806 = vunpack.c.l.b16 %v711
    %v1807 = vunpack.c.h.b16 %v711
    %v1808 = vunpack.c.l.b16 %v712
    %v1809 = vunpack.c.h.b16 %v712
    %v1810 = vunpack.c.l.b16 %v713
    %v1811 = vunpack.c.l.b16 %v714
    %v1812 = vunpack.c.h.b16 %v714
    %v1813 = vunpack.c.l.b16 %v715
    %v1814 = vunpack.c.h.b16 %v715
    %v1815 = vunpack.c.l.b16 %v716
    %v1816 = vunpack.c.l.b16 %v717
    %v1817 = vunpack.c.h.b16 %v717
    %v1818 = vunpack.c.l.b16 %v718
    %v1819 = vunpack.c.h.b16 %v718
    %v1820 = vunpack.c.l.b16 %v719
    %v1821 = vunpack.c.l.b16 %v720
    %v1822 = vunpack.c.h.b16 %v720
    %v1823 = vunpack.c.l.b16 %v721
    %v1824 = vunpack.c.h.b16 %v721
    %v1825 = vunpack.c.l.b16 %v722
    %v1826 = vunpack.c.l.b16 %v723
    %v1827 = vunpack.c.h.b16 %v723
    %v1828 = vunpack.c.l.b16 %v724
    %v1829 = vunpack.c.h.b16 %v724
    %v1830 = vunpack.c.l.b16 %v725
    %v1831 = vunpack.c.l.b16 %v726
    %v1832 = vunpack.c.h.b16 %v726
    %v1833 = vunpack.c.l.b16 %v727
    %v1834 = vunpack.c.h.b16 %v727
    %v1835 = vunpack.c.l.b16 %v728
    %v1836 = vunpack.c.l.b16 %v729
    %v1837 = vunpack.c.h.b16 %v729
    %v1838 = vunpack.c.l.b16 %v730
    %v1839 = vunpack.c.h.b16 %v730
    %v1840 = vunpack.c.l.b16 %v731
    %v1841 = vunpack.c.l.b16 %v732
    %v1842 = vunpack.c.h.b16 %v732
    %v1843 = vunpack.c.l.b16 %v733
    %v1844 = vunpack.c.h.b16 %v733
    %v1845 = vunpack.c.l.b16 %v734
    %v1846 = vunpack.c.l.b16 %v735
    %v1847 = vunpack.c.h.b16 %v735
    %v1848 = vunpack.c.l.b16 %v736
    %v1849 = vunpack.c.h.b16 %v736
    %v1850 = vunpack.c.l.b16 %v737
    %v1851 = vunpack.c.l.b16 %v738
    %v1852 = vunpack.c.h.b16 %v738
    %v1853 = vunpack.c.l.b16 %v739
    %v1854 = vunpack.c.h.b16 %v739
    %v1855 = vunpack.c.l.b16 %v740
    %v1856 = vunpack.c.l.b16 %v741
    %v1857 = vunpack.c.h.b16 %v741
    %v1858 = vunpack.c.l.b16 %v742
    %v1859 = vunpack.c.h.b16 %v742
    %v1860 = vunpack.c.l.b16 %v743
    %v1861 = vunpack.c.l.b16 %v744
    %v1862 = vunpack.c.h.b16 %v744
    %v1863 = vunpack.c.l.b16 %v745
    %v1864 = vunpack.c.h.b16 %v745
    %v1865 = vunpack.c.l.b16 %v746
    %v1866 = vunpack.c.l.b16 %v747
    %v1867 = vunpack.c.h.b16 %v747
    %v1868 = vunpack.c.l.b16 %v748
    %v1869 = vunpack.c.h.b16 %v748
    %v1870 = vunpack.c.l.b16 %v749
    %v1871 = vunpack.c.l.b16 %v750
    %v1872 = vunpack.c.h.b16 %v750
    %v1873 = vunpack.c.l.b16 %v751
    %v1874 = vunpack.c.h.b16 %v751
    %v1875 = vunpack.c.l.b16 %v752
    %v1876 = vunpack.c.l.b16 %v753
    %v1877 = vunpack.c.h.b16 %v753
    %v1878 = vunpack.c.l.b16 %v754
    %v1879 = vunpack.c.h.b16 %v754
    %v1880 = vunpack.c.l.b16 %v755
    %v1881 = vunpack.c.l.b16 %v756
    %v1882 = vunpack.c.h.b16 %v756
    %v1883 = vunpack.c.l.b16 %v757
    %v1884 = vunpack.c.h.b16 %v757
    %v1885 = vunpack.c.l.b16 %v758
    %v1886 = vunpack.c.l.b16 %v759
    %v1887 = vunpack.c.h.b16 %v759
    %v1888 = vunpack.c.l.b16 %v760
    %v1889 = vunpack.c.h.b16 %v760
    %v1890 = vunpack.c.l.b16 %v761
    %v1891 = vunpack.c.l.b16 %v762
    %v1892 = vunpack.c.h.b16 %v762
    %v1893 = vunpack.c.l.b16 %v763
    %v1894 = vunpack.c.h.b16 %v763
    %v1895 = vunpack.c.l.b16 %v764
    %v1896 = vunpack.c.l.b16 %v765
    %v1897 = vunpack.c.h.b16 %v765
    %v1898 = vunpack.c.l.b16 %v766
    %v1899 = vunpack.c.h.b16 %v766
    %v1900 = vunpack.c.l.b16 %v767
    %v1901 = vunpack.c.l.b16 %v768
    %v1902 = vunpack.c.h.b16 %v768
    %v1903 = vunpack.c.l.b16 %v769
    %v1904 = vunpack.c.h.b16 %v769
    %v1905 = vunpack.c.l.b16 %v770
    %v1906 = vunpack.c.l.b16 %v771
    %v1907 = vunpack.c.h.b16 %v771
    %v1908 = vunpack.c.l.b16 %v772
    %v1909 = vunpack.c.h.b16 %v772
    %v1910 = vunpack.c.l.b16 %v773
    %v1911 = vunpack.c.l.b16 %v774
    %v1912 = vunpack.c.h.b16 %v774
    %v1913 = vunpack.c.l.b16 %v775
    %v1914 = vunpack.c.h.b16 %v775
    %v1915 = vunpack.c.l.b16 %v776
    %v1916 = vunpack.c.l.b16 %v777
    %v1917 = vunpack.c.h.b16 %v777
    %v1918 = vunpack.c.l.b16 %v778
    %v1919 = vunpack.c.h.b16 %v778
    %v1920 = vunpack.c.l.b16 %v779
    %v1921 = vunpack.c.l.b16 %v780
    %v1922 = vunpack.c.h.b16 %v780
    %v1923 = vunpack.c.l.b16 %v781
    %v1924 = vunpack.c.h.b16 %v781
    %v1925 = vunpack.c.l.b16 %v782
    %v1926 = vunpack.c.l.b16 %v783
    %v1927 = vunpack.c.h.b16 %v783
    %v1928 = vunpack.c.l.b16 %v784
    %v1929 = vunpack.c.h.b16 %v784
    %v1930 = vunpack.c.l.b16 %v785
    %v1931 = vunpack.c.l.b16 %v786
    %v1932 = vunpack.c.h.b16 %v786
    %v1933 = vunpack.c.l.b16 %v787
    %v1934 = vunpack.c.h.b16 %v787
    %v1935 = vunpack.c.l.b16 %v788
    %v1936 = vunpack.c.l.b16 %v789
    %v1937 = vunpack.c.h.b16 %v789
    %v1938 = vunpack.c.l.b16 %v790
    %v1939 = vunpack.c.h.b16 %v790
    %v1940 = vunpack.c.l.b16 %v791
    %v1941 = vunpack.c.l.b16 %v792
    %v1942 = vunpack.c.h.b16 %v792
    %v1943 = vunpack.c.l.b16 %v793
    %v1944 = vunpack.c.h.b16 %v793
    %v1945 = vunpack.c.l.b16 %v794
    %v1946 = vunpack.c.l.b16 %v795
    %v1947 = vunpack.c.h.b16 %v795
    %v1948 = vunpack.c.l.b16 %v796
    %v1949 = vunpack.c.h.b16 %v796
    %v1950 = vunpack.c.l.b16 %v797
    %v1951 = vunpack.c.l.b16 %v798
    %v1952 = vunpack.c.h.b16 %v798
    %v1953 = vunpack.c.l.b16 %v799
    %v1954 = vunpack.c.h.b16 %v799
    %v1955 = vunpack.c.l.b16 %v800
    %v1956 = vunpack.c.l.b16 %v801
    %v1957 = vunpack.c.h.b16 %v801
    %v1958 = vunpack.c.l.b16 %v802
    %v1959 = vunpack.c.h.b16 %v802
    %v1960 = vunpack.c.l.b16 %v803
    %v1961 = vunpack.c.l.b16 %v804
    %v1962 = vunpack.c.h.b16 %v804
    %v1963 = vunpack.c.l.b16 %v805
    %v1964 = vunpack.c.h.b16 %v805
    %v1965 = vunpack.c.l.b16 %v806
    %v1966 = vunpack.c.l.b16 %v807
    %v1967 = vunpack.c.h.b16 %v807
    %v1968 = vunpack.c.l.b16 %v808
    %v1969 = vunpack.c.h.b16 %v808
    %v1970 = vunpack.c.l.b16 %v809
    %v1971 = vunpack.c.l.b16 %v810
    %v1972 = vunpack.c.h.b16 %v810
    %v1973 = vunpack.c.l.b16 %v811
    %v1974 = vunpack.c.h.b16 %v811
    %v1975 = vunpack.c.l.b16 %v812
    %v1976 = vunpack.c.l.b16 %v813
    %v1977 = vunpack.c.h.b16 %v813
    %v1978 = vunpack.c.l.b16 %v814
    %v1979 = vunpack.c.h.b16 %v814
    %v1980 = vunpack.c.l.b16 %v815
    %v1981 = vunpack.c.l.b16 %v816
    %v1982 = vunpack.c.h.b16 %v816
    %v1983 = vunpack.c.l.b16 %v817
    %v1984 = vunpack.c.h.b16 %v817
    %v1985 = vunpack.c.l.b16 %v818
    %v1986 = vunpack.c.l.b16 %v819
    %v1987 = vunpack.c.h.b16 %v819
    %v1988 = vunpack.c.l.b16 %v820
    %v1989 = vunpack.c.h.b16 %v820
    %v1990 = vunpack.c.l.b16 %v821
    %v1991 = vunpack.c.l.b16 %v822
    %v1992 = vunpack.c.h.b16 %v822
    %v1993 = vunpack.c.l.b16 %v823
    %v1994 = vunpack.c.h.b16 %v823
    %v1995 = vunpack.c.l.b16 %v824
    %v1996 = vunpack.c.l.b16 %v825
    %v1997 = vunpack.c.h.b16 %v825
    %v1998 = vunpack.c.l.b16 %v826
    %v1999 = vunpack.c.h.b16 %v826
    %v2000 = vunpack.c.l.b16 %v827
    %v2001 = vunpack.c.l.b16 %v828
    %v2002 = vunpack.c.h.b16 %v828
    %v2003 = vunpack.c.l.b16 %v829
    %v2004 = vunpack.c.h.b16 %v829
    %v2005 = vunpack.c.l.b16 %v830
    %v2006 = vunpack.c.l.b16 %v831
    %v2007 = vunpack.c.h.b16 %v831
    %v2008 = vunpack.c.l.b16 %v832
    %v2009 = vunpack.c.h.b16 %v832
    %v2010 = vunpack.c.l.b16 %v833
    %v2011 = vunpack.c.l.b16 %v834
    %v2012 = vunpack.c.h.b16 %v834
    %v2013 = vunpack.c.l.b16 %v835
    %v2014 = vunpack.c.h.b16 %v835
    %v2015 = vunpack.c.l.b16 %v836
    %v2016 = vunpack.c.l.b16 %v837
    %v2017 = vunpack.c.h.b16 %v837
    %v2018 = vunpack.c.l.b16 %v838
    %v2019 = vunpack.c.h.b16 %v838
    %v2020 = vunpack.c.l.b16 %v839
    %v2021 = vunpack.c.l.b16 %v840
    %v2022 = vunpack.c.h.b16 %v840
    %v2023 = vunpack.c.l.b16 %v841
    %v2024 = vunpack.c.h.b16 %v841
    %v2025 = vunpack.c.l.b16 %v842
    %v2026 = vunpack.c.l.b16 %v843
    %v2027 = vunpack.c.h.b16 %v843
    %v2028 = vunpack.c.l.b16 %v844
    %v2029 = vunpack.c.h.b16 %v844
    %v2030 = vunpack.c.l.b16 %v845
    %v2031 = vunpack.c.l.b16 %v846
    %v2032 = vunpack.c.h.b16 %v846
    %v2033 = vunpack.c.l.b16 %v847
    %v2034 = vunpack.c.h.b16 %v847
    %v2035 = vunpack.c.l.b16 %v848
    %v2036 = vunpack.c.l.b16 %v849
    %v2037 = vunpack.c.h.b16 %v849
    %v2038 = vunpack.c.l.b16 %v850
    %v2039 = vunpack.c.h.b16 %v850
    %v2040 = vunpack.c.l.b16 %v851
    %v2041 = vunpack.c.l.b16 %v852
    %v2042 = vunpack.c.h.b16 %v852
    %v2043 = vunpack.c.l.b16 %v853
    %v2044 = vunpack.c.h.b16 %v853
    %v2045 = vunpack.c.l.b16 %v854
    %v2046 = vunpack.c.l.b16 %v855
    %v2047 = vunpack.c.h.b16 %v855
    %v2048 = vunpack.c.l.b16 %v856
    %v2049 = vunpack.c.h.b16 %v856
    %v2050 = vunpack.c.l.b16 %v857
    %v2051 = vunpack.c.l.b16 %v858
    %v2052 = vunpack.c.h.b16 %v858
    %v2053 = vunpack.c.l.b16 %v859
    %v2054 = vunpack.c.h.b16 %v859
    %v2055 = vunpack.c.l.b16 %v860
    %v2056 = vunpack.c.l.b16 %v861
    %v2057 = vunpack.c.h.b16 %v861
    %v2058 = vunpack.c.l.b16 %v862
    %v2059 = vunpack.c.h.b16 %v862
    %v2060 = vunpack.c.l.b16 %v863
    %v2061 = vunpack.c.l.b16 %v864
    %v2062 = vunpack.c.h.b16 %v864
    %v2063 = vunpack.c.l.b16 %v865
    %v2064 = vunpack.c.h.b16 %v865
    %v2065 = vunpack.c.l.b16 %v866
    %v2066 = vunpack.c.l.b16 %v867
    %v2067 = vunpack.c.h.b16 %v867
    %v2068 = vunpack.c.l.b16 %v868
    %v2069 = vunpack.c.h.b16 %v868
    %v2070 = vunpack.c.l.b16 %v869
    %v2071 = vunpack.c.l.b16 %v870
    %v2072 = vunpack.c.h.b16 %v870
    %v2073 = vunpack.c.l.b16 %v871
    %v2074 = vunpack.c.h.b16 %v871
    %v2075 = vunpack.c.l.b16 %v872
    %v2076 = vunpack.c.l.b16 %v873
    %v2077 = vunpack.c.h.b16 %v873
    %v2078 = vunpack.c.l.b16 %v874
    %v2079 = vunpack.c.h.b16 %v874
    %v2080 = vunpack.c.l.b16 %v875
    %v2081 = vunpack.c.l.b16 %v876
    %v2082 = vunpack.c.h.b16 %v876
    %v2083 = vunpack.c.l.b16 %v877
    %v2084 = vunpack.c.h.b16 %v877
    %v2085 = vunpack.c.l.b16 %v878
    %v2086 = vunpack.c.l.b16 %v879
    %v2087 = vunpack.c.h.b16 %v879
    %v2088 = vunpack.c.l.b16 %v880
    %v2089 = vunpack.c.h.b16 %v880
    %v2090 = vunpack.c.l.b16 %v881
    %v2091 = vunpack.c.l.b16 %v882
    %v2092 = vunpack.c.h.b16 %v882
    %v2093 = vunpack.c.l.b16 %v883
    %v2094 = vunpack.c.h.b16 %v883
    %v2095 = vunpack.c.l.b16 %v884
    %v2096 = vunpack.c.l.b16 %v885
    %v2097 = vunpack.c.h.b16 %v885
    %v2098 = vunpack.c.l.b16 %v886
    %v2099 = vunpack.c.h.b16 %v886
    %v2100 = vunpack.c.l.b16 %v887
    %v2101 = vunpack.c.l.b16 %v888
    %v2102 = vunpack.c.h.b16 %v888
    %v2103 = vunpack.c.l.b16 %v889
    %v2104 = vunpack.c.h.b16 %v889
    %v2105 = vunpack.c.l.b16 %v890
    %v2106 = vunpack.c.l.b16 %v891
    %v2107 = vunpack.c.h.b16 %v891
    %v2108 = vunpack.c.l.b16 %v892
    %v2109 = vunpack.c.h.b16 %v892
    %v2110 = vunpack.c.l.b16 %v893
    %v2111 = vunpack.c.l.b16 %v894
    %v2112 = vunpack.c.h.b16 %v894
    %v2113 = vunpack.c.l.b16 %v895
    %v2114 = vunpack.c.h.b16 %v895
    %v2115 = vunpack.c.l.b16 %v896
    %v2116 = vunpack.c.l.b16 %v897
    %v2117 = vunpack.c.h.b16 %v897
    %v2118 = vunpack.c.l.b16 %v898
    %v2119 = vunpack.c.h.b16 %v898
    %v2120 = vunpack.c.l.b16 %v899
    %v2121 = vunpack.c.l.b16 %v900
    %v2122 = vunpack.c.h.b16 %v900
    %v2123 = vunpack.c.l.b16 %v901
    %v2124 = vunpack.c.h.b16 %v901
    %v2125 = vunpack.c.l.b16 %v902
    %v2126 = vunpack.c.l.b16 %v903
    %v2127 = vunpack.c.h.b16 %v903
    %v2128 = vunpack.c.l.b16 %v904
    %v2129 = vunpack.c.h.b16 %v904
    %v2130 = vunpack.c.l.b16 %v905
    %v2131 = vunpack.c.l.b16 %v906
    %v2132 = vunpack.c.h.b16 %v906
    %v2133 = vunpack.c.l.b16 %v907
    %v2134 = vunpack.c.h.b16 %v907
    %v2135 = vunpack.c.l.b16 %v908
    %v2136 = vunpack.c.l.b16 %v909
    %v2137 = vunpack.c.h.b16 %v909
    %v2138 = vunpack.c.l.b16 %v910
    %v2139 = vunpack.c.h.b16 %v910
    %v2140 = vunpack.c.l.b16 %v911
    %v2141 = vunpack.c.l.b16 %v912
    %v2142 = vunpack.c.h.b16 %v912
    %v2143 = vunpack.c.l.b16 %v913
    %v2144 = vunpack.c.h.b16 %v913
    %v2145 = vunpack.c.l.b16 %v914
    %v2146 = vunpack.c.l.b16 %v915
    %v2147 = vunpack.c.h.b16 %v915
    %v2148 = vunpack.c.l.b16 %v916
    %v2149 = vunpack.c.h.b16 %v916
    %v2150 = vunpack.c.l.b16 %v917
    %v2151 = vunpack.c.l.b16 %v918
    %v2152 = vunpack.c.h.b16 %v918
    %v2153 = vunpack.c.l.b16 %v919
    %v2154 = vunpack.c.h.b16 %v919
    %v2155 = vunpack.c.l.b16 %v920
    %v2156 = vunpack.c.l.b16 %v921
    %v2157 = vunpack.c.h.b16 %v921
    %v2158 = vunpack.c.l.b16 %v922
    %v2159 = vunpack.c.h.b16 %v922
    %v2160 = vunpack.c.l.b16 %v923
    %v2161 = vunpack.c.l.b16 %v924
    %v2162 = vunpack.c.h.b16 %v924
    %v2163 = vunpack.c.l.b16 %v925
    %v2164 = vunpack.c.h.b16 %v925
    %v2165 = vunpack.c.l.b16 %v926
    %v2166 = vunpack.c.l.b16 %v927
    %v2167 = vunpack.c.h.b16 %v927
    %v2168 = vunpack.c.l.b16 %v928
    %v2169 = vunpack.c.h.b16 %v928
    %v2170 = vunpack.c.l.b16 %v929
    %v2171 = vunpack.c.l.b16 %v930
    %v2172 = vunpack.c.h.b16 %v930
    %v2173 = vunpack.c.l.b16 %v931
    %v2174 = vunpack.c.h.b16 %v931
    %v2175 = vunpack.c.l.b16 %v932
    %v2176 = vunpack.c.l.b16 %v933
    %v2177 = vunpack.c.h.b16 %v933
    %v2178 = vunpack.c.l.b16 %v934
    %v2179 = vunpack.c.h.b16 %v934
    %v2180 = vunpack.c.l.b16 %v935
    %v2181 = vunpack.c.l.b16 %v936
    %v2182 = vunpack.c.h.b16 %v936
    %v2183 = vunpack.c.l.b16 %v937
    %v2184 = vunpack.c.h.b16 %v937
    %v2185 = vunpack.c.l.b16 %v938
    %v2186 = vunpack.c.l.b16 %v939
    %v2187 = vunpack.c.h.b16 %v939
    %v2188 = vunpack.c.l.b16 %v940
    %v2189 = vunpack.c.h.b16 %v940
    %v2190 = vunpack.c.l.b16 %v941
    %v2191 = vunpack.c.l.b16 %v942
    %v2192 = vunpack.c.h.b16 %v942
    %v2193 = vunpack.c.l.b16 %v943
    %v2194 = vunpack.c.h.b16 %v943
    %v2195 = vunpack.c.l.b16 %v944
    %v2196 = vunpack.c.l.b16 %v945
    %v2197 = vunpack.c.h.b16 %v945
    %v2198 = vunpack.c.l.b16 %v946
    %v2199 = vunpack.c.h.b16 %v946
    %v2200 = vunpack.c.l.b16 %v947
    %v2201 = vunpack.c.l.b16 %v948
    %v2202 = vunpack.c.h.b16 %v948
    %v2203 = vunpack.c.l.b16 %v949
    %v2204 = vunpack.c.h.b16 %v949
    %v2205 = vunpack.c.l.b16 %v950
    %v2206 = vunpack.c.l.b16 %v951
    %v2207 = vunpack.c.h.b16 %v951
    %v2208 = vunpack.c.l.b16 %v952
    %v2209 = vunpack.c.h.b16 %v952
    %v2210 = vunpack.c.l.b16 %v953
    %v2211 = vunpack.c.l.b16 %v954
    %v2212 = vunpack.c.h.b16 %v954
    %v2213 = vunpack.c.l.b16 %v955
    %v2214 = vunpack.c.h.b16 %v955
    %v2215 = vunpack.c.l.b16 %v956
    %v2216 = vunpack.c.l.b16 %v957
    %v2217 = vunpack.c.h.b16 %v957
    %v2218 = vunpack.c.l.b16 %v958
    %v2219 = vunpack.c.h.b16 %v958
    %v2220 = vunpack.c.l.b16 %v959
    %v2221 = vunpack.c.l.b16 %v960
    %v2222 = vunpack.c.h.b16 %v960
    %v2223 = vunpack.c.l.b16 %v961
    %v2224 = vunpack.c.h.b16 %v961
    %v2225 = vunpack.c.l.b16 %v962
    %v2226 = vunpack.c.l.b16 %v963
    %v2227 = vunpack.c.h.b16 %v963
    %v2228 = vunpack.c.l.b16 %v964
    %v2229 = vunpack.c.h.b16 %v964
    %v2230 = vunpack.c.l.b16 %v965
    %v2231 = vunpack.c.l.b16 %v966
    %v2232 = vunpack.c.h.b16 %v966
    %v2233 = vunpack.c.l.b16 %v967
    %v2234 = vunpack.c.h.b16 %v967
    %v2235 = vunpack.c.l.b16 %v968
    %v2236 = vunpack.c.l.b16 %v969
    %v2237 = vunpack.c.h.b16 %v969
    %v2238 = vunpack.c.l.b16 %v970
    %v2239 = vunpack.c.h.b16 %v970
    %v2240 = vunpack.c.l.b16 %v971
    %v2241 = vunpack.c.l.b16 %v972
    %v2242 = vunpack.c.h.b16 %v972
    %v2243 = vunpack.c.l.b16 %v973
    %v2244 = vunpack.c.h.b16 %v973
    %v2245 = vunpack.c.l.b16 %v974
    %v2246 = vunpack.c.l.b16 %v975
    %v2247 = vunpack.c.h.b16 %v975
    %v2248 = vunpack.c.l.b16 %v976
    %v2249 = vunpack.c.h.b16 %v976
    %v2250 = vunpack.c.l.b16 %v977
    %v2251 = vunpack.c.l.b16 %v978
    %v2252 = vunpack.c.h.b16 %v978
    %v2253 = vunpack.c.l.b16 %v979
    %v2254 = vunpack.c.h.b16 %v979
    %v2255 = vunpack.c.l.b16 %v980
    %v2256 = vunpack.c.l.b16 %v981
    %v2257 = vunpack.c.h.b16 %v981
    %v2258 = vunpack.c.l.b16 %v982
    %v2259 = vunpack.c.h.b16 %v982
    %v2260 = vunpack.c.l.b16 %v983
    %v2261 = vunpack.c.l.b16 %v984
    %v2262 = vunpack.c.h.b16 %v984
    %v2263 = vunpack.c.l.b16 %v985
    %v2264 = vunpack.c.h.b16 %v985
    %v2265 = vunpack.c.l.b16 %v986
    %v2266 = vunpack.c.l.b16 %v987
    %v2267 = vunpack.c.h.b16 %v987
    %v2268 = vunpack.c.l.b16 %v988
    %v2269 = vunpack.c.h.b16 %v988
    %v2270 = vunpack.c.l.b16 %v989
    %v2271 = vunpack.c.l.b16 %v990
    %v2272 = vunpack.c.h.b16 %v990
    %v2273 = vunpack.c.l.b16 %v991
    %v2274 = vunpack.c.h.b16 %v991
    %v2275 = vunpack.c.l.b16 %v992
    %v2276 = vunpack.c.l.b16 %v993
    %v2277 = vunpack.c.h.b16 %v993
    %v2278 = vunpack.c.l.b16 %v994
    %v2279 = vunpack.c.h.b16 %v994
    %v2280 = vunpack.c.l.b16 %v995
    %v2281 = vunpack.c.l.b16 %v996
    %v2282 = vunpack.c.h.b16 %v996
    %v2283 = vunpack.c.l.b16 %v997
    %v2284 = vunpack.c.h.b16 %v997
    %v2285 = vunpack.c.l.b16 %v998
    %v2286 = vunpack.c.l.b16 %v999
    %v2287 = vunpack.c.h.b16 %v999
    %v2288 = vunpack.c.l.b16 %v1000
    %v2289 = vunpack.c.h.b16 %v1000
    %v2290 = vunpack.c.l.b16 %v1001
    %v2291 = vunpack.c.l.b16 %v1002
    %v2292 = vunpack.c.h.b16 %v1002
    %v2293 = vunpack.c.l.b16 %v1003
    %v2294 = vunpack.c.h.b16 %v1003
    %v2295 = vunpack.c.l.b16 %v1004
    %v2296 = vunpack.c.l.b16 %v1005
    %v2297 = vunpack.c.h.b16 %v1005
    %v2298 = vunpack.c.l.b16 %v1006
    %v2299 = vunpack.c.h.b16 %v1006
    %v2300 = vunpack.c.l.b16 %v1007
    %v2301 = vunpack.c.l.b16 %v1008
    %v2302 = vunpack.c.h.b16 %v1008
    %v2303 = vunpack.c.l.b16 %v1009
    %v2304 = vunpack.c.h.b16 %v1009
    %v2305 = vunpack.c.l.b16 %v1010
    %v2306 = vunpack.c.l.b16 %v1011
    %v2307 = vunpack.c.h.b16 %v1011
    %v2308 = vunpack.c.l.b16 %v1012
    %v2309 = vunpack.c.h.b16 %v1012
    %v2310 = vunpack.c.l.b16 %v1013
    %v2311 = vunpack.c.l.b16 %v1014
    %v2312 = vunpack.c.h.b16 %v1014
    %v2313 = vunpack.c.l.b16 %v1015
    %v2314 = vunpack.c.h.b16 %v1015
    %v2315 = vunpack.c.l.b16 %v1016
    %v2316 = vunpack.c.l.b16 %v1017
    %v2317 = vunpack.c.h.b16 %v1017
    %v2318 = vunpack.c.l.b16 %v1018
    %v2319 = vunpack.c.h.b16 %v1018
    %v2320 = vunpack.c.l.b16 %v1019
    %v2321 = vunpack.c.l.b16 %v1020
    %v2322 = vunpack.c.h.b16 %v1020
    %v2323 = vunpack.c.l.b16 %v1021
    %v2324 = vunpack.c.h.b16 %v1021
    %v2325 = vunpack.c.l.b16 %v1022
    %v2326 = vunpack.c.l.b16 %v1023
    %v2327 = vunpack.c.h.b16 %v1023
    %v2328 = vunpack.c.l.b16 %v1024
    %v2329 = vunpack.c.h.b16 %v1024
    %v2330 = vunpack.c.l.b16 %v1025
    %v2331 = vunpack.c.l.b16 %v1026
    %v2332 = vunpack.c.h.b16 %v1026
    %v2333 = vunpack.c.l.b16 %v1027
    %v2334 = vunpack.c.h.b16 %v1027
    %v2335 = vunpack.c.l.b16 %v1028
    %v2336 = vpack.c.b16 %v1541, %v1536
    %v2337 = vpack.c.b16 %v1542, %v1537
    %v2338 = vpack.c.b16 %v1543, %v1538
    %v2339 = vpack.c.b16 %v1544, %v1539
    %v2340 = vpack.c.b16 %v1545, %v1540
    %v2341 = vpack.c.b16 %v1551, %v1546
    %v2342 = vpack.c.b16 %v1552, %v1547
    %v2343 = vpack.c.b16 %v1553, %v1548
    %v2344 = vpack.c.b16 %v1554, %v1549
    %v2345 = vpack.c.b16 %v1555, %v1550
    %v2346 = vpack.c.b16 %v1561, %v1556
    %v2347 = vpack.c.b16 %v1562, %v1557
    %v2348 = vpack.c.b16 %v1563, %v1558
    %v2349 = vpack.c.b16 %v1564, %v1559
    %v2350 = vpack.c.b16 %v1565, %v1560
    %v2351 = vpack.c.b16 %v1571, %v1566
    %v2352 = vpack.c.b16 %v1572, %v1567
    %v2353 = vpack.c.b16 %v1573, %v1568
    %v2354 = vpack.c.b16 %v1574, %v1569
    %v2355 = vpack.c.b16 %v1575, %v1570
    %v2356 = vpack.c.b16 %v1581, %v1576
    %v2357 = vpack.c.b16 %v1582, %v1577
    %v2358 = vpack.c.b16 %v1583, %v1578
    %v2359 = vpack.c.b16 %v1584, %v1579
    %v2360 = vpack.c.b16 %v1585, %v1580
    %v2361 = vpack.c.b16 %v1591, %v1586
    %v2362 = vpack.c.b16 %v1592, %v1587
    %v2363 = vpack.c.b16 %v1593, %v1588
    %v2364 = vpack.c.b16 %v1594, %v1589
    %v2365 = vpack.c.b16 %v1595, %v1590
    %v2366 = vpack.c.b16 %v1601, %v1596
    %v2367 = vpack.c.b16 %v1602, %v1597
    %v2368 = vpack.c.b16 %v1603, %v1598
    %v2369 = vpack.c.b16 %v1604, %v1599
    %v2370 = vpack.c.b16 %v1605, %v1600
    %v2371 = vpack.c.b16 %v1611, %v1606
    %v2372 = vpack.c.b16 %v1612, %v1607
    %v2373 = vpack.c.b16 %v1613, %v1608
    %v2374 = vpack.c.b16 %v1614, %v1609
    %v2375 = vpack.c.b16 %v1615, %v1610
    %v2376 = vpack.c.b16 %v1621, %v1616
    %v2377 = vpack.c.b16 %v1622, %v1617
    %v2378 = vpack.c.b16 %v1623, %v1618
    %v2379 = vpack.c.b16 %v1624, %v1619
    %v2380 = vpack.c.b16 %v1625, %v1620
    %v2381 = vpack.c.b16 %v1631, %v1626
    %v2382 = vpack.c.b16 %v1632, %v1627
    %v2383 = vpack.c.b16 %v1633, %v1628
    %v2384 = vpack.c.b16 %v1634, %v1629
    %v2385 = vpack.c.b16 %v1635, %v1630
    %v2386 = vpack.c.b16 %v1641, %v1636
    %v2387 = vpack.c.b16 %v1642, %v1637
    %v2388 = vpack.c.b16 %v1643, %v1638
    %v2389 = vpack.c.b16 %v1644, %v1639
    %v2390 = vpack.c.b16 %v1645, %v1640
    %v2391 = vpack.c.b16 %v1651, %v1646
    %v2392 = vpack.c.b16 %v1652, %v1647
    %v2393 = vpack.c.b16 %v1653, %v1648
    %v2394 = vpack.c.b16 %v1654, %v1649
    %v2395 = vpack.c.b16 %v1655, %v1650
    %v2396 = vpack.c.b16 %v1661, %v1656
    %v2397 = vpack.c.b16 %v1662, %v1657
    %v2398 = vpack.c.b16 %v1663, %v1658
    %v2399 = vpack.c.b16 %v1664, %v1659
    %v2400 = vpack.c.b16 %v1665, %v1660
    %v2401 = vpack.c.b16 %v1671, %v1666
    %v2402 = vpack.c.b16 %v1672, %v1667
    %v2403 = vpack.c.b16 %v1673, %v1668
    %v2404 = vpack.c.b16 %v1674, %v1669
    %v2405 = vpack.c.b16 %v1675, %v1670
    %v2406 = vpack.c.b16 %v1681, %v1676
    %v2407 = vpack.c.b16 %v1682, %v1677
    %v2408 = vpack.c.b16 %v1683, %v1678
    %v2409 = vpack.c.b16 %v1684, %v1679
    %v2410 = vpack.c.b16 %v1685, %v1680
    %v2411 = vpack.c.b16 %v1691, %v1686
    %v2412 = vpack.c.b16 %v1692, %v1687
    %v2413 = vpack.c.b16 %v1693, %v1688
    %v2414 = vpack.c.b16 %v1694, %v1689
    %v2415 = vpack.c.b16 %v1695, %v1690
    %v2416 = vpack.c.b16 %v1701, %v1696
    %v2417 = vpack.c.b16 %v1702, %v1697
    %v2418 = vpack.c.b16 %v1703, %v1698
    %v2419 = vpack.c.b16 %v1704, %v1699
    %v2420 = vpack.c.b16 %v1705, %v1700
    %v2421 = vpack.c.b16 %v1711, %v1706
    %v2422 = vpack.c.b16 %v1712, %v1707
    %v2423 = vpack.c.b16 %v1713, %v1708
    %v2424 = vpack.c.b16 %v1714, %v1709
    %v2425 = vpack.c.b16 %v1715, %v1710
    %v2426 = vpack.c.b16 %v1721, %v1716
    %v2427 = vpack.c.b16 %v1722, %v1717
    %v2428 = vpack.c.b16 %v1723, %v1718
    %v2429 = vpack.c.b16 %v1724, %v1719
    %v2430 = vpack.c.b16 %v1725, %v1720
    %v2431 = vpack.c.b16 %v1731, %v1726
    %v2432 = vpack.c.b16 %v1732, %v1727
    %v2433 = vpack.c.b16 %v1733, %v1728
    %v2434 = vpack.c.b16 %v1734, %v1729
    %v2435 = vpack.c.b16 %v1735, %v1730
    %v2436 = vpack.c.b16 %v1741, %v1736
    %v2437 = vpack.c.b16 %v1742, %v1737
    %v2438 = vpack.c.b16 %v1743, %v1738
    %v2439 = vpack.c.b16 %v1744, %v1739
    %v2440 = vpack.c.b16 %v1745, %v1740
    %v2441 = vpack.c.b16 %v1751, %v1746
    %v2442 = vpack.c.b16 %v1752, %v1747
    %v2443 = vpack.c.b16 %v1753, %v1748
    %v2444 = vpack.c.b16 %v1754, %v1749
    %v2445 = vpack.c.b16 %v1755, %v1750
    %v2446 = vpack.c.b16 %v1761, %v1756
    %v2447 = vpack.c.b16 %v1762, %v1757
    %v2448 = vpack.c.b16 %v1763, %v1758
    %v2449 = vpack.c.b16 %v1764, %v1759
    %v2450 = vpack.c.b16 %v1765, %v1760
    %v2451 = vpack.c.b16 %v1771, %v1766
    %v2452 = vpack.c.b16 %v1772, %v1767
    %v2453 = vpack.c.b16 %v1773, %v1768
    %v2454 = vpack.c.b16 %v1774, %v1769
    %v2455 = vpack.c.b16 %v1775, %v1770
    %v2456 = vpack.c.b16 %v1781, %v1776
    %v2457 = vpack.c.b16 %v1782, %v1777
    %v2458 = vpack.c.b16 %v1783, %v1778
    %v2459 = vpack.c.b16 %v1784, %v1779
    %v2460 = vpack.c.b16 %v1785, %v1780
    %v2461 = vpack.c.b16 %v1791, %v1786
    %v2462 = vpack.c.b16 %v1792, %v1787
    %v2463 = vpack.c.b16 %v1793, %v1788
    %v2464 = vpack.c.b16 %v1794, %v1789
    %v2465 = vpack.c.b16 %v1795, %v1790
    %v2466 = vpack.c.b16 %v1801, %v1796
    %v2467 = vpack.c.b16 %v1802, %v1797
    %v2468 = vpack.c.b16 %v1803, %v1798
    %v2469 = vpack.c.b16 %v1804, %v1799
    %v2470 = vpack.c.b16 %v1805, %v1800
    %v2471 = vpack.c.b16 %v1811, %v1806
    %v2472 = vpack.c.b16 %v1812, %v1807
    %v2473 = vpack.c.b16 %v1813, %v1808
    %v2474 = vpack.c.b16 %v1814, %v1809
    %v2475 = vpack.c.b16 %v1815, %v1810
    %v2476 = vpack.c.b16 %v1821, %v1816
    %v2477 = vpack.c.b16 %v1822, %v1817
    %v2478 = vpack.c.b16 %v1823, %v1818
    %v2479 = vpack.c.b16 %v1824, %v1819
    %v2480 = vpack.c.b16 %v1825, %v1820
    %v2481 = vpack.c.b16 %v1831, %v1826
    %v2482 = vpack.c.b16 %v1832, %v1827
    %v2483 = vpack.c.b16 %v1833, %v1828
    %v2484 = vpack.c.b16 %v1834, %v1829
    %v2485 = vpack.c.b16 %v1835, %v1830
    %v2486 = vpack.c.b16 %v1841, %v1836
    %v2487 = vpack.c.b16 %v1842, %v1837
    %v2488 = vpack.c.b16 %v1843, %v1838
    %v2489 = vpack.c.b16 %v1844, %v1839
    %v2490 = vpack.c.b16 %v1845, %v1840
    %v2491 = vpack.c.b16 %v1851, %v1846
    %v2492 = vpack.c.b16 %v1852, %v1847
    %v2493 = vpack.c.b16 %v1853, %v1848
    %v2494 = vpack.c.b16 %v1854, %v1849
    %v2495 = vpack.c.b16 %v1855, %v1850
    %v2496 = vpack.c.b16 %v1861, %v1856
    %v2497 = vpack.c.b16 %v1862, %v1857
    %v2498 = vpack.c.b16 %v1863, %v1858
    %v2499 = vpack.c.b16 %v1864, %v1859
    %v2500 = vpack.c.b16 %v1865, %v1860
    %v2501 = vpack.c.b16 %v1871, %v1866
    %v2502 = vpack.c.b16 %v1872, %v1867
    %v2503 = vpack.c.b16 %v1873, %v1868
    %v2504 = vpack.c.b16 %v1874, %v1869
    %v2505 = vpack.c.b16 %v1875, %v1870
    %v2506 = vpack.c.b16 %v1881, %v1876
    %v2507 = vpack.c.b16 %v1882, %v1877
    %v2508 = vpack.c.b16 %v1883, %v1878
    %v2509 = vpack.c.b16 %v1884, %v1879
    %v2510 = vpack.c.b16 %v1885, %v1880
    %v2511 = vpack.c.b16 %v1891, %v1886
    %v2512 = vpack.c.b16 %v1892, %v1887
    %v2513 = vpack.c.b16 %v1893, %v1888
    %v2514 = vpack.c.b16 %v1894, %v1889
    %v2515 = vpack.c.b16 %v1895, %v1890
    %v2516 = vpack.c.b16 %v1901, %v1896
    %v2517 = vpack.c.b16 %v1902, %v1897
    %v2518 = vpack.c.b16 %v1903, %v1898
    %v2519 = vpack.c.b16 %v1904, %v1899
    %v2520 = vpack.c.b16 %v1905, %v1900
    %v2521 = vpack.c.b16 %v1911, %v1906
    %v2522 = vpack.c.b16 %v1912, %v1907
    %v2523 = vpack.c.b16 %v1913, %v1908
    %v2524 = vpack.c.b16 %v1914, %v1909
    %v2525 = vpack.c.b16 %v1915, %v1910
    %v2526 = vpack.c.b16 %v1921, %v1916
    %v2527 = vpack.c.b16 %v1922, %v1917
    %v2528 = vpack.c.b16 %v1923, %v1918
    %v2529 = vpack.c.b16 %v1924, %v1919
    %v2530 = vpack.c.b16 %v1925, %v1920
    %v2531 = vpack.c.b16 %v1931, %v1926
    %v2532 = vpack.c.b16 %v1932, %v1927
    %v2533 = vpack.c.b16 %v1933, %v1928
    %v2534 = vpack.c.b16 %v1934, %v1929
    %v2535 = vpack.c.b16 %v1935, %v1930
    %v2536 = vpack.c.b16 %v1941, %v1936
    %v2537 = vpack.c.b16 %v1942, %v1937
    %v2538 = vpack.c.b16 %v1943, %v1938
    %v2539 = vpack.c.b16 %v1944, %v1939
    %v2540 = vpack.c.b16 %v1945, %v1940
    %v2541 = vpack.c.b16 %v1951, %v1946
    %v2542 = vpack.c.b16 %v1952, %v1947
    %v2543 = vpack.c.b16 %v1953, %v1948
    %v2544 = vpack.c.b16 %v1954, %v1949
    %v2545 = vpack.c.b16 %v1955, %v1950
    %v2546 = vpack.c.b16 %v1961, %v1956
    %v2547 = vpack.c.b16 %v1962, %v1957
    %v2548 = vpack.c.b16 %v1963, %v1958
    %v2549 = vpack.c.b16 %v1964, %v1959
    %v2550 = vpack.c.b16 %v1965, %v1960
    %v2551 = vpack.c.b16 %v1971, %v1966
    %v2552 = vpack.c.b16 %v1972, %v1967
    %v2553 = vpack.c.b16 %v1973, %v1968
    %v2554 = vpack.c.b16 %v1974, %v1969
    %v2555 = vpack.c.b16 %v1975, %v1970
    %v2556 = vpack.c.b16 %v1981, %v1976
    %v2557 = vpack.c.b16 %v1982, %v1977
    %v2558 = vpack.c.b16 %v1983, %v1978
    %v2559 = vpack.c.b16 %v1984, %v1979
    %v2560 = vpack.c.b16 %v1985, %v1980
    %v2561 = vpack.c.b16 %v1991, %v1986
    %v2562 = vpack.c.b16 %v1992, %v1987
    %v2563 = vpack.c.b16 %v1993, %v1988
    %v2564 = vpack.c.b16 %v1994, %v1989
    %v2565 = vpack.c.b16 %v1995, %v1990
    %v2566 = vpack.c.b16 %v2001, %v1996
    %v2567 = vpack.c.b16 %v2002, %v1997
    %v2568 = vpack.c.b16 %v2003, %v1998
    %v2569 = vpack.c.b16 %v2004, %v1999
    %v2570 = vpack.c.b16 %v2005, %v2000
    %v2571 = vpack.c.b16 %v2011, %v2006
    %v2572 = vpack.c.b16 %v2012, %v2007
    %v2573 = vpack.c.b16 %v2013, %v2008
    %v2574 = vpack.c.b16 %v2014, %v2009
    %v2575 = vpack.c.b16 %v2015, %v2010
    %v2576 = vpack.c.b16 %v2021, %v2016
    %v2577 = vpack.c.b16 %v2022, %v2017
    %v2578 = vpack.c.b16 %v2023, %v2018
    %v2579 = vpack.c.b16 %v2024, %v2019
    %v2580 = vpack.c.b16 %v2025, %v2020
    %v2581 = vpack.c.b16 %v2031, %v2026
    %v2582 = vpack.c.b16 %v2032, %v2027
    %v2583 = vpack.c.b16 %v2033, %v2028
    %v2584 = vpack.c.b16 %v2034, %v2029
    %v2585 = vpack.c.b16 %v2035, %v2030
    %v2586 = vpack.c.b16 %v2041, %v2036
    %v2587 = vpack.c.b16 %v2042, %v2037
    %v2588 = vpack.c.b16 %v2043, %v2038
    %v2589 = vpack.c.b16 %v2044, %v2039
    %v2590 = vpack.c.b16 %v2045, %v2040
    %v2591 = vpack.c.b16 %v2051, %v2046
    %v2592 = vpack.c.b16 %v2052, %v2047
    %v2593 = vpack.c.b16 %v2053, %v2048
    %v2594 = vpack.c.b16 %v2054, %v2049
    %v2595 = vpack.c.b16 %v2055, %v2050
    %v2596 = vpack.c.b16 %v2061, %v2056
    %v2597 = vpack.c.b16 %v2062, %v2057
    %v2598 = vpack.c.b16 %v2063, %v2058
    %v2599 = vpack.c.b16 %v2064, %v2059
    %v2600 = vpack.c.b16 %v2065, %v2060
    %v2601 = vpack.c.b16 %v2071, %v2066
    %v2602 = vpack.c.b16 %v2072, %v2067
    %v2603 = vpack.c.b16 %v2073, %v2068
    %v2604 = vpack.c.b16 %v2074, %v2069
    %v2605 = vpack.c.b16 %v2075, %v2070
    %v2606 = vpack.c.b16 %v2081, %v2076
    %v2607 = vpack.c.b16 %v2082, %v2077
    %v2608 = vpack.c.b16 %v2083, %v2078
    %v2609 = vpack.c.b16 %v2084, %v2079
    %v2610 = vpack.c.b16 %v2085, %v2080
    %v2611 = vpack.c.b16 %v2091, %v2086
    %v2612 = vpack.c.b16 %v2092, %v2087
    %v2613 = vpack.c.b16 %v2093, %v2088
    %v2614 = vpack.c.b16 %v2094, %v2089
    %v2615 = vpack.c.b16 %v2095, %v2090
    %v2616 = vpack.c.b16 %v2101, %v2096
    %v2617 = vpack.c.b16 %v2102, %v2097
    %v2618 = vpack.c.b16 %v2103, %v2098
    %v2619 = vpack.c.b16 %v2104, %v2099
    %v2620 = vpack.c.b16 %v2105, %v2100
    %v2621 = vpack.c.b16 %v2111, %v2106
    %v2622 = vpack.c.b16 %v2112, %v2107
    %v2623 = vpack.c.b16 %v2113, %v2108
    %v2624 = vpack.c.b16 %v2114, %v2109
    %v2625 = vpack.c.b16 %v2115, %v2110
    %v2626 = vpack.c.b16 %v2121, %v2116
    %v2627 = vpack.c.b16 %v2122, %v2117
    %v2628 = vpack.c.b16 %v2123, %v2118
    %v2629 = vpack.c.b16 %v2124, %v2119
    %v2630 = vpack.c.b16 %v2125, %v2120
    %v2631 = vpack.c.b16 %v2131, %v2126
    %v2632 = vpack.c.b16 %v2132, %v2127
    %v2633 = vpack.c.b16 %v2133, %v2128
    %v2634 = vpack.c.b16 %v2134, %v2129
    %v2635 = vpack.c.b16 %v2135, %v2130
    %v2636 = vpack.c.b16 %v2141, %v2136
    %v2637 = vpack.c.b16 %v2142, %v2137
    %v2638 = vpack.c.b16 %v2143, %v2138
    %v2639 = vpack.c.b16 %v2144, %v2139
    %v2640 = vpack.c.b16 %v2145, %v2140
    %v2641 = vpack.c.b16 %v2151, %v2146
    %v2642 = vpack.c.b16 %v2152, %v2147
    %v2643 = vpack.c.b16 %v2153, %v2148
    %v2644 = vpack.c.b16 %v2154, %v2149
    %v2645 = vpack.c.b16 %v2155, %v2150
    %v2646 = vpack.c.b16 %v2161, %v2156
    %v2647 = vpack.c.b16 %v2162, %v2157
    %v2648 = vpack.c.b16 %v2163, %v2158
    %v2649 = vpack.c.b16 %v2164, %v2159
    %v2650 = vpack.c.b16 %v2165, %v2160
    %v2651 = vpack.c.b16 %v2171, %v2166
    %v2652 = vpack.c.b16 %v2172, %v2167
    %v2653 = vpack.c.b16 %v2173, %v2168
    %v2654 = vpack.c.b16 %v2174, %v2169
    %v2655 = vpack.c.b16 %v2175, %v2170
    %v2656 = vpack.c.b16 %v2181, %v2176
    %v2657 = vpack.c.b16 %v2182, %v2177
    %v2658 = vpack.c.b16 %v2183, %v2178
    %v2659 = vpack.c.b16 %v2184, %v2179
    %v2660 = vpack.c.b16 %v2185, %v2180
    %v2661 = vpack.c.b16 %v2191, %v2186
    %v2662 = vpack.c.b16 %v2192, %v2187
    %v2663 = vpack.c.b16 %v2193, %v2188
    %v2664 = vpack.c.b16 %v2194, %v2189
    %v2665 = vpack.c.b16 %v2195, %v2190
    %v2666 = vpack.c.b16 %v2201, %v2196
    %v2667 = vpack.c.b16 %v2202, %v2197
    %v2668 = vpack.c.b16 %v2203, %v2198
    %v2669 = vpack.c.b16 %v2204, %v2199
    %v2670 = vpack.c.b16 %v2205, %v2200
    %v2671 = vpack.c.b16 %v2211, %v2206
    %v2672 = vpack.c.b16 %v2212, %v2207
    %v2673 = vpack.c.b16 %v2213, %v2208
    %v2674 = vpack.c.b16 %v2214, %v2209
    %v2675 = vpack.c.b16 %v2215, %v2210
    %v2676 = vpack.c.b16 %v2221, %v2216
    %v2677 = vpack.c.b16 %v2222, %v2217
    %v2678 = vpack.c.b16 %v2223, %v2218
    %v2679 = vpack.c.b16 %v2224, %v2219
    %v2680 = vpack.c.b16 %v2225, %v2220
    %v2681 = vpack.c.b16 %v2231, %v2226
    %v2682 = vpack.c.b16 %v2232, %v2227
    %v2683 = vpack.c.b16 %v2233, %v2228
    %v2684 = vpack.c.b16 %v2234, %v2229
    %v2685 = vpack.c.b16 %v2235, %v2230
    %v2686 = vpack.c.b16 %v2241, %v2236
    %v2687 = vpack.c.b16 %v2242, %v2237
    %v2688 = vpack.c.b16 %v2243, %v2238
    %v2689 = vpack.c.b16 %v2244, %v2239
    %v2690 = vpack.c.b16 %v2245, %v2240
    %v2691 = vpack.c.b16 %v2251, %v2246
    %v2692 = vpack.c.b16 %v2252, %v2247
    %v2693 = vpack.c.b16 %v2253, %v2248
    %v2694 = vpack.c.b16 %v2254, %v2249
    %v2695 = vpack.c.b16 %v2255, %v2250
    %v2696 = vpack.c.b16 %v2261, %v2256
    %v2697 = vpack.c.b16 %v2262, %v2257
    %v2698 = vpack.c.b16 %v2263, %v2258
    %v2699 = vpack.c.b16 %v2264, %v2259
    %v2700 = vpack.c.b16 %v2265, %v2260
    %v2701 = vpack.c.b16 %v2271, %v2266
    %v2702 = vpack.c.b16 %v2272, %v2267
    %v2703 = vpack.c.b16 %v2273, %v2268
    %v2704 = vpack.c.b16 %v2274, %v2269
    %v2705 = vpack.c.b16 %v2275, %v2270
    %v2706 = vpack.c.b16 %v2281, %v2276
    %v2707 = vpack.c.b16 %v2282, %v2277
    %v2708 = vpack.c.b16 %v2283, %v2278
    %v2709 = vpack.c.b16 %v2284, %v2279
    %v2710 = vpack.c.b16 %v2285, %v2280
    %v2711 = vpack.c.b16 %v2291, %v2286
    %v2712 = vpack.c.b16 %v2292, %v2287
    %v2713 = vpack.c.b16 %v2293, %v2288
    %v2714 = vpack.c.b16 %v2294, %v2289
    %v2715 = vpack.c.b16 %v2295, %v2290
    %v2716 = vpack.c.b16 %v2301, %v2296
    %v2717 = vpack.c.b16 %v2302, %v2297
    %v2718 = vpack.c.b16 %v2303, %v2298
    %v2719 = vpack.c.b16 %v2304, %v2299
    %v2720 = vpack.c.b16 %v2305, %v2300
    %v2721 = vpack.c.b16 %v2311, %v2306
    %v2722 = vpack.c.b16 %v2312, %v2307
    %v2723 = vpack.c.b16 %v2313, %v2308
    %v2724 = vpack.c.b16 %v2314, %v2309
    %v2725 = vpack.c.b16 %v2315, %v2310
    %v2726 = vpack.c.b16 %v2321, %v2316
    %v2727 = vpack.c.b16 %v2322, %v2317
    %v2728 = vpack.c.b16 %v2323, %v2318
    %v2729 = vpack.c.b16 %v2324, %v2319
    %v2730 = vpack.c.b16 %v2325, %v2320
    %v2731 = vpack.c.b16 %v2331, %v2326
    %v2732 = vpack.c.b16 %v2332, %v2327
    %v2733 = vpack.c.b16 %v2333, %v2328
    %v2734 = vpack.c.b16 %v2334, %v2329
    %v2735 = vpack.c.b16 %v2335, %v2330
    %3136 = vmatprep.subr.bf16.mxu0 %v2337
    %3137 = vmatpush1.bf16.msra.mxu0 %v2336
    %3138 = vmatprep.subr.bf16.mxu0 %v2342
    %3139 = vmatpush1.bf16.msra.mxu0 %v2341
    %3140 = vmatprep.subr.bf16.mxu0 %v2347
    %3141 = vmatpush1.bf16.msra.mxu0 %v2346
    %3142 = vmatprep.subr.bf16.mxu0 %v2352
    %3143 = vmatpush1.bf16.msra.mxu0 %v2351
    %3144 = vmatprep.subr.bf16.mxu0 %v2357
    %3145 = vmatpush1.bf16.msra.mxu0 %v2356
    %3146 = vmatprep.subr.bf16.mxu0 %v2362
    %3147 = vmatpush1.bf16.msra.mxu0 %v2361
    %3148 = vmatprep.subr.bf16.mxu0 %v2367
    %3149 = vmatpush1.bf16.msra.mxu0 %v2366
    %3150 = vmatprep.subr.bf16.mxu0 %v2372
    %3151 = vmatpush1.bf16.msra.mxu0 %v2371
    %3152 = vmatprep.subr.bf16.mxu0 %v2377
    %3153 = vmatpush1.bf16.msra.mxu0 %v2376
    %3154 = vmatprep.subr.bf16.mxu0 %v2382
    %3155 = vmatpush1.bf16.msra.mxu0 %v2381
    %3156 = vmatprep.subr.bf16.mxu0 %v2387
    %3157 = vmatpush1.bf16.msra.mxu0 %v2386
    %3158 = vmatprep.subr.bf16.mxu0 %v2392
    %3159 = vmatpush1.bf16.msra.mxu0 %v2391
    %3160 = vmatprep.subr.bf16.mxu0 %v2397
    %3161 = vmatpush1.bf16.msra.mxu0 %v2396
    %3162 = vmatprep.subr.bf16.mxu0 %v2402
    %3163 = vmatpush1.bf16.msra.mxu0 %v2401
    %3164 = vmatprep.subr.bf16.mxu0 %v2407
    %3165 = vmatpush1.bf16.msra.mxu0 %v2406
    %3166 = vmatprep.subr.bf16.mxu0 %v2412
    %3167 = vmatpush1.bf16.msra.mxu0 %v2411
    %3168 = vmatprep.mubr.bf16.mxu0 %v540
    %3169 = vmatmul.mubr.bf16.gmra.mrb[0].mxu0 %v539
    %v3170 = vpop.f32.mrb[0].mxu0
    %v3171 = vadd.f32 %v1034, %v3170
    %v3172 = vpop.f32.mrb[0].mxu0
    %v3173 = vadd.f32 %v1038, %v3172
    %v3174 = vpop.f32.mrb[0].mxu0
    %v3175 = vpop.f32.mrb[0].mxu0
    %3176 = vdwg.mxu0
    %3177 = vmatprep.subr.bf16.mxu0 %v2417
    %3178 = vmatpush1.bf16.msra.mxu0 %v2416
    %3179 = vmatprep.subr.bf16.mxu0 %v2422
    %3180 = vmatpush1.bf16.msra.mxu0 %v2421
    %3181 = vmatprep.subr.bf16.mxu0 %v2427
    %3182 = vmatpush1.bf16.msra.mxu0 %v2426
    %3183 = vmatprep.subr.bf16.mxu0 %v2432
    %3184 = vmatpush1.bf16.msra.mxu0 %v2431
    %3185 = vmatprep.subr.bf16.mxu0 %v2437
    %3186 = vmatpush1.bf16.msra.mxu0 %v2436
    %3187 = vmatprep.subr.bf16.mxu0 %v2442
    %3188 = vmatpush1.bf16.msra.mxu0 %v2441
    %3189 = vmatprep.subr.bf16.mxu0 %v2447
    %3190 = vmatpush1.bf16.msra.mxu0 %v2446
    %3191 = vmatprep.subr.bf16.mxu0 %v2452
    %3192 = vmatpush1.bf16.msra.mxu0 %v2451
    %3193 = vmatprep.subr.bf16.mxu0 %v2457
    %3194 = vmatpush1.bf16.msra.mxu0 %v2456
    %3195 = vmatprep.subr.bf16.mxu0 %v2462
    %3196 = vmatpush1.bf16.msra.mxu0 %v2461
    %3197 = vmatprep.subr.bf16.mxu0 %v2467
    %3198 = vmatpush1.bf16.msra.mxu0 %v2466
    %3199 = vmatprep.subr.bf16.mxu0 %v2472
    %3200 = vmatpush1.bf16.msra.mxu0 %v2471
    %3201 = vmatprep.subr.bf16.mxu0 %v2477
    %3202 = vmatpush1.bf16.msra.mxu0 %v2476
    %3203 = vmatprep.subr.bf16.mxu0 %v2482
    %3204 = vmatpush1.bf16.msra.mxu0 %v2481
    %3205 = vmatprep.subr.bf16.mxu0 %v2487
    %3206 = vmatpush1.bf16.msra.mxu0 %v2486
    %3207 = vmatprep.subr.bf16.mxu0 %v2492
    %3208 = vmatpush1.bf16.msra.mxu0 %v2491
    %3209 = vmatprep.mubr.bf16.mxu0 %v542
    %3210 = vmatmul.mubr.bf16.gmra.mrb[0].mxu0 %v541
    %v3211 = vpop.f32.mrb[0].mxu0
    %v3212 = vadd.f32 %v3171, %v3211
    %v3213 = vpop.f32.mrb[0].mxu0
    %v3214 = vadd.f32 %v3173, %v3213
    %v3215 = vpop.f32.mrb[0].mxu0
    %v3216 = vpop.f32.mrb[0].mxu0
    %3217 = vdwg.mxu0
    %3218 = vmatprep.subr.bf16.mxu0 %v2497
    %3219 = vmatpush1.bf16.msra.mxu0 %v2496
    %3220 = vmatprep.subr.bf16.mxu0 %v2502
    %3221 = vmatpush1.bf16.msra.mxu0 %v2501
    %3222 = vmatprep.subr.bf16.mxu0 %v2507
    %3223 = vmatpush1.bf16.msra.mxu0 %v2506
    %3224 = vmatprep.subr.bf16.mxu0 %v2512
    %3225 = vmatpush1.bf16.msra.mxu0 %v2511
    %3226 = vmatprep.subr.bf16.mxu0 %v2517
    %3227 = vmatpush1.bf16.msra.mxu0 %v2516
    %3228 = vmatprep.subr.bf16.mxu0 %v2522
    %3229 = vmatpush1.bf16.msra.mxu0 %v2521
    %3230 = vmatprep.subr.bf16.mxu0 %v2527
    %3231 = vmatpush1.bf16.msra.mxu0 %v2526
    %3232 = vmatprep.subr.bf16.mxu0 %v2532
    %3233 = vmatpush1.bf16.msra.mxu0 %v2531
    %3234 = vmatprep.subr.bf16.mxu0 %v2537
    %3235 = vmatpush1.bf16.msra.mxu0 %v2536
    %3236 = vmatprep.subr.bf16.mxu0 %v2542
    %3237 = vmatpush1.bf16.msra.mxu0 %v2541
    %3238 = vmatprep.subr.bf16.mxu0 %v2547
    %3239 = vmatpush1.bf16.msra.mxu0 %v2546
    %3240 = vmatprep.subr.bf16.mxu0 %v2552
    %3241 = vmatpush1.bf16.msra.mxu0 %v2551
    %3242 = vmatprep.subr.bf16.mxu0 %v2557
    %3243 = vmatpush1.bf16.msra.mxu0 %v2556
    %3244 = vmatprep.subr.bf16.mxu0 %v2562
    %3245 = vmatpush1.bf16.msra.mxu0 %v2561
    %3246 = vmatprep.subr.bf16.mxu0 %v2567
    %3247 = vmatpush1.bf16.msra.mxu0 %v2566
    %3248 = vmatprep.subr.bf16.mxu0 %v2572
    %3249 = vmatpush1.bf16.msra.mxu0 %v2571
    %3250 = vmatprep.mubr.bf16.mxu0 %v544
    %3251 = vmatmul.mubr.bf16.gmra.mrb[0].mxu0 %v543
    %v3252 = vpop.f32.mrb[0].mxu0
    %v3253 = vadd.f32 %v3212, %v3252
    %v3254 = vpop.f32.mrb[0].mxu0
    %v3255 = vadd.f32 %v3214, %v3254
    %v3256 = vpop.f32.mrb[0].mxu0
    %v3257 = vpop.f32.mrb[0].mxu0
    %3258 = vdwg.mxu0
    %3259 = vmatprep.subr.bf16.mxu0 %v2577
    %3260 = vmatpush1.bf16.msra.mxu0 %v2576
    %3261 = vmatprep.subr.bf16.mxu0 %v2582
    %3262 = vmatpush1.bf16.msra.mxu0 %v2581
    %3263 = vmatprep.subr.bf16.mxu0 %v2587
    %3264 = vmatpush1.bf16.msra.mxu0 %v2586
    %3265 = vmatprep.subr.bf16.mxu0 %v2592
    %3266 = vmatpush1.bf16.msra.mxu0 %v2591
    %3267 = vmatprep.subr.bf16.mxu0 %v2597
    %3268 = vmatpush1.bf16.msra.mxu0 %v2596
    %3269 = vmatprep.subr.bf16.mxu0 %v2602
    %3270 = vmatpush1.bf16.msra.mxu0 %v2601
    %3271 = vmatprep.subr.bf16.mxu0 %v2607
    %3272 = vmatpush1.bf16.msra.mxu0 %v2606
    %3273 = vmatprep.subr.bf16.mxu0 %v2612
    %3274 = vmatpush1.bf16.msra.mxu0 %v2611
    %3275 = vmatprep.subr.bf16.mxu0 %v2617
    %3276 = vmatpush1.bf16.msra.mxu0 %v2616
    %3277 = vmatprep.subr.bf16.mxu0 %v2622
    %3278 = vmatpush1.bf16.msra.mxu0 %v2621
    %3279 = vmatprep.subr.bf16.mxu0 %v2627
    %3280 = vmatpush1.bf16.msra.mxu0 %v2626
    %3281 = vmatprep.subr.bf16.mxu0 %v2632
    %3282 = vmatpush1.bf16.msra.mxu0 %v2631
    %3283 = vmatprep.subr.bf16.mxu0 %v2637
    %3284 = vmatpush1.bf16.msra.mxu0 %v2636
    %3285 = vmatprep.subr.bf16.mxu0 %v2642
    %3286 = vmatpush1.bf16.msra.mxu0 %v2641
    %3287 = vmatprep.subr.bf16.mxu0 %v2647
    %3288 = vmatpush1.bf16.msra.mxu0 %v2646
    %3289 = vmatprep.subr.bf16.mxu0 %v2652
    %3290 = vmatpush1.bf16.msra.mxu0 %v2651
    %3291 = vmatprep.mubr.bf16.mxu0 %v546
    %3292 = vmatmul.mubr.bf16.gmra.mrb[0].mxu0 %v545
    %v3293 = vpop.f32.mrb[0].mxu0
    %v3294 = vadd.f32 %v3253, %v3293
    %v3295 = vpop.f32.mrb[0].mxu0
    %v3296 = vadd.f32 %v3255, %v3295
    %v3297 = vpop.f32.mrb[0].mxu0
    %v3298 = vpop.f32.mrb[0].mxu0
    %3299 = vdwg.mxu0
    %3300 = vmatprep.subr.bf16.mxu0 %v2657
    %3301 = vmatpush1.bf16.msra.mxu0 %v2656
    %3302 = vmatprep.subr.bf16.mxu0 %v2662
    %3303 = vmatpush1.bf16.msra.mxu0 %v2661
    %3304 = vmatprep.subr.bf16.mxu0 %v2667
    %3305 = vmatpush1.bf16.msra.mxu0 %v2666
    %3306 = vmatprep.subr.bf16.mxu0 %v2672
    %3307 = vmatpush1.bf16.msra.mxu0 %v2671
    %3308 = vmatprep.subr.bf16.mxu0 %v2677
    %3309 = vmatpush1.bf16.msra.mxu0 %v2676
    %3310 = vmatprep.subr.bf16.mxu0 %v2682
    %3311 = vmatpush1.bf16.msra.mxu0 %v2681
    %3312 = vmatprep.subr.bf16.mxu0 %v2687
    %3313 = vmatpush1.bf16.msra.mxu0 %v2686
    %3314 = vmatprep.subr.bf16.mxu0 %v2692
    %3315 = vmatpush1.bf16.msra.mxu0 %v2691
    %3316 = vmatprep.subr.bf16.mxu0 %v2697
    %3317 = vmatpush1.bf16.msra.mxu0 %v2696
    %3318 = vmatprep.subr.bf16.mxu0 %v2702
    %3319 = vmatpush1.bf16.msra.mxu0 %v2701
    %3320 = vmatprep.subr.bf16.mxu0 %v2707
    %3321 = vmatpush1.bf16.msra.mxu0 %v2706
    %3322 = vmatprep.subr.bf16.mxu0 %v2712
    %3323 = vmatpush1.bf16.msra.mxu0 %v2711
    %3324 = vmatprep.subr.bf16.mxu0 %v2717
    %3325 = vmatpush1.bf16.msra.mxu0 %v2716
    %3326 = vmatprep.subr.bf16.mxu0 %v2722
    %3327 = vmatpush1.bf16.msra.mxu0 %v2721
    %3328 = vmatprep.subr.bf16.mxu0 %v2727
    %3329 = vmatpush1.bf16.msra.mxu0 %v2726
    %3330 = vmatprep.subr.bf16.mxu0 %v2732
    %3331 = vmatpush1.bf16.msra.mxu0 %v2731
    %3332 = vmatprep.mubr.bf16.mxu0 %v548
    %3333 = vmatmul.mubr.bf16.gmra.mrb[0].mxu0 %v547
    %v3334 = vpop.f32.mrb[0].mxu0
    %v3335 = vadd.f32 %v3294, %v3334
    %v3336 = vpop.f32.mrb[0].mxu0
    %v3337 = vadd.f32 %v3296, %v3336
    %v3338 = vpop.f32.mrb[0].mxu0
    %v3339 = vpop.f32.mrb[0].mxu0
    %3340 = vdwg.mxu0
    %3341 = vmatprep.subr.bf16.mxu0 %v2339
    %3342 = vmatpush1.bf16.msra.mxu0 %v2338
    %3343 = vmatprep.subr.bf16.mxu0 %v2344
    %3344 = vmatpush1.bf16.msra.mxu0 %v2343
    %3345 = vmatprep.subr.bf16.mxu0 %v2349
    %3346 = vmatpush1.bf16.msra.mxu0 %v2348
    %3347 = vmatprep.subr.bf16.mxu0 %v2354
    %3348 = vmatpush1.bf16.msra.mxu0 %v2353
    %3349 = vmatprep.subr.bf16.mxu0 %v2359
    %3350 = vmatpush1.bf16.msra.mxu0 %v2358
    %3351 = vmatprep.subr.bf16.mxu0 %v2364
    %3352 = vmatpush1.bf16.msra.mxu0 %v2363
    %3353 = vmatprep.subr.bf16.mxu0 %v2369
    %3354 = vmatpush1.bf16.msra.mxu0 %v2368
    %3355 = vmatprep.subr.bf16.mxu0 %v2374
    %3356 = vmatpush1.bf16.msra.mxu0 %v2373
    %3357 = vmatprep.subr.bf16.mxu0 %v2379
    %3358 = vmatpush1.bf16.msra.mxu0 %v2378
    %3359 = vmatprep.subr.bf16.mxu0 %v2384
    %3360 = vmatpush1.bf16.msra.mxu0 %v2383
    %3361 = vmatprep.subr.bf16.mxu0 %v2389
    %3362 = vmatpush1.bf16.msra.mxu0 %v2388
    %3363 = vmatprep.subr.bf16.mxu0 %v2394
    %3364 = vmatpush1.bf16.msra.mxu0 %v2393
    %3365 = vmatprep.subr.bf16.mxu0 %v2399
    %3366 = vmatpush1.bf16.msra.mxu0 %v2398
    %3367 = vmatprep.subr.bf16.mxu0 %v2404
    %3368 = vmatpush1.bf16.msra.mxu0 %v2403
    %3369 = vmatprep.subr.bf16.mxu0 %v2409
    %3370 = vmatpush1.bf16.msra.mxu0 %v2408
    %3371 = vmatprep.subr.bf16.mxu0 %v2414
    %3372 = vmatpush1.bf16.msra.mxu0 %v2413
    %3373 = vmatprep.mubr.bf16.mxu0 %v540
    %3374 = vmatmul.mubr.bf16.gmra.mrb[0].mxu0 %v539
    %v3375 = vpop.f32.mrb[0].mxu0
    %v3376 = vadd.f32 %v1042, %v3375
    %v3377 = vpop.f32.mrb[0].mxu0
    %v3378 = vadd.f32 %v1046, %v3377
    %v3379 = vpop.f32.mrb[0].mxu0
    %v3380 = vpop.f32.mrb[0].mxu0
    %3381 = vdwg.mxu0
    %3382 = vmatprep.subr.bf16.mxu0 %v2419
    %3383 = vmatpush1.bf16.msra.mxu0 %v2418
    %3384 = vmatprep.subr.bf16.mxu0 %v2424
    %3385 = vmatpush1.bf16.msra.mxu0 %v2423
    %3386 = vmatprep.subr.bf16.mxu0 %v2429
    %3387 = vmatpush1.bf16.msra.mxu0 %v2428
    %3388 = vmatprep.subr.bf16.mxu0 %v2434
    %3389 = vmatpush1.bf16.msra.mxu0 %v2433
    %3390 = vmatprep.subr.bf16.mxu0 %v2439
    %3391 = vmatpush1.bf16.msra.mxu0 %v2438
    %3392 = vmatprep.subr.bf16.mxu0 %v2444
    %3393 = vmatpush1.bf16.msra.mxu0 %v2443
    %3394 = vmatprep.subr.bf16.mxu0 %v2449
    %3395 = vmatpush1.bf16.msra.mxu0 %v2448
    %3396 = vmatprep.subr.bf16.mxu0 %v2454
    %3397 = vmatpush1.bf16.msra.mxu0 %v2453
    %3398 = vmatprep.subr.bf16.mxu0 %v2459
    %3399 = vmatpush1.bf16.msra.mxu0 %v2458
    %3400 = vmatprep.subr.bf16.mxu0 %v2464
    %3401 = vmatpush1.bf16.msra.mxu0 %v2463
    %3402 = vmatprep.subr.bf16.mxu0 %v2469
    %3403 = vmatpush1.bf16.msra.mxu0 %v2468
    %3404 = vmatprep.subr.bf16.mxu0 %v2474
    %3405 = vmatpush1.bf16.msra.mxu0 %v2473
    %3406 = vmatprep.subr.bf16.mxu0 %v2479
    %3407 = vmatpush1.bf16.msra.mxu0 %v2478
    %3408 = vmatprep.subr.bf16.mxu0 %v2484
    %3409 = vmatpush1.bf16.msra.mxu0 %v2483
    %3410 = vmatprep.subr.bf16.mxu0 %v2489
    %3411 = vmatpush1.bf16.msra.mxu0 %v2488
    %3412 = vmatprep.subr.bf16.mxu0 %v2494
    %3413 = vmatpush1.bf16.msra.mxu0 %v2493
    %3414 = vmatprep.mubr.bf16.mxu0 %v542
    %3415 = vmatmul.mubr.bf16.gmra.mrb[0].mxu0 %v541
    %v3416 = vpop.f32.mrb[0].mxu0
    %v3417 = vadd.f32 %v3376, %v3416
    %v3418 = vpop.f32.mrb[0].mxu0
    %v3419 = vadd.f32 %v3378, %v3418
    %v3420 = vpop.f32.mrb[0].mxu0
    %v3421 = vpop.f32.mrb[0].mxu0
    %3422 = vdwg.mxu0
    %3423 = vmatprep.subr.bf16.mxu0 %v2499
    %3424 = vmatpush1.bf16.msra.mxu0 %v2498
    %3425 = vmatprep.subr.bf16.mxu0 %v2504
    %3426 = vmatpush1.bf16.msra.mxu0 %v2503
    %3427 = vmatprep.subr.bf16.mxu0 %v2509
    %3428 = vmatpush1.bf16.msra.mxu0 %v2508
    %3429 = vmatprep.subr.bf16.mxu0 %v2514
    %3430 = vmatpush1.bf16.msra.mxu0 %v2513
    %3431 = vmatprep.subr.bf16.mxu0 %v2519
    %3432 = vmatpush1.bf16.msra.mxu0 %v2518
    %3433 = vmatprep.subr.bf16.mxu0 %v2524
    %3434 = vmatpush1.bf16.msra.mxu0 %v2523
    %3435 = vmatprep.subr.bf16.mxu0 %v2529
    %3436 = vmatpush1.bf16.msra.mxu0 %v2528
    %3437 = vmatprep.subr.bf16.mxu0 %v2534
    %3438 = vmatpush1.bf16.msra.mxu0 %v2533
    %3439 = vmatprep.subr.bf16.mxu0 %v2539
    %3440 = vmatpush1.bf16.msra.mxu0 %v2538
    %3441 = vmatprep.subr.bf16.mxu0 %v2544
    %3442 = vmatpush1.bf16.msra.mxu0 %v2543
    %3443 = vmatprep.subr.bf16.mxu0 %v2549
    %3444 = vmatpush1.bf16.msra.mxu0 %v2548
    %3445 = vmatprep.subr.bf16.mxu0 %v2554
    %3446 = vmatpush1.bf16.msra.mxu0 %v2553
    %3447 = vmatprep.subr.bf16.mxu0 %v2559
    %3448 = vmatpush1.bf16.msra.mxu0 %v2558
    %3449 = vmatprep.subr.bf16.mxu0 %v2564
    %3450 = vmatpush1.bf16.msra.mxu0 %v2563
    %3451 = vmatprep.subr.bf16.mxu0 %v2569
    %3452 = vmatpush1.bf16.msra.mxu0 %v2568
    %3453 = vmatprep.subr.bf16.mxu0 %v2574
    %3454 = vmatpush1.bf16.msra.mxu0 %v2573
    %3455 = vmatprep.mubr.bf16.mxu0 %v544
    %3456 = vmatmul.mubr.bf16.gmra.mrb[0].mxu0 %v543
    %v3457 = vpop.f32.mrb[0].mxu0
    %v3458 = vadd.f32 %v3417, %v3457
    %v3459 = vpop.f32.mrb[0].mxu0
    %v3460 = vadd.f32 %v3419, %v3459
    %v3461 = vpop.f32.mrb[0].mxu0
    %v3462 = vpop.f32.mrb[0].mxu0
    %3463 = vdwg.mxu0
    %3464 = vmatprep.subr.bf16.mxu0 %v2579
    %3465 = vmatpush1.bf16.msra.mxu0 %v2578
    %3466 = vmatprep.subr.bf16.mxu0 %v2584
    %3467 = vmatpush1.bf16.msra.mxu0 %v2583
    %3468 = vmatprep.subr.bf16.mxu0 %v2589
    %3469 = vmatpush1.bf16.msra.mxu0 %v2588
    %3470 = vmatprep.subr.bf16.mxu0 %v2594
    %3471 = vmatpush1.bf16.msra.mxu0 %v2593
    %3472 = vmatprep.subr.bf16.mxu0 %v2599
    %3473 = vmatpush1.bf16.msra.mxu0 %v2598
    %3474 = vmatprep.subr.bf16.mxu0 %v2604
    %3475 = vmatpush1.bf16.msra.mxu0 %v2603
    %3476 = vmatprep.subr.bf16.mxu0 %v2609
    %3477 = vmatpush1.bf16.msra.mxu0 %v2608
    %3478 = vmatprep.subr.bf16.mxu0 %v2614
    %3479 = vmatpush1.bf16.msra.mxu0 %v2613
    %3480 = vmatprep.subr.bf16.mxu0 %v2619
    %3481 = vmatpush1.bf16.msra.mxu0 %v2618
    %3482 = vmatprep.subr.bf16.mxu0 %v2624
    %3483 = vmatpush1.bf16.msra.mxu0 %v2623
    %3484 = vmatprep.subr.bf16.mxu0 %v2629
    %3485 = vmatpush1.bf16.msra.mxu0 %v2628
    %3486 = vmatprep.subr.bf16.mxu0 %v2634
    %3487 = vmatpush1.bf16.msra.mxu0 %v2633
    %3488 = vmatprep.subr.bf16.mxu0 %v2639
    %3489 = vmatpush1.bf16.msra.mxu0 %v2638
    %3490 = vmatprep.subr.bf16.mxu0 %v2644
    %3491 = vmatpush1.bf16.msra.mxu0 %v2643
    %3492 = vmatprep.subr.bf16.mxu0 %v2649
    %3493 = vmatpush1.bf16.msra.mxu0 %v2648
    %3494 = vmatprep.subr.bf16.mxu0 %v2654
    %3495 = vmatpush1.bf16.msra.mxu0 %v2653
    %3496 = vmatprep.mubr.bf16.mxu0 %v546
    %3497 = vmatmul.mubr.bf16.gmra.mrb[0].mxu0 %v545
    %v3498 = vpop.f32.mrb[0].mxu0
    %v3499 = vadd.f32 %v3458, %v3498
    %v3500 = vpop.f32.mrb[0].mxu0
    %v3501 = vadd.f32 %v3460, %v3500
    %v3502 = vpop.f32.mrb[0].mxu0
    %v3503 = vpop.f32.mrb[0].mxu0
    %3504 = vdwg.mxu0
    %3505 = vmatprep.subr.bf16.mxu0 %v2659
    %3506 = vmatpush1.bf16.msra.mxu0 %v2658
    %3507 = vmatprep.subr.bf16.mxu0 %v2664
    %3508 = vmatpush1.bf16.msra.mxu0 %v2663
    %3509 = vmatprep.subr.bf16.mxu0 %v2669
    %3510 = vmatpush1.bf16.msra.mxu0 %v2668
    %3511 = vmatprep.subr.bf16.mxu0 %v2674
    %3512 = vmatpush1.bf16.msra.mxu0 %v2673
    %3513 = vmatprep.subr.bf16.mxu0 %v2679
    %3514 = vmatpush1.bf16.msra.mxu0 %v2678
    %3515 = vmatprep.subr.bf16.mxu0 %v2684
    %3516 = vmatpush1.bf16.msra.mxu0 %v2683
    %3517 = vmatprep.subr.bf16.mxu0 %v2689
    %3518 = vmatpush1.bf16.msra.mxu0 %v2688
    %3519 = vmatprep.subr.bf16.mxu0 %v2694
    %3520 = vmatpush1.bf16.msra.mxu0 %v2693
    %3521 = vmatprep.subr.bf16.mxu0 %v2699
    %3522 = vmatpush1.bf16.msra.mxu0 %v2698
    %3523 = vmatprep.subr.bf16.mxu0 %v2704
    %3524 = vmatpush1.bf16.msra.mxu0 %v2703
    %3525 = vmatprep.subr.bf16.mxu0 %v2709
    %3526 = vmatpush1.bf16.msra.mxu0 %v2708
    %3527 = vmatprep.subr.bf16.mxu0 %v2714
    %3528 = vmatpush1.bf16.msra.mxu0 %v2713
    %3529 = vmatprep.subr.bf16.mxu0 %v2719
    %3530 = vmatpush1.bf16.msra.mxu0 %v2718
    %3531 = vmatprep.subr.bf16.mxu0 %v2724
    %3532 = vmatpush1.bf16.msra.mxu0 %v2723
    %3533 = vmatprep.subr.bf16.mxu0 %v2729
    %3534 = vmatpush1.bf16.msra.mxu0 %v2728
    %3535 = vmatprep.subr.bf16.mxu0 %v2734
    %3536 = vmatpush1.bf16.msra.mxu0 %v2733
    %3537 = vmatprep.mubr.bf16.mxu0 %v548
    %3538 = vmatmul.mubr.bf16.gmra.mrb[0].mxu0 %v547
    %v3539 = vpop.f32.mrb[0].mxu0
    %v3540 = vadd.f32 %v3499, %v3539
    %v3541 = vpop.f32.mrb[0].mxu0
    %v3542 = vadd.f32 %v3501, %v3541
    %v3543 = vpop.f32.mrb[0].mxu0
    %v3544 = vpop.f32.mrb[0].mxu0
    %3545 = vdwg.mxu0
    %3546 = vmatprep.subr.bf16.mxu0 0
    %3547 = vmatpush1.bf16.msra.mxu0 %v2340
    %3548 = vmatprep.subr.bf16.mxu0 0
    %3549 = vmatpush1.bf16.msra.mxu0 %v2345
    %3550 = vmatprep.subr.bf16.mxu0 0
    %3551 = vmatpush1.bf16.msra.mxu0 %v2350
    %3552 = vmatprep.subr.bf16.mxu0 0
    %3553 = vmatpush1.bf16.msra.mxu0 %v2355
    %3554 = vmatprep.subr.bf16.mxu0 0
    %3555 = vmatpush1.bf16.msra.mxu0 %v2360
    %3556 = vmatprep.subr.bf16.mxu0 0
    %3557 = vmatpush1.bf16.msra.mxu0 %v2365
    %3558 = vmatprep.subr.bf16.mxu0 0
    %3559 = vmatpush1.bf16.msra.mxu0 %v2370
    %3560 = vmatprep.subr.bf16.mxu0 0
    %3561 = vmatpush1.bf16.msra.mxu0 %v2375
    %3562 = vmatprep.subr.bf16.mxu0 0
    %3563 = vmatpush1.bf16.msra.mxu0 %v2380
    %3564 = vmatprep.subr.bf16.mxu0 0
    %3565 = vmatpush1.bf16.msra.mxu0 %v2385
    %3566 = vmatprep.subr.bf16.mxu0 0
    %3567 = vmatpush1.bf16.msra.mxu0 %v2390
    %3568 = vmatprep.subr.bf16.mxu0 0
    %3569 = vmatpush1.bf16.msra.mxu0 %v2395
    %3570 = vmatprep.subr.bf16.mxu0 0
    %3571 = vmatpush1.bf16.msra.mxu0 %v2400
    %3572 = vmatprep.subr.bf16.mxu0 0
    %3573 = vmatpush1.bf16.msra.mxu0 %v2405
    %3574 = vmatprep.subr.bf16.mxu0 0
    %3575 = vmatpush1.bf16.msra.mxu0 %v2410
    %3576 = vmatprep.subr.bf16.mxu0 0
    %3577 = vmatpush1.bf16.msra.mxu0 %v2415
    %3578 = vmatprep.mubr.bf16.mxu0 %v540
    %3579 = vmatmul.mubr.bf16.gmra.mrb[0].mxu0 %v539
    %v3580 = vpop.f32.mrb[0].mxu0
    %v3581 = vadd.f32 %v1050, %v3580
    %v3582 = vpop.f32.mrb[0].mxu0
    %v3583 = vpop.f32.mrb[0].mxu0
    %v3584 = vpop.f32.mrb[0].mxu0
    %3585 = vdwg.mxu0
    %3586 = vmatprep.subr.bf16.mxu0 0
    %3587 = vmatpush1.bf16.msra.mxu0 %v2420
    %3588 = vmatprep.subr.bf16.mxu0 0
    %3589 = vmatpush1.bf16.msra.mxu0 %v2425
    %3590 = vmatprep.subr.bf16.mxu0 0
    %3591 = vmatpush1.bf16.msra.mxu0 %v2430
    %3592 = vmatprep.subr.bf16.mxu0 0
    %3593 = vmatpush1.bf16.msra.mxu0 %v2435
    %3594 = vmatprep.subr.bf16.mxu0 0
    %3595 = vmatpush1.bf16.msra.mxu0 %v2440
    %3596 = vmatprep.subr.bf16.mxu0 0
    %3597 = vmatpush1.bf16.msra.mxu0 %v2445
    %3598 = vmatprep.subr.bf16.mxu0 0
    %3599 = vmatpush1.bf16.msra.mxu0 %v2450
    %3600 = vmatprep.subr.bf16.mxu0 0
    %3601 = vmatpush1.bf16.msra.mxu0 %v2455
    %3602 = vmatprep.subr.bf16.mxu0 0
    %3603 = vmatpush1.bf16.msra.mxu0 %v2460
    %3604 = vmatprep.subr.bf16.mxu0 0
    %3605 = vmatpush1.bf16.msra.mxu0 %v2465
    %3606 = vmatprep.subr.bf16.mxu0 0
    %3607 = vmatpush1.bf16.msra.mxu0 %v2470
    %3608 = vmatprep.subr.bf16.mxu0 0
    %3609 = vmatpush1.bf16.msra.mxu0 %v2475
    %3610 = vmatprep.subr.bf16.mxu0 0
    %3611 = vmatpush1.bf16.msra.mxu0 %v2480
    %3612 = vmatprep.subr.bf16.mxu0 0
    %3613 = vmatpush1.bf16.msra.mxu0 %v2485
    %3614 = vmatprep.subr.bf16.mxu0 0
    %3615 = vmatpush1.bf16.msra.mxu0 %v2490
    %3616 = vmatprep.subr.bf16.mxu0 0
    %3617 = vmatpush1.bf16.msra.mxu0 %v2495
    %3618 = vmatprep.mubr.bf16.mxu0 %v542
    %3619 = vmatmul.mubr.bf16.gmra.mrb[0].mxu0 %v541
    %v3620 = vpop.f32.mrb[0].mxu0
    %v3621 = vadd.f32 %v3581, %v3620
    %v3622 = vpop.f32.mrb[0].mxu0
    %v3623 = vpop.f32.mrb[0].mxu0
    %v3624 = vpop.f32.mrb[0].mxu0
    %3625 = vdwg.mxu0
    %3626 = vmatprep.subr.bf16.mxu0 0
    %3627 = vmatpush1.bf16.msra.mxu0 %v2500
    %3628 = vmatprep.subr.bf16.mxu0 0
    %3629 = vmatpush1.bf16.msra.mxu0 %v2505
    %3630 = vmatprep.subr.bf16.mxu0 0
    %3631 = vmatpush1.bf16.msra.mxu0 %v2510
    %3632 = vmatprep.subr.bf16.mxu0 0
    %3633 = vmatpush1.bf16.msra.mxu0 %v2515
    %3634 = vmatprep.subr.bf16.mxu0 0
    %3635 = vmatpush1.bf16.msra.mxu0 %v2520
    %3636 = vmatprep.subr.bf16.mxu0 0
    %3637 = vmatpush1.bf16.msra.mxu0 %v2525
    %3638 = vmatprep.subr.bf16.mxu0 0
    %3639 = vmatpush1.bf16.msra.mxu0 %v2530
    %3640 = vmatprep.subr.bf16.mxu0 0
    %3641 = vmatpush1.bf16.msra.mxu0 %v2535
    %3642 = vmatprep.subr.bf16.mxu0 0
    %3643 = vmatpush1.bf16.msra.mxu0 %v2540
    %3644 = vmatprep.subr.bf16.mxu0 0
    %3645 = vmatpush1.bf16.msra.mxu0 %v2545
    %3646 = vmatprep.subr.bf16.mxu0 0
    %3647 = vmatpush1.bf16.msra.mxu0 %v2550
    %3648 = vmatprep.subr.bf16.mxu0 0
    %3649 = vmatpush1.bf16.msra.mxu0 %v2555
    %3650 = vmatprep.subr.bf16.mxu0 0
    %3651 = vmatpush1.bf16.msra.mxu0 %v2560
    %3652 = vmatprep.subr.bf16.mxu0 0
    %3653 = vmatpush1.bf16.msra.mxu0 %v2565
    %3654 = vmatprep.subr.bf16.mxu0 0
    %3655 = vmatpush1.bf16.msra.mxu0 %v2570
    %3656 = vmatprep.subr.bf16.mxu0 0
    %3657 = vmatpush1.bf16.msra.mxu0 %v2575
    %3658 = vmatprep.mubr.bf16.mxu0 %v544
    %3659 = vmatmul.mubr.bf16.gmra.mrb[0].mxu0 %v543
    %v3660 = vpop.f32.mrb[0].mxu0
    %v3661 = vadd.f32 %v3621, %v3660
    %v3662 = vpop.f32.mrb[0].mxu0
    %v3663 = vpop.f32.mrb[0].mxu0
    %v3664 = vpop.f32.mrb[0].mxu0
    %3665 = vdwg.mxu0
    %3666 = vmatprep.subr.bf16.mxu0 0
    %3667 = vmatpush1.bf16.msra.mxu0 %v2580
    %3668 = vmatprep.subr.bf16.mxu0 0
    %3669 = vmatpush1.bf16.msra.mxu0 %v2585
    %3670 = vmatprep.subr.bf16.mxu0 0
    %3671 = vmatpush1.bf16.msra.mxu0 %v2590
    %3672 = vmatprep.subr.bf16.mxu0 0
    %3673 = vmatpush1.bf16.msra.mxu0 %v2595
    %3674 = vmatprep.subr.bf16.mxu0 0
    %3675 = vmatpush1.bf16.msra.mxu0 %v2600
    %3676 = vmatprep.subr.bf16.mxu0 0
    %3677 = vmatpush1.bf16.msra.mxu0 %v2605
    %3678 = vmatprep.subr.bf16.mxu0 0
    %3679 = vmatpush1.bf16.msra.mxu0 %v2610
    %3680 = vmatprep.subr.bf16.mxu0 0
    %3681 = vmatpush1.bf16.msra.mxu0 %v2615
    %3682 = vmatprep.subr.bf16.mxu0 0
    %3683 = vmatpush1.bf16.msra.mxu0 %v2620
    %3684 = vmatprep.subr.bf16.mxu0 0
    %3685 = vmatpush1.bf16.msra.mxu0 %v2625
    %3686 = vmatprep.subr.bf16.mxu0 0
    %3687 = vmatpush1.bf16.msra.mxu0 %v2630
    %3688 = vmatprep.subr.bf16.mxu0 0
    %3689 = vmatpush1.bf16.msra.mxu0 %v2635
    %3690 = vmatprep.subr.bf16.mxu0 0
    %3691 = vmatpush1.bf16.msra.mxu0 %v2640
    %3692 = vmatprep.subr.bf16.mxu0 0
    %3693 = vmatpush1.bf16.msra.mxu0 %v2645
    %3694 = vmatprep.subr.bf16.mxu0 0
    %3695 = vmatpush1.bf16.msra.mxu0 %v2650
    %3696 = vmatprep.subr.bf16.mxu0 0
    %3697 = vmatpush1.bf16.msra.mxu0 %v2655
    %3698 = vmatprep.mubr.bf16.mxu0 %v546
    %3699 = vmatmul.mubr.bf16.gmra.mrb[0].mxu0 %v545
    %v3700 = vpop.f32.mrb[0].mxu0
    %v3701 = vadd.f32 %v3661, %v3700
    %v3702 = vpop.f32.mrb[0].mxu0
    %v3703 = vpop.f32.mrb[0].mxu0
    %v3704 = vpop.f32.mrb[0].mxu0
    %3705 = vdwg.mxu0
    %3706 = vmatprep.subr.bf16.mxu0 0
    %3707 = vmatpush1.bf16.msra.mxu0 %v2660
    %3708 = vmatprep.subr.bf16.mxu0 0
    %3709 = vmatpush1.bf16.msra.mxu0 %v2665
    %3710 = vmatprep.subr.bf16.mxu0 0
    %3711 = vmatpush1.bf16.msra.mxu0 %v2670
    %3712 = vmatprep.subr.bf16.mxu0 0
    %3713 = vmatpush1.bf16.msra.mxu0 %v2675
    %3714 = vmatprep.subr.bf16.mxu0 0
    %3715 = vmatpush1.bf16.msra.mxu0 %v2680
    %3716 = vmatprep.subr.bf16.mxu0 0
    %3717 = vmatpush1.bf16.msra.mxu0 %v2685
    %3718 = vmatprep.subr.bf16.mxu0 0
    %3719 = vmatpush1.bf16.msra.mxu0 %v2690
    %3720 = vmatprep.subr.bf16.mxu0 0
    %3721 = vmatpush1.bf16.msra.mxu0 %v2695
    %3722 = vmatprep.subr.bf16.mxu0 0
    %3723 = vmatpush1.bf16.msra.mxu0 %v2700
    %3724 = vmatprep.subr.bf16.mxu0 0
    %3725 = vmatpush1.bf16.msra.mxu0 %v2705
    %3726 = vmatprep.subr.bf16.mxu0 0
    %3727 = vmatpush1.bf16.msra.mxu0 %v2710
    %3728 = vmatprep.subr.bf16.mxu0 0
    %3729 = vmatpush1.bf16.msra.mxu0 %v2715
    %3730 = vmatprep.subr.bf16.mxu0 0
    %3731 = vmatpush1.bf16.msra.mxu0 %v2720
    %3732 = vmatprep.subr.bf16.mxu0 0
    %3733 = vmatpush1.bf16.msra.mxu0 %v2725
    %3734 = vmatprep.subr.bf16.mxu0 0
    %3735 = vmatpush1.bf16.msra.mxu0 %v2730
    %3736 = vmatprep.subr.bf16.mxu0 0
    %3737 = vmatpush1.bf16.msra.mxu0 %v2735
    %3738 = vmatprep.mubr.bf16.mxu0 %v548
    %3739 = vmatmul.mubr.bf16.gmra.mrb[0].mxu0 %v547
    %v3740 = vpop.f32.mrb[0].mxu0
    %v3741 = vadd.f32 %v3701, %v3740
    %v3742 = vpop.f32.mrb[0].mxu0
    %v3743 = vpop.f32.mrb[0].mxu0
    %v3744 = vpop.f32.mrb[0].mxu0
    %3745 = vdwg.mxu0
    %vm3746 = vcmp.gt.f32.partialorder %v3335, 0.0
    %vm3747 = vcmp.gt.f32.partialorder %v3337, 0.0
    %vm3748 = vcmp.gt.f32.partialorder %v3540, 0.0
    %vm3749 = vcmp.gt.f32.partialorder %v3542, 0.0
    %vm3750 = vcmp.gt.f32.partialorder %v3741, 0.0
    %v3751 = vmul.f32 %v3335, 0.01
    %v3752 = vmul.f32 %v3337, 0.01
    %v3753 = vmul.f32 %v3540, 0.01
    %v3754 = vmul.f32 %v3542, 0.01
    %v3755 = vmul.f32 %v3741, 0.01
    %v3756 = vsel %vm3746, %v3335, %v3751
    %v3757 = vsel %vm3747, %v3337, %v3752
    %v3758 = vsel %vm3748, %v3540, %v3753
    %v3759 = vsel %vm3749, %v3542, %v3754
    %v3760 = vsel %vm3750, %v3741, %v3755
    %v3761 = vld [vmem:[#allocation13] sm:$0x1f]
    %v3762 = vunpack.c.l.bf16 %v3761
    %v3763 = vunpack.c.h.bf16 %v3761
    %v3766 = vlaneseq
    %v3767 = vshrl.u32 %v3766, 7
    %v3768 = vsub.s32 0, %v3767
    %v3769 = vrot.slane %v3762, %v3768
    %v3770 = vlaneseq
    %v3771 = vshrl.u32 %v3770, 7
    %v3772 = vsub.s32 2, %v3771
    %v3773 = vrot.slane %v3762, %v3772
    %v3774 = vlaneseq
    %v3775 = vshrl.u32 %v3774, 7
    %v3776 = vsub.s32 4, %v3775
    %v3777 = vrot.slane %v3762, %v3776
    %v3778 = vlaneseq
    %v3779 = vshrl.u32 %v3778, 7
    %v3780 = vsub.s32 6, %v3779
    %v3781 = vrot.slane %v3762, %v3780
    %v3782 = vlaneseq
    %v3783 = vshrl.u32 %v3782, 7
    %v3784 = vsub.s32 0, %v3783
    %v3785 = vrot.slane %v3763, %v3784
    %v3791 = vlaneseq
    %v3792 = vshrl.u32 %v3791, 7
    %v3793 = vsub.s32 0, %v3792
    %v3794 = vrot.slane %v3769, %v3793
    %v3795 = vlaneseq
    %v3796 = vshrl.u32 %v3795, 7
    %v3797 = vsub.s32 0, %v3796
    %v3798 = vrot.slane %v3773, %v3797
    %v3799 = vlaneseq
    %v3800 = vshrl.u32 %v3799, 7
    %v3801 = vsub.s32 0, %v3800
    %v3802 = vrot.slane %v3777, %v3801
    %v3803 = vlaneseq
    %v3804 = vshrl.u32 %v3803, 7
    %v3805 = vsub.s32 0, %v3804
    %v3806 = vrot.slane %v3781, %v3805
    %v3807 = vlaneseq
    %v3808 = vshrl.u32 %v3807, 7
    %v3809 = vsub.s32 0, %v3808
    %v3810 = vrot.slane %v3785, %v3809
    %v3811 = vmul.f32 %v3756, %v3794
    %v3812 = vmul.f32 %v3757, %v3798
    %v3813 = vmul.f32 %v3758, %v3802
    %v3814 = vmul.f32 %v3759, %v3806
    %v3815 = vmul.f32 %v3760, %v3810
    %v3816 = vadd.f32 %v3811, %v3812
    %v3817 = vadd.f32 %v3816, %v3813
    %v3818 = vadd.f32 %v3817, %v3814
    %v3819 = vadd.f32 %v3818, %v3815
    %3820 = vadd.xlane.f32.xlu0 %v3819
    %v3821 = vpop.xlane.xlu0 %3820
    %v3822 = vld [vmem:[#allocation2] sm:$0x1]
    %v3824 = vlaneseq
    %v3825 = vshrl.u32 %v3824, 7
    %v3826 = vsub.s32 0, %v3825
    %v3827 = vrot.slane %v3822, %v3826
    %v3829 = vadd.f32 %v3821, %v3827
    %vm3830 = vcmask 7168
    %3831 = vst.msk [vmem:[%s8] sm:$0xff] %vm3830, %v3829
    // Predicated region
    $region62: #{tpu_custom_call.1} parent=1 // pred_check
      _
    $region63: #{tpu_custom_call.1} parent=1 // pred_check_branch
      %3833 = sbr.rel (0) target = $region65
    $region64: #{tpu_custom_call.1} parent=1 // pred_region
      _
    $region65: #{tpu_custom_call.1} parent=1 // pred_fallthru
      _
    // Predicated region
    $region66: #{tpu_custom_call.1} parent=1 // pred_check
      _
    $region67: #{tpu_custom_call.1} parent=1 // pred_check_branch
      %3835 = sbr.rel (0) target = $region69
    $region68: #{tpu_custom_call.1} parent=1 // pred_region
      _
    $region69: #{tpu_custom_call.1} parent=1 // pred_fallthru
      _
    %3836 = vsyncpa [#allocation4], 1
    %3837 = vsyncpa [#allocation6], 1
    %3838 = vsyncpa [#allocation9], 1
    %3839 = vsyncpa [#allocation12], 1

</llo_original>
